<compile_context>
chip_gen: v6e
topology: v6e:2x2x1
jax: 0.10.0
libtpu: 0.0.40
codegen_flags: <defaults>
</compile_context>

<pallas_src>
import functools

import jax
import jax.numpy as jnp
from jax.experimental import pallas as pl
from jax.experimental.pallas import tpu as pltpu

_VMEM_LIMIT = 64 * 1024 * 1024  # explicit scoped-VMEM limit


def _tile(dim, target, align):
    """Largest `align`-aligned divisor of dim that is <= target (else full dim)."""
    if dim <= target:
        return dim
    t = (target // align) * align
    while t >= align:
        if dim % t == 0:
            return t
        t -= align
    return dim


# ---------------------------------------------------------------------------
# Tiled matmul (+ optional bias / ReLU)
# ---------------------------------------------------------------------------

def _matmul_kernel(*refs, has_bias, relu):
    if has_bias:
        x_ref, w_ref, b_ref, o_ref, acc_ref = refs
    else:
        x_ref, w_ref, o_ref, acc_ref = refs

    @pl.when(pl.program_id(2) == 0)
    def _():
        acc_ref[...] = jnp.zeros_like(acc_ref)

    acc_ref[...] += jnp.dot(x_ref[...], w_ref[...],
                            preferred_element_type=jnp.float32)

    @pl.when(pl.program_id(2) == pl.num_programs(2) - 1)
    def _():
        acc = acc_ref[...]
        if has_bias:
            acc = acc + b_ref[...]
        if relu:
            acc = jnp.maximum(acc, 0.0)
        o_ref[...] = acc.astype(o_ref.dtype)


def matmul(x, w, bias=None, relu=False, *, tm=256, tn=256, tk=512):
    """Tiled (M,K) @ (K,N) [+ bias] [+ ReLU] with f32 accumulation."""
    M, K = x.shape
    N = w.shape[1]
    tm = _tile(M, tm, 8)
    tn = _tile(N, tn, 128)
    tk = _tile(K, tk, 128)
    has_bias = bias is not None

    in_specs = [
        pl.BlockSpec((tm, tk), lambda i, j, k: (i, k)),
        pl.BlockSpec((tk, tn), lambda i, j, k: (k, j)),
    ]
    args = [x, w]
    if has_bias:
        in_specs.append(pl.BlockSpec((1, tn), lambda i, j, k: (0, j)))
        args.append(bias.reshape(1, N))

    return pl.pallas_call(
        functools.partial(_matmul_kernel, has_bias=has_bias, relu=relu),
        out_shape=jax.ShapeDtypeStruct((M, N), jnp.float32),
        grid=(M // tm, N // tn, K // tk),
        in_specs=in_specs,
        out_specs=pl.BlockSpec((tm, tn), lambda i, j, k: (i, j)),
        scratch_shapes=[pltpu.VMEM((tm, tn), jnp.float32)],
        compiler_params=pltpu.CompilerParams(
            dimension_semantics=("parallel", "parallel", "arbitrary"),
            vmem_limit_bytes=_VMEM_LIMIT),
    )(*args)


# ---------------------------------------------------------------------------
# Fused matmul + residual-add + LayerNorm (full feature dim per block)
# ---------------------------------------------------------------------------

def _matmul_res_ln_kernel(*refs, has_bias, eps):
    if has_bias:
        x_ref, w_ref, b_ref, res_ref, g_ref, beta_ref, o_ref, acc_ref = refs
    else:
        x_ref, w_ref, res_ref, g_ref, beta_ref, o_ref, acc_ref = refs

    k = pl.program_id(1)

    @pl.when(k == 0)
    def _():
        acc_ref[...] = jnp.zeros_like(acc_ref)

    acc_ref[...] += jnp.dot(x_ref[...], w_ref[...],
                            preferred_element_type=jnp.float32)

    @pl.when(k == pl.num_programs(1) - 1)
    def _():
        y = acc_ref[...]
        if has_bias:
            y = y + b_ref[...]
        y = y + res_ref[...]
        mean = jnp.mean(y, axis=-1, keepdims=True)
        var = jnp.mean((y - mean) ** 2, axis=-1, keepdims=True)  # biased (torch LN)
        yn = (y - mean) * jax.lax.rsqrt(var + eps)
        o_ref[...] = (yn * g_ref[...] + beta_ref[...]).astype(o_ref.dtype)


def matmul_res_ln(x, w, residual, gamma, beta, eps, bias=None, *, tm=256, tk=512):
    """Fused (M,K)@(K,N) [+bias] + residual + LayerNorm over the full N dim."""
    M, K = x.shape
    N = w.shape[1]
    tm = _tile(M, tm, 8)
    tk = _tile(K, tk, 128)
    has_bias = bias is not None

    in_specs = [
        pl.BlockSpec((tm, tk), lambda i, k: (i, k)),
        pl.BlockSpec((tk, N), lambda i, k: (k, 0)),
    ]
    args = [x, w]
    if has_bias:
        in_specs.append(pl.BlockSpec((1, N), lambda i, k: (0, 0)))
        args.append(bias.reshape(1, N))
    in_specs += [
        pl.BlockSpec((tm, N), lambda i, k: (i, 0)),
        pl.BlockSpec((1, N), lambda i, k: (0, 0)),
        pl.BlockSpec((1, N), lambda i, k: (0, 0)),
    ]
    args += [residual, gamma.reshape(1, N), beta.reshape(1, N)]

    return pl.pallas_call(
        functools.partial(_matmul_res_ln_kernel, has_bias=has_bias, eps=eps),
        out_shape=jax.ShapeDtypeStruct((M, N), jnp.float32),
        grid=(M // tm, K // tk),
        in_specs=in_specs,
        out_specs=pl.BlockSpec((tm, N), lambda i, k: (i, 0)),
        scratch_shapes=[pltpu.VMEM((tm, N), jnp.float32)],
        compiler_params=pltpu.CompilerParams(
            dimension_semantics=("parallel", "arbitrary"),
            vmem_limit_bytes=_VMEM_LIMIT),
    )(*args)


# ---------------------------------------------------------------------------
# Flash-style attention (online softmax over an "arbitrary" Sk grid axis)
# ---------------------------------------------------------------------------

def _flash_attn_kernel(*refs, inv_dk, has_mask):
    if has_mask:
        q_ref, k_ref, v_ref, mask_ref, o_ref, m_sc, l_sc, acc_sc = refs
    else:
        q_ref, k_ref, v_ref, o_ref, m_sc, l_sc, acc_sc = refs

    kv = pl.program_id(2)

    @pl.when(kv == 0)
    def _():
        m_sc[...] = jnp.full_like(m_sc, -jnp.inf)
        l_sc[...] = jnp.zeros_like(l_sc)
        acc_sc[...] = jnp.zeros_like(acc_sc)

    q = q_ref[0]  # (H, tq, dk)
    k = k_ref[0]  # (H, tk, dk)
    v = v_ref[0]  # (H, tk, dk)

    # Scores (H, tq, tk); the PyTorch module scales by 1/d_k (not 1/sqrt(d_k)).
    s = jnp.einsum("hqd,hkd->hqk", q, k,
                   preferred_element_type=jnp.float32) * inv_dk
    if has_mask:
        m = mask_ref[0]  # (tq, tk) int32, 1 = attend
        s = jnp.where((m == 0)[None, :, :], jnp.float32(-1e9), s)

    m_new = jnp.maximum(m_sc[...], s.max(-1, keepdims=True))
    alpha = jnp.exp(m_sc[...] - m_new)
    p = jnp.exp(s - m_new)
    l_sc[...] = alpha * l_sc[...] + p.sum(-1, keepdims=True)
    acc_sc[...] = alpha * acc_sc[...] + jnp.einsum(
        "hqk,hkd->hqd", p, v, preferred_element_type=jnp.float32)
    m_sc[...] = m_new

    @pl.when(kv == pl.num_programs(2) - 1)
    def _():
        o_ref[0] = (acc_sc[...] *
                    pl.reciprocal(l_sc[...], approx=True)).astype(o_ref.dtype)


def flash_attention(q, k, v, mask, d_k, *, tq_target=128, tk_target=128):
    """q: (B,H,Sq,dk), k/v: (B,H,Sk,dk), mask: (B,Sq,Sk) int32 or None."""
    B, H, Sq, dk = q.shape
    Sk = k.shape[2]
    tq = _tile(Sq, tq_target, 8)
    tk = _tile(Sk, tk_target, 128)
    has_mask = mask is not None

    in_specs = [
        pl.BlockSpec((1, H, tq, dk), lambda b, qi, ki: (b, 0, qi, 0)),
        pl.BlockSpec((1, H, tk, dk), lambda b, qi, ki: (b, 0, ki, 0)),
        pl.BlockSpec((1, H, tk, dk), lambda b, qi, ki: (b, 0, ki, 0)),
    ]
    args = [q, k, v]
    if has_mask:
        in_specs.append(pl.BlockSpec((1, tq, tk), lambda b, qi, ki: (b, qi, ki)))
        args.append(mask)

    return pl.pallas_call(
        functools.partial(_flash_attn_kernel,
                          inv_dk=1.0 / float(d_k), has_mask=has_mask),
        out_shape=jax.ShapeDtypeStruct((B, H, Sq, dk), jnp.float32),
        grid=(B, Sq // tq, Sk // tk),
        in_specs=in_specs,
        out_specs=pl.BlockSpec((1, H, tq, dk), lambda b, qi, ki: (b, 0, qi, 0)),
        scratch_shapes=[
            pltpu.VMEM((H, tq, 1), jnp.float32),
            pltpu.VMEM((H, tq, 1), jnp.float32),
            pltpu.VMEM((H, tq, dk), jnp.float32),
        ],
        compiler_params=pltpu.CompilerParams(
            dimension_semantics=("parallel", "parallel", "arbitrary"),
            vmem_limit_bytes=_VMEM_LIMIT),
    )(*args)


# ---------------------------------------------------------------------------
# Module forward composed from the kernels (glue in plain JAX)
# ---------------------------------------------------------------------------

def multi_head_attention(p, q_in, kv_in, mask, heads, self_attn):
    B, Sq, dim = q_in.shape
    Sk = kv_in.shape[1]
    d_k = dim // heads
    q2d = q_in.reshape(B * Sq, dim)

    if self_attn:
        qkv = matmul(q2d, p["wqkv"])                       # fused Q|K|V, no bias
        qkv = qkv.reshape(B, Sq, 3, heads, d_k)
        q4 = qkv[:, :, 0].transpose(0, 2, 1, 3)            # (B, H, Sq, dk)
        k4 = qkv[:, :, 1].transpose(0, 2, 1, 3)
        v4 = qkv[:, :, 2].transpose(0, 2, 1, 3)
    else:
        kv2d = kv_in.reshape(B * Sk, dim)
        q2 = matmul(q2d, p["wqkv"][:, :dim])               # Q projection only
        kv = matmul(kv2d, p["wqkv"][:, dim:])              # fused K|V projection
        q4 = q2.reshape(B, Sq, heads, d_k).transpose(0, 2, 1, 3)
        kv5 = kv.reshape(B, Sk, 2, heads, d_k)
        k4 = kv5[:, :, 0].transpose(0, 2, 1, 3)
        v4 = kv5[:, :, 1].transpose(0, 2, 1, 3)

    attn = flash_attention(q4, k4, v4, mask, d_k)          # (B, H, Sq, dk)
    attn2d = attn.transpose(0, 2, 1, 3).reshape(B * Sq, dim)

    # fc projection fused with residual-add + LayerNorm(eps=1e-8).
    out = matmul_res_ln(attn2d, p["wo"], q2d, p["ln_g"], p["ln_b"], eps=1e-8)
    return out.reshape(B, Sq, dim)


def feed_forward(p, x):
    B, S, dim = x.shape
    x2d = x.reshape(B * S, dim)
    h = matmul(x2d, p["w1"], bias=p["b1"], relu=True)
    # w2 projection fused with residual-add + LayerNorm(eps=1e-6).
    out = matmul_res_ln(h, p["w2"], x2d, p["ln_g"], p["ln_b"],
                        eps=1e-6, bias=p["b2"])
    return out.reshape(B, S, dim)


def decoder_layer(p, x, memory, mask, heads):
    x = multi_head_attention(p["masked_attention"], x, x, mask, heads,
                             self_attn=True)
    x = multi_head_attention(p["attention"], x, memory, None, heads,
                             self_attn=False)
    x = feed_forward(p["feed_forward"], x)
    return x


def decoder_forward(params, tokens, memory, mask, heads):
    B, S = tokens.shape
    # TODO(synk): embedding-table gather + positional add kept as plain-JAX
    # glue; a Pallas gather kernel is not worthwhile for a tiny lookup table.
    x = params["embed"][tokens] + params["pos_embed"][:S, :]
    for lp in params["layers"]:
        x = decoder_layer(lp, x, memory, mask, heads)
    dim = x.shape[-1]
    vocab = params["logit_w"].shape[1]
    logits = matmul(x.reshape(B * S, dim), params["logit_w"])  # vocab tiled over N
    return logits.reshape(B, S, vocab)


# ---------------------------------------------------------------------------
# Deterministic parameter init
# ---------------------------------------------------------------------------

def init_params(key, dim, heads, depth, vocab_size, max_len):
    keys = iter(jax.random.split(key, 8 * depth + 8))

    def w(shape, scale=0.02):
        return (scale * jax.random.normal(next(keys), shape)).astype(jnp.float32)

    def mha_params():
        return {
            "wqkv": w((dim, 3 * dim)),     # columns = [wq | wk | wv]
            "wo": w((dim, dim)),
            "ln_g": jnp.ones((dim,), jnp.float32),
            "ln_b": jnp.zeros((dim,), jnp.float32),
        }

    def ffn_params():
        dim_ff = dim * 4
        return {
            "w1": w((dim, dim_ff)), "b1": jnp.zeros((dim_ff,), jnp.float32),
            "w2": w((dim_ff, dim)), "b2": jnp.zeros((dim,), jnp.float32),
            "ln_g": jnp.ones((dim,), jnp.float32),
            "ln_b": jnp.zeros((dim,), jnp.float32),
        }

    layers = [{"masked_attention": mha_params(),
               "attention": mha_params(),
               "feed_forward": ffn_params()} for _ in range(depth)]

    return {
        "embed": w((vocab_size, dim), scale=1.0),
        "pos_embed": jax.random.uniform(next(keys), (max_len, dim),
                                        dtype=jnp.float32),
        "layers": layers,
        "logit_w": w((dim, vocab_size)),
    }


# ---------------------------------------------------------------------------
if __name__ == "__main__":
    dim, heads, depth, vocab_size, max_len = 32, 4, 2, 64, 16
    B, S, S_mem = 2, 8, 8

    key = jax.random.PRNGKey(0)
    k_tok, k_mem, k_par = jax.random.split(key, 3)

    tokens = jax.random.randint(k_tok, (B, S), 0, vocab_size, dtype=jnp.int32)
    memory = (0.1 * jax.random.normal(k_mem, (B, S_mem, dim))).astype(jnp.float32)
    # causal mask (1 = attend, 0 = masked)
    mask = jnp.tril(jnp.ones((S, S), jnp.int32))[None, :, :].repeat(B, axis=0)

    params = init_params(k_par, dim, heads, depth, vocab_size, max_len)

    fwd = jax.jit(functools.partial(decoder_forward, heads=heads))
    logits = fwd(params, tokens, memory, mask)
    jax.block_until_ready(logits)

    assert logits.shape == (B, S, vocab_size)
    assert bool(jnp.all(jnp.isfinite(logits)))
    print("KERNEL_OK")
</pallas_src>

<mosaic_0001>
module attributes {stable_mosaic.version = 11 : i64} {
  func.func @_matmul_kernel(%arg0: i32, %arg1: i32, %arg2: i32, %arg3: memref<16x32xf32, #tpu.memory_space<vmem>>, %arg4: memref<32x96xf32, #tpu.memory_space<vmem>>, %arg5: memref<16x96xf32, #tpu.memory_space<vmem>>, %arg6: memref<16x96xf32, #tpu.memory_space<vmem>>) attributes {dimension_semantics = [#tpu.dimension_semantics<parallel>, #tpu.dimension_semantics<parallel>, #tpu.dimension_semantics<arbitrary>], iteration_bounds = array<i64: 1, 1, 1>, scalar_prefetch = 0 : i64, scratch_operands = 1 : i64, tpu.core_type = #tpu.core_type<tc>, window_params = [{transform_indices = @transform_0, window_bounds = array<i64: 16, 32>}, {transform_indices = @transform_1, window_bounds = array<i64: 32, 96>}, {transform_indices = @transform_2, window_bounds = array<i64: 16, 96>}]} {
    %c0_i32 = arith.constant 0 : i32
    %0 = arith.cmpi eq, %arg2, %c0_i32 : i32
    %1 = arith.extui %0 : i1 to i32
    %c0_i32_0 = arith.constant 0 : i32
    %2 = arith.cmpi ne, %1, %c0_i32_0 : i32
    scf.if %2 {
      %cst_10 = arith.constant 0.000000e+00 : f32
      %12 = vector.broadcast %cst_10 : f32 to vector<16x96xf32>
      %c0_11 = arith.constant 0 : index
      %c0_12 = arith.constant 0 : index
      %13 = vector.load %arg6[%c0_11, %c0_12] : memref<16x96xf32, #tpu.memory_space<vmem>>, vector<16x96xf32>
      tpu.vector_store %arg6[%c0_11, %c0_12], %12 {strides = array<i32>} : memref<16x96xf32, #tpu.memory_space<vmem>>, vector<16x96xf32>,
    } else {
    }
    %c0 = arith.constant 0 : index
    %c0_1 = arith.constant 0 : index
    %3 = vector.load %arg6[%c0, %c0_1] : memref<16x96xf32, #tpu.memory_space<vmem>>, vector<16x96xf32>
    %c0_2 = arith.constant 0 : index
    %c0_3 = arith.constant 0 : index
    %4 = vector.load %arg3[%c0_2, %c0_3] : memref<16x32xf32, #tpu.memory_space<vmem>>, vector<16x32xf32>
    %c0_4 = arith.constant 0 : index
    %c0_5 = arith.constant 0 : index
    %5 = vector.load %arg4[%c0_4, %c0_5] : memref<32x96xf32, #tpu.memory_space<vmem>>, vector<32x96xf32>
    %cst = arith.constant dense<0.000000e+00> : vector<16x96xf32>
    %6 = tpu.matmul %4, %5, %cst {dimension_numbers = #tpu.dot_dimension_numbers<[1], [0], [0], [1], [0, 0, 1, 1], [], []>} : vector<16x32xf32>, vector<32x96xf32>, vector<16x96xf32> -> vector<16x96xf32>
    %7 = arith.addf %3, %6 : vector<16x96xf32>
    %c0_6 = arith.constant 0 : index
    %c0_7 = arith.constant 0 : index
    %8 = vector.load %arg6[%c0_6, %c0_7] : memref<16x96xf32, #tpu.memory_space<vmem>>, vector<16x96xf32>
    tpu.vector_store %arg6[%c0_6, %c0_7], %7 {strides = array<i32>} : memref<16x96xf32, #tpu.memory_space<vmem>>, vector<16x96xf32>,
    %c0_i32_8 = arith.constant 0 : i32
    %9 = arith.cmpi eq, %arg2, %c0_i32_8 : i32
    %10 = arith.extui %9 : i1 to i32
    %c0_i32_9 = arith.constant 0 : i32
    %11 = arith.cmpi ne, %10, %c0_i32_9 : i32
    scf.if %11 {
      %c0_10 = arith.constant 0 : index
      %c0_11 = arith.constant 0 : index
      %12 = vector.load %arg6[%c0_10, %c0_11] : memref<16x96xf32, #tpu.memory_space<vmem>>, vector<16x96xf32>
      %c0_12 = arith.constant 0 : index
      %c0_13 = arith.constant 0 : index
      %13 = vector.load %arg5[%c0_12, %c0_13] : memref<16x96xf32, #tpu.memory_space<vmem>>, vector<16x96xf32>
      tpu.vector_store %arg5[%c0_12, %c0_13], %12 {strides = array<i32>} : memref<16x96xf32, #tpu.memory_space<vmem>>, vector<16x96xf32>,
    } else {
    }
    return
  }
  func.func @transform_0(%arg0: i32, %arg1: i32, %arg2: i32) -> (i32, i32) {
    %c0_i32 = arith.constant 0 : i32
    return %arg0, %arg2 : i32, i32
  }
  func.func @transform_1(%arg0: i32, %arg1: i32, %arg2: i32) -> (i32, i32) {
    %c0_i32 = arith.constant 0 : i32
    return %arg2, %arg1 : i32, i32
  }
  func.func @transform_2(%arg0: i32, %arg1: i32, %arg2: i32) -> (i32, i32) {
    %c0_i32 = arith.constant 0 : i32
    return %arg0, %arg1 : i32, i32
  }
}

module attributes {stable_mosaic.version = 11 : i64} {
  func.func @_flash_attn_kernel(%arg0: i32, %arg1: i32, %arg2: i32, %arg3: memref<1x4x8x8xf32, #tpu.memory_space<vmem>>, %arg4: memref<1x4x8x8xf32, #tpu.memory_space<vmem>>, %arg5: memref<1x4x8x8xf32, #tpu.memory_space<vmem>>, %arg6: memref<1x8x8xi32, #tpu.memory_space<vmem>>, %arg7: memref<1x4x8x8xf32, #tpu.memory_space<vmem>>, %arg8: memref<4x8x1xf32, #tpu.memory_space<vmem>>, %arg9: memref<4x8x1xf32, #tpu.memory_space<vmem>>, %arg10: memref<4x8x8xf32, #tpu.memory_space<vmem>>) attributes {dimension_semantics = [#tpu.dimension_semantics<parallel>, #tpu.dimension_semantics<parallel>, #tpu.dimension_semantics<arbitrary>], iteration_bounds = array<i64: 2, 1, 1>, scalar_prefetch = 0 : i64, scratch_operands = 3 : i64, tpu.core_type = #tpu.core_type<tc>, window_params = [{transform_indices = @transform_0, window_bounds = array<i64: 1, 4, 8, 8>}, {transform_indices = @transform_1, window_bounds = array<i64: 1, 4, 8, 8>}, {transform_indices = @transform_2, window_bounds = array<i64: 1, 4, 8, 8>}, {transform_indices = @transform_3, window_bounds = array<i64: 1, 8, 8>}, {transform_indices = @transform_4, window_bounds = array<i64: 1, 4, 8, 8>}]} {
    %c0_i32 = arith.constant 0 : i32
    %0 = arith.cmpi eq, %arg2, %c0_i32 : i32
    %1 = arith.extui %0 : i1 to i32
    %c0_i32_0 = arith.constant 0 : i32
    %2 = arith.cmpi ne, %1, %c0_i32_0 : i32
    scf.if %2 {
      %cst_44 = arith.constant 0xFF800000 : f32
      %47 = vector.broadcast %cst_44 : f32 to vector<4x8x1xf32>
      %c0_45 = arith.constant 0 : index
      %c0_46 = arith.constant 0 : index
      %c0_47 = arith.constant 0 : index
      %48 = vector.load %arg8[%c0_45, %c0_46, %c0_47] : memref<4x8x1xf32, #tpu.memory_space<vmem>>, vector<4x8x1xf32>
      tpu.vector_store %arg8[%c0_45, %c0_46, %c0_47], %47 {strides = array<i32>} : memref<4x8x1xf32, #tpu.memory_space<vmem>>, vector<4x8x1xf32>,
      %cst_48 = arith.constant 0.000000e+00 : f32
      %49 = vector.broadcast %cst_48 : f32 to vector<4x8x1xf32>
      %c0_49 = arith.constant 0 : index
      %c0_50 = arith.constant 0 : index
      %c0_51 = arith.constant 0 : index
      %50 = vector.load %arg9[%c0_49, %c0_50, %c0_51] : memref<4x8x1xf32, #tpu.memory_space<vmem>>, vector<4x8x1xf32>
      tpu.vector_store %arg9[%c0_49, %c0_50, %c0_51], %49 {strides = array<i32>} : memref<4x8x1xf32, #tpu.memory_space<vmem>>, vector<4x8x1xf32>,
      %cst_52 = arith.constant 0.000000e+00 : f32
      %51 = vector.broadcast %cst_52 : f32 to vector<4x8x8xf32>
      %c0_53 = arith.constant 0 : index
      %c0_54 = arith.constant 0 : index
      %c0_55 = arith.constant 0 : index
      %52 = vector.load %arg10[%c0_53, %c0_54, %c0_55] : memref<4x8x8xf32, #tpu.memory_space<vmem>>, vector<4x8x8xf32>
      tpu.vector_store %arg10[%c0_53, %c0_54, %c0_55], %51 {strides = array<i32>} : memref<4x8x8xf32, #tpu.memory_space<vmem>>, vector<4x8x8xf32>,
    } else {
    }
    %c0 = arith.constant 0 : index
    %c0_1 = arith.constant 0 : index
    %c0_2 = arith.constant 0 : index
    %c0_3 = arith.constant 0 : index
    %3 = vector.load %arg3[%c0, %c0_1, %c0_2, %c0_3] : memref<1x4x8x8xf32, #tpu.memory_space<vmem>>, vector<1x4x8x8xf32>
    %4 = vector.shape_cast %3 : vector<1x4x8x8xf32> to vector<4x8x8xf32>
    %c0_4 = arith.constant 0 : index
    %c0_5 = arith.constant 0 : index
    %c0_6 = arith.constant 0 : index
    %c0_7 = arith.constant 0 : index
    %5 = vector.load %arg4[%c0_4, %c0_5, %c0_6, %c0_7] : memref<1x4x8x8xf32, #tpu.memory_space<vmem>>, vector<1x4x8x8xf32>
    %6 = vector.shape_cast %5 : vector<1x4x8x8xf32> to vector<4x8x8xf32>
    %c0_8 = arith.constant 0 : index
    %c0_9 = arith.constant 0 : index
    %c0_10 = arith.constant 0 : index
    %c0_11 = arith.constant 0 : index
    %7 = vector.load %arg5[%c0_8, %c0_9, %c0_10, %c0_11] : memref<1x4x8x8xf32, #tpu.memory_space<vmem>>, vector<1x4x8x8xf32>
    %8 = vector.shape_cast %7 : vector<1x4x8x8xf32> to vector<4x8x8xf32>
    "tpu.trace_start"() <{level = 10 : i32, message = "hqd,hkd->hqk"}> : () -> ()
    %cst = arith.constant dense<0.000000e+00> : vector<4x8x8xf32>
    %9 = tpu.matmul %4, %6, %cst {dimension_numbers = #tpu.dot_dimension_numbers<[2], [2], [1], [1], [0, 0, 0, 1, 1, 1], [0], [0]>} : vector<4x8x8xf32>, vector<4x8x8xf32>, vector<4x8x8xf32> -> vector<4x8x8xf32>
    "tpu.trace_stop"() : () -> ()
    %cst_12 = arith.constant 1.250000e-01 : f32
    %10 = vector.broadcast %cst_12 : f32 to vector<4x8x8xf32>
    %11 = arith.mulf %9, %10 : vector<4x8x8xf32>
    %c0_13 = arith.constant 0 : index
    %c0_14 = arith.constant 0 : index
    %c0_15 = arith.constant 0 : index
    %12 = vector.load %arg6[%c0_13, %c0_14, %c0_15] : memref<1x8x8xi32, #tpu.memory_space<vmem>>, vector<1x8x8xi32>
    %13 = vector.shape_cast %12 : vector<1x8x8xi32> to vector<8x8xi32>
    %c0_i32_16 = arith.constant 0 : i32
    %14 = vector.broadcast %c0_i32_16 : i32 to vector<8x8xi32>
    %15 = arith.cmpi eq, %13, %14 : vector<8x8xi32>
    %16 = vector.shape_cast %15 : vector<8x8xi1> to vector<1x8x8xi1>
    %cst_17 = arith.constant -1.000000e+09 : f32
    %17 = vector.shape_cast %16 : vector<1x8x8xi1> to vector<1x8x8xi1>
    %18 = vector.broadcast %17 : vector<1x8x8xi1> to vector<4x8x8xi1>
    %19 = vector.broadcast %cst_17 : f32 to vector<4x8x8xf32>
    %20 = arith.select %18, %19, %11 : vector<4x8x8xi1>, vector<4x8x8xf32>
    %c0_18 = arith.constant 0 : index
    %c0_19 = arith.constant 0 : index
    %c0_20 = arith.constant 0 : index
    %21 = vector.load %arg8[%c0_18, %c0_19, %c0_20] : memref<4x8x1xf32, #tpu.memory_space<vmem>>, vector<4x8x1xf32>
    %cst_21 = arith.constant dense<0xFF800000> : vector<4x8xf32>
    %22 = vector.multi_reduction <maximumf>, %20, %cst_21 [2] : vector<4x8x8xf32> to vector<4x8xf32>
    %23 = vector.shape_cast %22 : vector<4x8xf32> to vector<4x8x1xf32>
    %24 = arith.maximumf %21, %23 : vector<4x8x1xf32>
    %c0_22 = arith.constant 0 : index
    %c0_23 = arith.constant 0 : index
    %c0_24 = arith.constant 0 : index
    %25 = vector.load %arg8[%c0_22, %c0_23, %c0_24] : memref<4x8x1xf32, #tpu.memory_space<vmem>>, vector<4x8x1xf32>
    %26 = arith.subf %25, %24 : vector<4x8x1xf32>
    %27 = math.exp %26 : vector<4x8x1xf32>
    %28 = vector.broadcast %24 : vector<4x8x1xf32> to vector<4x8x8xf32>
    %29 = arith.subf %20, %28 : vector<4x8x8xf32>
    %30 = math.exp %29 : vector<4x8x8xf32>
    %c0_25 = arith.constant 0 : index
    %c0_26 = arith.constant 0 : index
    %c0_27 = arith.constant 0 : index
    %31 = vector.load %arg9[%c0_25, %c0_26, %c0_27] : memref<4x8x1xf32, #tpu.memory_space<vmem>>, vector<4x8x1xf32>
    %32 = arith.mulf %27, %31 : vector<4x8x1xf32>
    %cst_28 = arith.constant dense<0.000000e+00> : vector<4x8xf32>
    %33 = vector.multi_reduction <add>, %30, %cst_28 [2] : vector<4x8x8xf32> to vector<4x8xf32>
    %34 = vector.shape_cast %33 : vector<4x8xf32> to vector<4x8x1xf32>
    %35 = arith.addf %32, %34 : vector<4x8x1xf32>
    %c0_29 = arith.constant 0 : index
    %c0_30 = arith.constant 0 : index
    %c0_31 = arith.constant 0 : index
    %36 = vector.load %arg9[%c0_29, %c0_30, %c0_31] : memref<4x8x1xf32, #tpu.memory_space<vmem>>, vector<4x8x1xf32>
    tpu.vector_store %arg9[%c0_29, %c0_30, %c0_31], %35 {strides = array<i32>} : memref<4x8x1xf32, #tpu.memory_space<vmem>>, vector<4x8x1xf32>,
    %c0_32 = arith.constant 0 : index
    %c0_33 = arith.constant 0 : index
    %c0_34 = arith.constant 0 : index
    %37 = vector.load %arg10[%c0_32, %c0_33, %c0_34] : memref<4x8x8xf32, #tpu.memory_space<vmem>>, vector<4x8x8xf32>
    %38 = vector.broadcast %27 : vector<4x8x1xf32> to vector<4x8x8xf32>
    %39 = arith.mulf %38, %37 : vector<4x8x8xf32>
    "tpu.trace_start"() <{level = 10 : i32, message = "hqk,hkd->hqd"}> : () -> ()
    %cst_35 = arith.constant dense<0.000000e+00> : vector<4x8x8xf32>
    %40 = tpu.matmul %30, %8, %cst_35 {dimension_numbers = #tpu.dot_dimension_numbers<[2], [1], [1], [2], [0, 0, 0, 1, 1, 2], [0], [0]>} : vector<4x8x8xf32>, vector<4x8x8xf32>, vector<4x8x8xf32> -> vector<4x8x8xf32>
    "tpu.trace_stop"() : () -> ()
    %41 = arith.addf %39, %40 : vector<4x8x8xf32>
    %c0_36 = arith.constant 0 : index
    %c0_37 = arith.constant 0 : index
    %c0_38 = arith.constant 0 : index
    %42 = vector.load %arg10[%c0_36, %c0_37, %c0_38] : memref<4x8x8xf32, #tpu.memory_space<vmem>>, vector<4x8x8xf32>
    tpu.vector_store %arg10[%c0_36, %c0_37, %c0_38], %41 {strides = array<i32>} : memref<4x8x8xf32, #tpu.memory_space<vmem>>, vector<4x8x8xf32>,
    %c0_39 = arith.constant 0 : index
    %c0_40 = arith.constant 0 : index
    %c0_41 = arith.constant 0 : index
    %43 = vector.load %arg8[%c0_39, %c0_40, %c0_41] : memref<4x8x1xf32, #tpu.memory_space<vmem>>, vector<4x8x1xf32>
    tpu.vector_store %arg8[%c0_39, %c0_40, %c0_41], %24 {strides = array<i32>} : memref<4x8x1xf32, #tpu.memory_space<vmem>>, vector<4x8x1xf32>,
    %c0_i32_42 = arith.constant 0 : i32
    %44 = arith.cmpi eq, %arg2, %c0_i32_42 : i32
    %45 = arith.extui %44 : i1 to i32
    %c0_i32_43 = arith.constant 0 : i32
    %46 = arith.cmpi ne, %45, %c0_i32_43 : i32
    scf.if %46 {
      %c0_44 = arith.constant 0 : index
      %c0_45 = arith.constant 0 : index
      %c0_46 = arith.constant 0 : index
      %47 = vector.load %arg10[%c0_44, %c0_45, %c0_46] : memref<4x8x8xf32, #tpu.memory_space<vmem>>, vector<4x8x8xf32>
      %c0_47 = arith.constant 0 : index
      %c0_48 = arith.constant 0 : index
      %c0_49 = arith.constant 0 : index
      %48 = vector.load %arg9[%c0_47, %c0_48, %c0_49] : memref<4x8x1xf32, #tpu.memory_space<vmem>>, vector<4x8x1xf32>
      %49 = tpu.reciprocal %48 {approx = true} : vector<4x8x1xf32> -> vector<4x8x1xf32>
      %50 = vector.broadcast %49 : vector<4x8x1xf32> to vector<4x8x8xf32>
      %51 = arith.mulf %47, %50 : vector<4x8x8xf32>
      %c0_50 = arith.constant 0 : index
      %c0_51 = arith.constant 0 : index
      %c0_52 = arith.constant 0 : index
      %c0_53 = arith.constant 0 : index
      %52 = vector.load %arg7[%c0_50, %c0_51, %c0_52, %c0_53] : memref<1x4x8x8xf32, #tpu.memory_space<vmem>>, vector<1x4x8x8xf32>
      %53 = vector.shape_cast %52 : vector<1x4x8x8xf32> to vector<4x8x8xf32>
      %54 = vector.shape_cast %51 : vector<4x8x8xf32> to vector<1x4x8x8xf32>
      tpu.vector_store %arg7[%c0_50, %c0_51, %c0_52, %c0_53], %54 {strides = array<i32>} : memref<1x4x8x8xf32, #tpu.memory_space<vmem>>, vector<1x4x8x8xf32>,
    } else {
    }
    return
  }
  func.func @transform_0(%arg0: i32, %arg1: i32, %arg2: i32) -> (i32, i32, i32, i32) {
    %c0_i32 = arith.constant 0 : i32
    %c0_i32_0 = arith.constant 0 : i32
    %c0_i32_1 = arith.constant 0 : i32
    return %arg0, %c0_i32, %arg1, %c0_i32_0 : i32, i32, i32, i32
  }
  func.func @transform_1(%arg0: i32, %arg1: i32, %arg2: i32) -> (i32, i32, i32, i32) {
    %c0_i32 = arith.constant 0 : i32
    %c0_i32_0 = arith.constant 0 : i32
    %c0_i32_1 = arith.constant 0 : i32
    return %arg0, %c0_i32, %arg2, %c0_i32_0 : i32, i32, i32, i32
  }
  func.func @transform_2(%arg0: i32, %arg1: i32, %arg2: i32) -> (i32, i32, i32, i32) {
    %c0_i32 = arith.constant 0 : i32
    %c0_i32_0 = arith.constant 0 : i32
    %c0_i32_1 = arith.constant 0 : i32
    return %arg0, %c0_i32, %arg2, %c0_i32_0 : i32, i32, i32, i32
  }
  func.func @transform_3(%arg0: i32, %arg1: i32, %arg2: i32) -> (i32, i32, i32) {
    %c0_i32 = arith.constant 0 : i32
    return %arg0, %arg1, %arg2 : i32, i32, i32
  }
  func.func @transform_4(%arg0: i32, %arg1: i32, %arg2: i32) -> (i32, i32, i32, i32) {
    %c0_i32 = arith.constant 0 : i32
    %c0_i32_0 = arith.constant 0 : i32
    %c0_i32_1 = arith.constant 0 : i32
    return %arg0, %c0_i32, %arg1, %c0_i32_0 : i32, i32, i32, i32
  }
}

module attributes {stable_mosaic.version = 11 : i64} {
  func.func @_matmul_res_ln_kernel(%arg0: i32, %arg1: i32, %arg2: memref<16x32xf32, #tpu.memory_space<vmem>>, %arg3: memref<32x32xf32, #tpu.memory_space<vmem>>, %arg4: memref<16x32xf32, #tpu.memory_space<vmem>>, %arg5: memref<1x32xf32, #tpu.memory_space<vmem>>, %arg6: memref<1x32xf32, #tpu.memory_space<vmem>>, %arg7: memref<16x32xf32, #tpu.memory_space<vmem>>, %arg8: memref<16x32xf32, #tpu.memory_space<vmem>>) attributes {dimension_semantics = [#tpu.dimension_semantics<parallel>, #tpu.dimension_semantics<arbitrary>], iteration_bounds = array<i64: 1, 1>, scalar_prefetch = 0 : i64, scratch_operands = 1 : i64, tpu.core_type = #tpu.core_type<tc>, window_params = [{transform_indices = @transform_0, window_bounds = array<i64: 16, 32>}, {transform_indices = @transform_1, window_bounds = array<i64: 32, 32>}, {transform_indices = @transform_2, window_bounds = array<i64: 16, 32>}, {pipeline_mode = #tpu.pipeline_mode<synchronous>, transform_indices = @transform_3, window_bounds = array<i64: 1, 32>}, {pipeline_mode = #tpu.pipeline_mode<synchronous>, transform_indices = @transform_4, window_bounds = array<i64: 1, 32>}, {transform_indices = @transform_5, window_bounds = array<i64: 16, 32>}]} {
    %c0_i32 = arith.constant 0 : i32
    %0 = arith.cmpi eq, %arg1, %c0_i32 : i32
    %1 = arith.extui %0 : i1 to i32
    %c0_i32_0 = arith.constant 0 : i32
    %2 = arith.cmpi ne, %1, %c0_i32_0 : i32
    scf.if %2 {
      %cst_10 = arith.constant 0.000000e+00 : f32
      %12 = vector.broadcast %cst_10 : f32 to vector<16x32xf32>
      %c0_11 = arith.constant 0 : index
      %c0_12 = arith.constant 0 : index
      %13 = vector.load %arg8[%c0_11, %c0_12] : memref<16x32xf32, #tpu.memory_space<vmem>>, vector<16x32xf32>
      tpu.vector_store %arg8[%c0_11, %c0_12], %12 {strides = array<i32>} : memref<16x32xf32, #tpu.memory_space<vmem>>, vector<16x32xf32>,
    } else {
    }
    %c0 = arith.constant 0 : index
    %c0_1 = arith.constant 0 : index
    %3 = vector.load %arg8[%c0, %c0_1] : memref<16x32xf32, #tpu.memory_space<vmem>>, vector<16x32xf32>
    %c0_2 = arith.constant 0 : index
    %c0_3 = arith.constant 0 : index
    %4 = vector.load %arg2[%c0_2, %c0_3] : memref<16x32xf32, #tpu.memory_space<vmem>>, vector<16x32xf32>
    %c0_4 = arith.constant 0 : index
    %c0_5 = arith.constant 0 : index
    %5 = vector.load %arg3[%c0_4, %c0_5] : memref<32x32xf32, #tpu.memory_space<vmem>>, vector<32x32xf32>
    %cst = arith.constant dense<0.000000e+00> : vector<16x32xf32>
    %6 = tpu.matmul %4, %5, %cst {dimension_numbers = #tpu.dot_dimension_numbers<[1], [0], [0], [1], [0, 0, 1, 1], [], []>} : vector<16x32xf32>, vector<32x32xf32>, vector<16x32xf32> -> vector<16x32xf32>
    %7 = arith.addf %3, %6 : vector<16x32xf32>
    %c0_6 = arith.constant 0 : index
    %c0_7 = arith.constant 0 : index
    %8 = vector.load %arg8[%c0_6, %c0_7] : memref<16x32xf32, #tpu.memory_space<vmem>>, vector<16x32xf32>
    tpu.vector_store %arg8[%c0_6, %c0_7], %7 {strides = array<i32>} : memref<16x32xf32, #tpu.memory_space<vmem>>, vector<16x32xf32>,
    %c0_i32_8 = arith.constant 0 : i32
    %9 = arith.cmpi eq, %arg1, %c0_i32_8 : i32
    %10 = arith.extui %9 : i1 to i32
    %c0_i32_9 = arith.constant 0 : i32
    %11 = arith.cmpi ne, %10, %c0_i32_9 : i32
    scf.if %11 {
      %c0_10 = arith.constant 0 : index
      %c0_11 = arith.constant 0 : index
      %12 = vector.load %arg8[%c0_10, %c0_11] : memref<16x32xf32, #tpu.memory_space<vmem>>, vector<16x32xf32>
      %c0_12 = arith.constant 0 : index
      %c0_13 = arith.constant 0 : index
      %13 = vector.load %arg4[%c0_12, %c0_13] : memref<16x32xf32, #tpu.memory_space<vmem>>, vector<16x32xf32>
      %14 = arith.addf %12, %13 : vector<16x32xf32>
      %cst_14 = arith.constant dense<0.000000e+00> : vector<16xf32>
      %15 = vector.multi_reduction <add>, %14, %cst_14 [1] : vector<16x32xf32> to vector<16xf32>
      %16 = vector.shape_cast %15 : vector<16xf32> to vector<16x1xf32>
      %cst_15 = arith.constant 3.200000e+01 : f32
      %17 = vector.broadcast %cst_15 : f32 to vector<16x1xf32>
      %18 = arith.divf %16, %17 : vector<16x1xf32>
      %19 = vector.broadcast %18 : vector<16x1xf32> to vector<16x32xf32>
      %20 = arith.subf %14, %19 : vector<16x32xf32>
      %21 = arith.mulf %20, %20 : vector<16x32xf32>
      %cst_16 = arith.constant dense<0.000000e+00> : vector<16xf32>
      %22 = vector.multi_reduction <add>, %21, %cst_16 [1] : vector<16x32xf32> to vector<16xf32>
      %23 = vector.shape_cast %22 : vector<16xf32> to vector<16x1xf32>
      %cst_17 = arith.constant 3.200000e+01 : f32
      %24 = vector.broadcast %cst_17 : f32 to vector<16x1xf32>
      %25 = arith.divf %23, %24 : vector<16x1xf32>
      %26 = vector.broadcast %18 : vector<16x1xf32> to vector<16x32xf32>
      %27 = arith.subf %14, %26 : vector<16x32xf32>
      %cst_18 = arith.constant 9.99999993E-9 : f32
      %28 = vector.broadcast %cst_18 : f32 to vector<16x1xf32>
      %29 = arith.addf %25, %28 : vector<16x1xf32>
      %30 = math.rsqrt %29 : vector<16x1xf32>
      %31 = vector.broadcast %30 : vector<16x1xf32> to vector<16x32xf32>
      %32 = arith.mulf %27, %31 : vector<16x32xf32>
      %c0_19 = arith.constant 0 : index
      %c0_20 = arith.constant 0 : index
      %33 = vector.load %arg5[%c0_19, %c0_20] : memref<1x32xf32, #tpu.memory_space<vmem>>, vector<1x32xf32>
      %34 = vector.broadcast %33 : vector<1x32xf32> to vector<16x32xf32>
      %35 = arith.mulf %32, %34 : vector<16x32xf32>
      %c0_21 = arith.constant 0 : index
      %c0_22 = arith.constant 0 : index
      %36 = vector.load %arg6[%c0_21, %c0_22] : memref<1x32xf32, #tpu.memory_space<vmem>>, vector<1x32xf32>
      %37 = vector.broadcast %36 : vector<1x32xf32> to vector<16x32xf32>
      %38 = arith.addf %35, %37 : vector<16x32xf32>
      %c0_23 = arith.constant 0 : index
      %c0_24 = arith.constant 0 : index
      %39 = vector.load %arg7[%c0_23, %c0_24] : memref<16x32xf32, #tpu.memory_space<vmem>>, vector<16x32xf32>
      tpu.vector_store %arg7[%c0_23, %c0_24], %38 {strides = array<i32>} : memref<16x32xf32, #tpu.memory_space<vmem>>, vector<16x32xf32>,
    } else {
    }
    return
  }
  func.func @transform_0(%arg0: i32, %arg1: i32) -> (i32, i32) {
    %c0_i32 = arith.constant 0 : i32
    return %arg0, %arg1 : i32, i32
  }
  func.func @transform_1(%arg0: i32, %arg1: i32) -> (i32, i32) {
    %c0_i32 = arith.constant 0 : i32
    %c0_i32_0 = arith.constant 0 : i32
    return %arg1, %c0_i32 : i32, i32
  }
  func.func @transform_2(%arg0: i32, %arg1: i32) -> (i32, i32) {
    %c0_i32 = arith.constant 0 : i32
    %c0_i32_0 = arith.constant 0 : i32
    return %arg0, %c0_i32 : i32, i32
  }
  func.func @transform_3(%arg0: i32, %arg1: i32) -> (i32, i32) {
    %c0_i32 = arith.constant 0 : i32
    %c0_i32_0 = arith.constant 0 : i32
    %c0_i32_1 = arith.constant 0 : i32
    return %c0_i32, %c0_i32_0 : i32, i32
  }
  func.func @transform_4(%arg0: i32, %arg1: i32) -> (i32, i32) {
    %c0_i32 = arith.constant 0 : i32
    %c0_i32_0 = arith.constant 0 : i32
    %c0_i32_1 = arith.constant 0 : i32
    return %c0_i32, %c0_i32_0 : i32, i32
  }
  func.func @transform_5(%arg0: i32, %arg1: i32) -> (i32, i32) {
    %c0_i32 = arith.constant 0 : i32
    %c0_i32_0 = arith.constant 0 : i32
    return %arg0, %c0_i32 : i32, i32
  }
}

module attributes {stable_mosaic.version = 11 : i64} {
  func.func @_matmul_kernel(%arg0: i32, %arg1: i32, %arg2: i32, %arg3: memref<16x32xf32, #tpu.memory_space<vmem>>, %arg4: memref<32x32xf32, #tpu.memory_space<vmem>>, %arg5: memref<16x32xf32, #tpu.memory_space<vmem>>, %arg6: memref<16x32xf32, #tpu.memory_space<vmem>>) attributes {dimension_semantics = [#tpu.dimension_semantics<parallel>, #tpu.dimension_semantics<parallel>, #tpu.dimension_semantics<arbitrary>], iteration_bounds = array<i64: 1, 1, 1>, scalar_prefetch = 0 : i64, scratch_operands = 1 : i64, tpu.core_type = #tpu.core_type<tc>, window_params = [{transform_indices = @transform_0, window_bounds = array<i64: 16, 32>}, {transform_indices = @transform_1, window_bounds = array<i64: 32, 32>}, {transform_indices = @transform_2, window_bounds = array<i64: 16, 32>}]} {
    %c0_i32 = arith.constant 0 : i32
    %0 = arith.cmpi eq, %arg2, %c0_i32 : i32
    %1 = arith.extui %0 : i1 to i32
    %c0_i32_0 = arith.constant 0 : i32
    %2 = arith.cmpi ne, %1, %c0_i32_0 : i32
    scf.if %2 {
      %cst_10 = arith.constant 0.000000e+00 : f32
      %12 = vector.broadcast %cst_10 : f32 to vector<16x32xf32>
      %c0_11 = arith.constant 0 : index
      %c0_12 = arith.constant 0 : index
      %13 = vector.load %arg6[%c0_11, %c0_12] : memref<16x32xf32, #tpu.memory_space<vmem>>, vector<16x32xf32>
      tpu.vector_store %arg6[%c0_11, %c0_12], %12 {strides = array<i32>} : memref<16x32xf32, #tpu.memory_space<vmem>>, vector<16x32xf32>,
    } else {
    }
    %c0 = arith.constant 0 : index
    %c0_1 = arith.constant 0 : index
    %3 = vector.load %arg6[%c0, %c0_1] : memref<16x32xf32, #tpu.memory_space<vmem>>, vector<16x32xf32>
    %c0_2 = arith.constant 0 : index
    %c0_3 = arith.constant 0 : index
    %4 = vector.load %arg3[%c0_2, %c0_3] : memref<16x32xf32, #tpu.memory_space<vmem>>, vector<16x32xf32>
    %c0_4 = arith.constant 0 : index
    %c0_5 = arith.constant 0 : index
    %5 = vector.load %arg4[%c0_4, %c0_5] : memref<32x32xf32, #tpu.memory_space<vmem>>, vector<32x32xf32>
    %cst = arith.constant dense<0.000000e+00> : vector<16x32xf32>
    %6 = tpu.matmul %4, %5, %cst {dimension_numbers = #tpu.dot_dimension_numbers<[1], [0], [0], [1], [0, 0, 1, 1], [], []>} : vector<16x32xf32>, vector<32x32xf32>, vector<16x32xf32> -> vector<16x32xf32>
    %7 = arith.addf %3, %6 : vector<16x32xf32>
    %c0_6 = arith.constant 0 : index
    %c0_7 = arith.constant 0 : index
    %8 = vector.load %arg6[%c0_6, %c0_7] : memref<16x32xf32, #tpu.memory_space<vmem>>, vector<16x32xf32>
    tpu.vector_store %arg6[%c0_6, %c0_7], %7 {strides = array<i32>} : memref<16x32xf32, #tpu.memory_space<vmem>>, vector<16x32xf32>,
    %c0_i32_8 = arith.constant 0 : i32
    %9 = arith.cmpi eq, %arg2, %c0_i32_8 : i32
    %10 = arith.extui %9 : i1 to i32
    %c0_i32_9 = arith.constant 0 : i32
    %11 = arith.cmpi ne, %10, %c0_i32_9 : i32
    scf.if %11 {
      %c0_10 = arith.constant 0 : index
      %c0_11 = arith.constant 0 : index
      %12 = vector.load %arg6[%c0_10, %c0_11] : memref<16x32xf32, #tpu.memory_space<vmem>>, vector<16x32xf32>
      %c0_12 = arith.constant 0 : index
      %c0_13 = arith.constant 0 : index
      %13 = vector.load %arg5[%c0_12, %c0_13] : memref<16x32xf32, #tpu.memory_space<vmem>>, vector<16x32xf32>
      tpu.vector_store %arg5[%c0_12, %c0_13], %12 {strides = array<i32>} : memref<16x32xf32, #tpu.memory_space<vmem>>, vector<16x32xf32>,
    } else {
    }
    return
  }
  func.func @transform_0(%arg0: i32, %arg1: i32, %arg2: i32) -> (i32, i32) {
    %c0_i32 = arith.constant 0 : i32
    return %arg0, %arg2 : i32, i32
  }
  func.func @transform_1(%arg0: i32, %arg1: i32, %arg2: i32) -> (i32, i32) {
    %c0_i32 = arith.constant 0 : i32
    return %arg2, %arg1 : i32, i32
  }
  func.func @transform_2(%arg0: i32, %arg1: i32, %arg2: i32) -> (i32, i32) {
    %c0_i32 = arith.constant 0 : i32
    return %arg0, %arg1 : i32, i32
  }
}

module attributes {stable_mosaic.version = 11 : i64} {
  func.func @_matmul_kernel(%arg0: i32, %arg1: i32, %arg2: i32, %arg3: memref<16x32xf32, #tpu.memory_space<vmem>>, %arg4: memref<32x64xf32, #tpu.memory_space<vmem>>, %arg5: memref<16x64xf32, #tpu.memory_space<vmem>>, %arg6: memref<16x64xf32, #tpu.memory_space<vmem>>) attributes {dimension_semantics = [#tpu.dimension_semantics<parallel>, #tpu.dimension_semantics<parallel>, #tpu.dimension_semantics<arbitrary>], iteration_bounds = array<i64: 1, 1, 1>, scalar_prefetch = 0 : i64, scratch_operands = 1 : i64, tpu.core_type = #tpu.core_type<tc>, window_params = [{transform_indices = @transform_0, window_bounds = array<i64: 16, 32>}, {transform_indices = @transform_1, window_bounds = array<i64: 32, 64>}, {transform_indices = @transform_2, window_bounds = array<i64: 16, 64>}]} {
    %c0_i32 = arith.constant 0 : i32
    %0 = arith.cmpi eq, %arg2, %c0_i32 : i32
    %1 = arith.extui %0 : i1 to i32
    %c0_i32_0 = arith.constant 0 : i32
    %2 = arith.cmpi ne, %1, %c0_i32_0 : i32
    scf.if %2 {
      %cst_10 = arith.constant 0.000000e+00 : f32
      %12 = vector.broadcast %cst_10 : f32 to vector<16x64xf32>
      %c0_11 = arith.constant 0 : index
      %c0_12 = arith.constant 0 : index
      %13 = vector.load %arg6[%c0_11, %c0_12] : memref<16x64xf32, #tpu.memory_space<vmem>>, vector<16x64xf32>
      tpu.vector_store %arg6[%c0_11, %c0_12], %12 {strides = array<i32>} : memref<16x64xf32, #tpu.memory_space<vmem>>, vector<16x64xf32>,
    } else {
    }
    %c0 = arith.constant 0 : index
    %c0_1 = arith.constant 0 : index
    %3 = vector.load %arg6[%c0, %c0_1] : memref<16x64xf32, #tpu.memory_space<vmem>>, vector<16x64xf32>
    %c0_2 = arith.constant 0 : index
    %c0_3 = arith.constant 0 : index
    %4 = vector.load %arg3[%c0_2, %c0_3] : memref<16x32xf32, #tpu.memory_space<vmem>>, vector<16x32xf32>
    %c0_4 = arith.constant 0 : index
    %c0_5 = arith.constant 0 : index
    %5 = vector.load %arg4[%c0_4, %c0_5] : memref<32x64xf32, #tpu.memory_space<vmem>>, vector<32x64xf32>
    %cst = arith.constant dense<0.000000e+00> : vector<16x64xf32>
    %6 = tpu.matmul %4, %5, %cst {dimension_numbers = #tpu.dot_dimension_numbers<[1], [0], [0], [1], [0, 0, 1, 1], [], []>} : vector<16x32xf32>, vector<32x64xf32>, vector<16x64xf32> -> vector<16x64xf32>
    %7 = arith.addf %3, %6 : vector<16x64xf32>
    %c0_6 = arith.constant 0 : index
    %c0_7 = arith.constant 0 : index
    %8 = vector.load %arg6[%c0_6, %c0_7] : memref<16x64xf32, #tpu.memory_space<vmem>>, vector<16x64xf32>
    tpu.vector_store %arg6[%c0_6, %c0_7], %7 {strides = array<i32>} : memref<16x64xf32, #tpu.memory_space<vmem>>, vector<16x64xf32>,
    %c0_i32_8 = arith.constant 0 : i32
    %9 = arith.cmpi eq, %arg2, %c0_i32_8 : i32
    %10 = arith.extui %9 : i1 to i32
    %c0_i32_9 = arith.constant 0 : i32
    %11 = arith.cmpi ne, %10, %c0_i32_9 : i32
    scf.if %11 {
      %c0_10 = arith.constant 0 : index
      %c0_11 = arith.constant 0 : index
      %12 = vector.load %arg6[%c0_10, %c0_11] : memref<16x64xf32, #tpu.memory_space<vmem>>, vector<16x64xf32>
      %c0_12 = arith.constant 0 : index
      %c0_13 = arith.constant 0 : index
      %13 = vector.load %arg5[%c0_12, %c0_13] : memref<16x64xf32, #tpu.memory_space<vmem>>, vector<16x64xf32>
      tpu.vector_store %arg5[%c0_12, %c0_13], %12 {strides = array<i32>} : memref<16x64xf32, #tpu.memory_space<vmem>>, vector<16x64xf32>,
    } else {
    }
    return
  }
  func.func @transform_0(%arg0: i32, %arg1: i32, %arg2: i32) -> (i32, i32) {
    %c0_i32 = arith.constant 0 : i32
    return %arg0, %arg2 : i32, i32
  }
  func.func @transform_1(%arg0: i32, %arg1: i32, %arg2: i32) -> (i32, i32) {
    %c0_i32 = arith.constant 0 : i32
    return %arg2, %arg1 : i32, i32
  }
  func.func @transform_2(%arg0: i32, %arg1: i32, %arg2: i32) -> (i32, i32) {
    %c0_i32 = arith.constant 0 : i32
    return %arg0, %arg1 : i32, i32
  }
}

module attributes {stable_mosaic.version = 11 : i64} {
  func.func @_flash_attn_kernel(%arg0: i32, %arg1: i32, %arg2: i32, %arg3: memref<1x4x8x8xf32, #tpu.memory_space<vmem>>, %arg4: memref<1x4x8x8xf32, #tpu.memory_space<vmem>>, %arg5: memref<1x4x8x8xf32, #tpu.memory_space<vmem>>, %arg6: memref<1x4x8x8xf32, #tpu.memory_space<vmem>>, %arg7: memref<4x8x1xf32, #tpu.memory_space<vmem>>, %arg8: memref<4x8x1xf32, #tpu.memory_space<vmem>>, %arg9: memref<4x8x8xf32, #tpu.memory_space<vmem>>) attributes {dimension_semantics = [#tpu.dimension_semantics<parallel>, #tpu.dimension_semantics<parallel>, #tpu.dimension_semantics<arbitrary>], iteration_bounds = array<i64: 2, 1, 1>, scalar_prefetch = 0 : i64, scratch_operands = 3 : i64, tpu.core_type = #tpu.core_type<tc>, window_params = [{transform_indices = @transform_0, window_bounds = array<i64: 1, 4, 8, 8>}, {transform_indices = @transform_1, window_bounds = array<i64: 1, 4, 8, 8>}, {transform_indices = @transform_2, window_bounds = array<i64: 1, 4, 8, 8>}, {transform_indices = @transform_3, window_bounds = array<i64: 1, 4, 8, 8>}]} {
    %c0_i32 = arith.constant 0 : i32
    %0 = arith.cmpi eq, %arg2, %c0_i32 : i32
    %1 = arith.extui %0 : i1 to i32
    %c0_i32_0 = arith.constant 0 : i32
    %2 = arith.cmpi ne, %1, %c0_i32_0 : i32
    scf.if %2 {
      %cst_39 = arith.constant 0xFF800000 : f32
      %38 = vector.broadcast %cst_39 : f32 to vector<4x8x1xf32>
      %c0_40 = arith.constant 0 : index
      %c0_41 = arith.constant 0 : index
      %c0_42 = arith.constant 0 : index
      %39 = vector.load %arg7[%c0_40, %c0_41, %c0_42] : memref<4x8x1xf32, #tpu.memory_space<vmem>>, vector<4x8x1xf32>
      tpu.vector_store %arg7[%c0_40, %c0_41, %c0_42], %38 {strides = array<i32>} : memref<4x8x1xf32, #tpu.memory_space<vmem>>, vector<4x8x1xf32>,
      %cst_43 = arith.constant 0.000000e+00 : f32
      %40 = vector.broadcast %cst_43 : f32 to vector<4x8x1xf32>
      %c0_44 = arith.constant 0 : index
      %c0_45 = arith.constant 0 : index
      %c0_46 = arith.constant 0 : index
      %41 = vector.load %arg8[%c0_44, %c0_45, %c0_46] : memref<4x8x1xf32, #tpu.memory_space<vmem>>, vector<4x8x1xf32>
      tpu.vector_store %arg8[%c0_44, %c0_45, %c0_46], %40 {strides = array<i32>} : memref<4x8x1xf32, #tpu.memory_space<vmem>>, vector<4x8x1xf32>,
      %cst_47 = arith.constant 0.000000e+00 : f32
      %42 = vector.broadcast %cst_47 : f32 to vector<4x8x8xf32>
      %c0_48 = arith.constant 0 : index
      %c0_49 = arith.constant 0 : index
      %c0_50 = arith.constant 0 : index
      %43 = vector.load %arg9[%c0_48, %c0_49, %c0_50] : memref<4x8x8xf32, #tpu.memory_space<vmem>>, vector<4x8x8xf32>
      tpu.vector_store %arg9[%c0_48, %c0_49, %c0_50], %42 {strides = array<i32>} : memref<4x8x8xf32, #tpu.memory_space<vmem>>, vector<4x8x8xf32>,
    } else {
    }
    %c0 = arith.constant 0 : index
    %c0_1 = arith.constant 0 : index
    %c0_2 = arith.constant 0 : index
    %c0_3 = arith.constant 0 : index
    %3 = vector.load %arg3[%c0, %c0_1, %c0_2, %c0_3] : memref<1x4x8x8xf32, #tpu.memory_space<vmem>>, vector<1x4x8x8xf32>
    %4 = vector.shape_cast %3 : vector<1x4x8x8xf32> to vector<4x8x8xf32>
    %c0_4 = arith.constant 0 : index
    %c0_5 = arith.constant 0 : index
    %c0_6 = arith.constant 0 : index
    %c0_7 = arith.constant 0 : index
    %5 = vector.load %arg4[%c0_4, %c0_5, %c0_6, %c0_7] : memref<1x4x8x8xf32, #tpu.memory_space<vmem>>, vector<1x4x8x8xf32>
    %6 = vector.shape_cast %5 : vector<1x4x8x8xf32> to vector<4x8x8xf32>
    %c0_8 = arith.constant 0 : index
    %c0_9 = arith.constant 0 : index
    %c0_10 = arith.constant 0 : index
    %c0_11 = arith.constant 0 : index
    %7 = vector.load %arg5[%c0_8, %c0_9, %c0_10, %c0_11] : memref<1x4x8x8xf32, #tpu.memory_space<vmem>>, vector<1x4x8x8xf32>
    %8 = vector.shape_cast %7 : vector<1x4x8x8xf32> to vector<4x8x8xf32>
    "tpu.trace_start"() <{level = 10 : i32, message = "hqd,hkd->hqk"}> : () -> ()
    %cst = arith.constant dense<0.000000e+00> : vector<4x8x8xf32>
    %9 = tpu.matmul %4, %6, %cst {dimension_numbers = #tpu.dot_dimension_numbers<[2], [2], [1], [1], [0, 0, 0, 1, 1, 1], [0], [0]>} : vector<4x8x8xf32>, vector<4x8x8xf32>, vector<4x8x8xf32> -> vector<4x8x8xf32>
    "tpu.trace_stop"() : () -> ()
    %cst_12 = arith.constant 1.250000e-01 : f32
    %10 = vector.broadcast %cst_12 : f32 to vector<4x8x8xf32>
    %11 = arith.mulf %9, %10 : vector<4x8x8xf32>
    %c0_13 = arith.constant 0 : index
    %c0_14 = arith.constant 0 : index
    %c0_15 = arith.constant 0 : index
    %12 = vector.load %arg7[%c0_13, %c0_14, %c0_15] : memref<4x8x1xf32, #tpu.memory_space<vmem>>, vector<4x8x1xf32>
    %cst_16 = arith.constant dense<0xFF800000> : vector<4x8xf32>
    %13 = vector.multi_reduction <maximumf>, %11, %cst_16 [2] : vector<4x8x8xf32> to vector<4x8xf32>
    %14 = vector.shape_cast %13 : vector<4x8xf32> to vector<4x8x1xf32>
    %15 = arith.maximumf %12, %14 : vector<4x8x1xf32>
    %c0_17 = arith.constant 0 : index
    %c0_18 = arith.constant 0 : index
    %c0_19 = arith.constant 0 : index
    %16 = vector.load %arg7[%c0_17, %c0_18, %c0_19] : memref<4x8x1xf32, #tpu.memory_space<vmem>>, vector<4x8x1xf32>
    %17 = arith.subf %16, %15 : vector<4x8x1xf32>
    %18 = math.exp %17 : vector<4x8x1xf32>
    %19 = vector.broadcast %15 : vector<4x8x1xf32> to vector<4x8x8xf32>
    %20 = arith.subf %11, %19 : vector<4x8x8xf32>
    %21 = math.exp %20 : vector<4x8x8xf32>
    %c0_20 = arith.constant 0 : index
    %c0_21 = arith.constant 0 : index
    %c0_22 = arith.constant 0 : index
    %22 = vector.load %arg8[%c0_20, %c0_21, %c0_22] : memref<4x8x1xf32, #tpu.memory_space<vmem>>, vector<4x8x1xf32>
    %23 = arith.mulf %18, %22 : vector<4x8x1xf32>
    %cst_23 = arith.constant dense<0.000000e+00> : vector<4x8xf32>
    %24 = vector.multi_reduction <add>, %21, %cst_23 [2] : vector<4x8x8xf32> to vector<4x8xf32>
    %25 = vector.shape_cast %24 : vector<4x8xf32> to vector<4x8x1xf32>
    %26 = arith.addf %23, %25 : vector<4x8x1xf32>
    %c0_24 = arith.constant 0 : index
    %c0_25 = arith.constant 0 : index
    %c0_26 = arith.constant 0 : index
    %27 = vector.load %arg8[%c0_24, %c0_25, %c0_26] : memref<4x8x1xf32, #tpu.memory_space<vmem>>, vector<4x8x1xf32>
    tpu.vector_store %arg8[%c0_24, %c0_25, %c0_26], %26 {strides = array<i32>} : memref<4x8x1xf32, #tpu.memory_space<vmem>>, vector<4x8x1xf32>,
    %c0_27 = arith.constant 0 : index
    %c0_28 = arith.constant 0 : index
    %c0_29 = arith.constant 0 : index
    %28 = vector.load %arg9[%c0_27, %c0_28, %c0_29] : memref<4x8x8xf32, #tpu.memory_space<vmem>>, vector<4x8x8xf32>
    %29 = vector.broadcast %18 : vector<4x8x1xf32> to vector<4x8x8xf32>
    %30 = arith.mulf %29, %28 : vector<4x8x8xf32>
    "tpu.trace_start"() <{level = 10 : i32, message = "hqk,hkd->hqd"}> : () -> ()
    %cst_30 = arith.constant dense<0.000000e+00> : vector<4x8x8xf32>
    %31 = tpu.matmul %21, %8, %cst_30 {dimension_numbers = #tpu.dot_dimension_numbers<[2], [1], [1], [2], [0, 0, 0, 1, 1, 2], [0], [0]>} : vector<4x8x8xf32>, vector<4x8x8xf32>, vector<4x8x8xf32> -> vector<4x8x8xf32>
    "tpu.trace_stop"() : () -> ()
    %32 = arith.addf %30, %31 : vector<4x8x8xf32>
    %c0_31 = arith.constant 0 : index
    %c0_32 = arith.constant 0 : index
    %c0_33 = arith.constant 0 : index
    %33 = vector.load %arg9[%c0_31, %c0_32, %c0_33] : memref<4x8x8xf32, #tpu.memory_space<vmem>>, vector<4x8x8xf32>
    tpu.vector_store %arg9[%c0_31, %c0_32, %c0_33], %32 {strides = array<i32>} : memref<4x8x8xf32, #tpu.memory_space<vmem>>, vector<4x8x8xf32>,
    %c0_34 = arith.constant 0 : index
    %c0_35 = arith.constant 0 : index
    %c0_36 = arith.constant 0 : index
    %34 = vector.load %arg7[%c0_34, %c0_35, %c0_36] : memref<4x8x1xf32, #tpu.memory_space<vmem>>, vector<4x8x1xf32>
    tpu.vector_store %arg7[%c0_34, %c0_35, %c0_36], %15 {strides = array<i32>} : memref<4x8x1xf32, #tpu.memory_space<vmem>>, vector<4x8x1xf32>,
    %c0_i32_37 = arith.constant 0 : i32
    %35 = arith.cmpi eq, %arg2, %c0_i32_37 : i32
    %36 = arith.extui %35 : i1 to i32
    %c0_i32_38 = arith.constant 0 : i32
    %37 = arith.cmpi ne, %36, %c0_i32_38 : i32
    scf.if %37 {
      %c0_39 = arith.constant 0 : index
      %c0_40 = arith.constant 0 : index
      %c0_41 = arith.constant 0 : index
      %38 = vector.load %arg9[%c0_39, %c0_40, %c0_41] : memref<4x8x8xf32, #tpu.memory_space<vmem>>, vector<4x8x8xf32>
      %c0_42 = arith.constant 0 : index
      %c0_43 = arith.constant 0 : index
      %c0_44 = arith.constant 0 : index
      %39 = vector.load %arg8[%c0_42, %c0_43, %c0_44] : memref<4x8x1xf32, #tpu.memory_space<vmem>>, vector<4x8x1xf32>
      %40 = tpu.reciprocal %39 {approx = true} : vector<4x8x1xf32> -> vector<4x8x1xf32>
      %41 = vector.broadcast %40 : vector<4x8x1xf32> to vector<4x8x8xf32>
      %42 = arith.mulf %38, %41 : vector<4x8x8xf32>
      %c0_45 = arith.constant 0 : index
      %c0_46 = arith.constant 0 : index
      %c0_47 = arith.constant 0 : index
      %c0_48 = arith.constant 0 : index
      %43 = vector.load %arg6[%c0_45, %c0_46, %c0_47, %c0_48] : memref<1x4x8x8xf32, #tpu.memory_space<vmem>>, vector<1x4x8x8xf32>
      %44 = vector.shape_cast %43 : vector<1x4x8x8xf32> to vector<4x8x8xf32>
      %45 = vector.shape_cast %42 : vector<4x8x8xf32> to vector<1x4x8x8xf32>
      tpu.vector_store %arg6[%c0_45, %c0_46, %c0_47, %c0_48], %45 {strides = array<i32>} : memref<1x4x8x8xf32, #tpu.memory_space<vmem>>, vector<1x4x8x8xf32>,
    } else {
    }
    return
  }
  func.func @transform_0(%arg0: i32, %arg1: i32, %arg2: i32) -> (i32, i32, i32, i32) {
    %c0_i32 = arith.constant 0 : i32
    %c0_i32_0 = arith.constant 0 : i32
    %c0_i32_1 = arith.constant 0 : i32
    return %arg0, %c0_i32, %arg1, %c0_i32_0 : i32, i32, i32, i32
  }
  func.func @transform_1(%arg0: i32, %arg1: i32, %arg2: i32) -> (i32, i32, i32, i32) {
    %c0_i32 = arith.constant 0 : i32
    %c0_i32_0 = arith.constant 0 : i32
    %c0_i32_1 = arith.constant 0 : i32
    return %arg0, %c0_i32, %arg2, %c0_i32_0 : i32, i32, i32, i32
  }
  func.func @transform_2(%arg0: i32, %arg1: i32, %arg2: i32) -> (i32, i32, i32, i32) {
    %c0_i32 = arith.constant 0 : i32
    %c0_i32_0 = arith.constant 0 : i32
    %c0_i32_1 = arith.constant 0 : i32
    return %arg0, %c0_i32, %arg2, %c0_i32_0 : i32, i32, i32, i32
  }
  func.func @transform_3(%arg0: i32, %arg1: i32, %arg2: i32) -> (i32, i32, i32, i32) {
    %c0_i32 = arith.constant 0 : i32
    %c0_i32_0 = arith.constant 0 : i32
    %c0_i32_1 = arith.constant 0 : i32
    return %arg0, %c0_i32, %arg1, %c0_i32_0 : i32, i32, i32, i32
  }
}

module attributes {stable_mosaic.version = 11 : i64} {
  func.func @_matmul_kernel(%arg0: i32, %arg1: i32, %arg2: i32, %arg3: memref<16x32xf32, #tpu.memory_space<vmem>>, %arg4: memref<32x128xf32, #tpu.memory_space<vmem>>, %arg5: memref<1x128xf32, #tpu.memory_space<vmem>>, %arg6: memref<16x128xf32, #tpu.memory_space<vmem>>, %arg7: memref<16x128xf32, #tpu.memory_space<vmem>>) attributes {dimension_semantics = [#tpu.dimension_semantics<parallel>, #tpu.dimension_semantics<parallel>, #tpu.dimension_semantics<arbitrary>], iteration_bounds = array<i64: 1, 1, 1>, scalar_prefetch = 0 : i64, scratch_operands = 1 : i64, tpu.core_type = #tpu.core_type<tc>, window_params = [{transform_indices = @transform_0, window_bounds = array<i64: 16, 32>}, {transform_indices = @transform_1, window_bounds = array<i64: 32, 128>}, {transform_indices = @transform_2, window_bounds = array<i64: 1, 128>}, {transform_indices = @transform_3, window_bounds = array<i64: 16, 128>}]} {
    %c0_i32 = arith.constant 0 : i32
    %0 = arith.cmpi eq, %arg2, %c0_i32 : i32
    %1 = arith.extui %0 : i1 to i32
    %c0_i32_0 = arith.constant 0 : i32
    %2 = arith.cmpi ne, %1, %c0_i32_0 : i32
    scf.if %2 {
      %cst_10 = arith.constant 0.000000e+00 : f32
      %12 = vector.broadcast %cst_10 : f32 to vector<16x128xf32>
      %c0_11 = arith.constant 0 : index
      %c0_12 = arith.constant 0 : index
      %13 = vector.load %arg7[%c0_11, %c0_12] : memref<16x128xf32, #tpu.memory_space<vmem>>, vector<16x128xf32>
      tpu.vector_store %arg7[%c0_11, %c0_12], %12 {strides = array<i32>} : memref<16x128xf32, #tpu.memory_space<vmem>>, vector<16x128xf32>,
    } else {
    }
    %c0 = arith.constant 0 : index
    %c0_1 = arith.constant 0 : index
    %3 = vector.load %arg7[%c0, %c0_1] : memref<16x128xf32, #tpu.memory_space<vmem>>, vector<16x128xf32>
    %c0_2 = arith.constant 0 : index
    %c0_3 = arith.constant 0 : index
    %4 = vector.load %arg3[%c0_2, %c0_3] : memref<16x32xf32, #tpu.memory_space<vmem>>, vector<16x32xf32>
    %c0_4 = arith.constant 0 : index
    %c0_5 = arith.constant 0 : index
    %5 = vector.load %arg4[%c0_4, %c0_5] : memref<32x128xf32, #tpu.memory_space<vmem>>, vector<32x128xf32>
    %cst = arith.constant dense<0.000000e+00> : vector<16x128xf32>
    %6 = tpu.matmul %4, %5, %cst {dimension_numbers = #tpu.dot_dimension_numbers<[1], [0], [0], [1], [0, 0, 1, 1], [], []>} : vector<16x32xf32>, vector<32x128xf32>, vector<16x128xf32> -> vector<16x128xf32>
    %7 = arith.addf %3, %6 : vector<16x128xf32>
    %c0_6 = arith.constant 0 : index
    %c0_7 = arith.constant 0 : index
    %8 = vector.load %arg7[%c0_6, %c0_7] : memref<16x128xf32, #tpu.memory_space<vmem>>, vector<16x128xf32>
    tpu.vector_store %arg7[%c0_6, %c0_7], %7 {strides = array<i32>} : memref<16x128xf32, #tpu.memory_space<vmem>>, vector<16x128xf32>,
    %c0_i32_8 = arith.constant 0 : i32
    %9 = arith.cmpi eq, %arg2, %c0_i32_8 : i32
    %10 = arith.extui %9 : i1 to i32
    %c0_i32_9 = arith.constant 0 : i32
    %11 = arith.cmpi ne, %10, %c0_i32_9 : i32
    scf.if %11 {
      %c0_10 = arith.constant 0 : index
      %c0_11 = arith.constant 0 : index
      %12 = vector.load %arg7[%c0_10, %c0_11] : memref<16x128xf32, #tpu.memory_space<vmem>>, vector<16x128xf32>
      %c0_12 = arith.constant 0 : index
      %c0_13 = arith.constant 0 : index
      %13 = vector.load %arg5[%c0_12, %c0_13] : memref<1x128xf32, #tpu.memory_space<vmem>>, vector<1x128xf32>
      %14 = vector.broadcast %13 : vector<1x128xf32> to vector<16x128xf32>
      %15 = arith.addf %12, %14 : vector<16x128xf32>
      %cst_14 = arith.constant 0.000000e+00 : f32
      %16 = vector.broadcast %cst_14 : f32 to vector<16x128xf32>
      %17 = arith.maximumf %15, %16 : vector<16x128xf32>
      %c0_15 = arith.constant 0 : index
      %c0_16 = arith.constant 0 : index
      %18 = vector.load %arg6[%c0_15, %c0_16] : memref<16x128xf32, #tpu.memory_space<vmem>>, vector<16x128xf32>
      tpu.vector_store %arg6[%c0_15, %c0_16], %17 {strides = array<i32>} : memref<16x128xf32, #tpu.memory_space<vmem>>, vector<16x128xf32>,
    } else {
    }
    return
  }
  func.func @transform_0(%arg0: i32, %arg1: i32, %arg2: i32) -> (i32, i32) {
    %c0_i32 = arith.constant 0 : i32
    return %arg0, %arg2 : i32, i32
  }
  func.func @transform_1(%arg0: i32, %arg1: i32, %arg2: i32) -> (i32, i32) {
    %c0_i32 = arith.constant 0 : i32
    return %arg2, %arg1 : i32, i32
  }
  func.func @transform_2(%arg0: i32, %arg1: i32, %arg2: i32) -> (i32, i32) {
    %c0_i32 = arith.constant 0 : i32
    %c0_i32_0 = arith.constant 0 : i32
    return %c0_i32, %arg1 : i32, i32
  }
  func.func @transform_3(%arg0: i32, %arg1: i32, %arg2: i32) -> (i32, i32) {
    %c0_i32 = arith.constant 0 : i32
    return %arg0, %arg1 : i32, i32
  }
}

module attributes {stable_mosaic.version = 11 : i64} {
  func.func @_matmul_res_ln_kernel(%arg0: i32, %arg1: i32, %arg2: memref<16x128xf32, #tpu.memory_space<vmem>>, %arg3: memref<128x32xf32, #tpu.memory_space<vmem>>, %arg4: memref<1x32xf32, #tpu.memory_space<vmem>>, %arg5: memref<16x32xf32, #tpu.memory_space<vmem>>, %arg6: memref<1x32xf32, #tpu.memory_space<vmem>>, %arg7: memref<1x32xf32, #tpu.memory_space<vmem>>, %arg8: memref<16x32xf32, #tpu.memory_space<vmem>>, %arg9: memref<16x32xf32, #tpu.memory_space<vmem>>) attributes {dimension_semantics = [#tpu.dimension_semantics<parallel>, #tpu.dimension_semantics<arbitrary>], iteration_bounds = array<i64: 1, 1>, scalar_prefetch = 0 : i64, scratch_operands = 1 : i64, tpu.core_type = #tpu.core_type<tc>, window_params = [{transform_indices = @transform_0, window_bounds = array<i64: 16, 128>}, {transform_indices = @transform_1, window_bounds = array<i64: 128, 32>}, {pipeline_mode = #tpu.pipeline_mode<synchronous>, transform_indices = @transform_2, window_bounds = array<i64: 1, 32>}, {transform_indices = @transform_3, window_bounds = array<i64: 16, 32>}, {pipeline_mode = #tpu.pipeline_mode<synchronous>, transform_indices = @transform_4, window_bounds = array<i64: 1, 32>}, {pipeline_mode = #tpu.pipeline_mode<synchronous>, transform_indices = @transform_5, window_bounds = array<i64: 1, 32>}, {transform_indices = @transform_6, window_bounds = array<i64: 16, 32>}]} {
    %c0_i32 = arith.constant 0 : i32
    %0 = arith.cmpi eq, %arg1, %c0_i32 : i32
    %1 = arith.extui %0 : i1 to i32
    %c0_i32_0 = arith.constant 0 : i32
    %2 = arith.cmpi ne, %1, %c0_i32_0 : i32
    scf.if %2 {
      %cst_10 = arith.constant 0.000000e+00 : f32
      %12 = vector.broadcast %cst_10 : f32 to vector<16x32xf32>
      %c0_11 = arith.constant 0 : index
      %c0_12 = arith.constant 0 : index
      %13 = vector.load %arg9[%c0_11, %c0_12] : memref<16x32xf32, #tpu.memory_space<vmem>>, vector<16x32xf32>
      tpu.vector_store %arg9[%c0_11, %c0_12], %12 {strides = array<i32>} : memref<16x32xf32, #tpu.memory_space<vmem>>, vector<16x32xf32>,
    } else {
    }
    %c0 = arith.constant 0 : index
    %c0_1 = arith.constant 0 : index
    %3 = vector.load %arg9[%c0, %c0_1] : memref<16x32xf32, #tpu.memory_space<vmem>>, vector<16x32xf32>
    %c0_2 = arith.constant 0 : index
    %c0_3 = arith.constant 0 : index
    %4 = vector.load %arg2[%c0_2, %c0_3] : memref<16x128xf32, #tpu.memory_space<vmem>>, vector<16x128xf32>
    %c0_4 = arith.constant 0 : index
    %c0_5 = arith.constant 0 : index
    %5 = vector.load %arg3[%c0_4, %c0_5] : memref<128x32xf32, #tpu.memory_space<vmem>>, vector<128x32xf32>
    %cst = arith.constant dense<0.000000e+00> : vector<16x32xf32>
    %6 = tpu.matmul %4, %5, %cst {dimension_numbers = #tpu.dot_dimension_numbers<[1], [0], [0], [1], [0, 0, 1, 1], [], []>} : vector<16x128xf32>, vector<128x32xf32>, vector<16x32xf32> -> vector<16x32xf32>
    %7 = arith.addf %3, %6 : vector<16x32xf32>
    %c0_6 = arith.constant 0 : index
    %c0_7 = arith.constant 0 : index
    %8 = vector.load %arg9[%c0_6, %c0_7] : memref<16x32xf32, #tpu.memory_space<vmem>>, vector<16x32xf32>
    tpu.vector_store %arg9[%c0_6, %c0_7], %7 {strides = array<i32>} : memref<16x32xf32, #tpu.memory_space<vmem>>, vector<16x32xf32>,
    %c0_i32_8 = arith.constant 0 : i32
    %9 = arith.cmpi eq, %arg1, %c0_i32_8 : i32
    %10 = arith.extui %9 : i1 to i32
    %c0_i32_9 = arith.constant 0 : i32
    %11 = arith.cmpi ne, %10, %c0_i32_9 : i32
    scf.if %11 {
      %c0_10 = arith.constant 0 : index
      %c0_11 = arith.constant 0 : index
      %12 = vector.load %arg9[%c0_10, %c0_11] : memref<16x32xf32, #tpu.memory_space<vmem>>, vector<16x32xf32>
      %c0_12 = arith.constant 0 : index
      %c0_13 = arith.constant 0 : index
      %13 = vector.load %arg4[%c0_12, %c0_13] : memref<1x32xf32, #tpu.memory_space<vmem>>, vector<1x32xf32>
      %14 = vector.broadcast %13 : vector<1x32xf32> to vector<16x32xf32>
      %15 = arith.addf %12, %14 : vector<16x32xf32>
      %c0_14 = arith.constant 0 : index
      %c0_15 = arith.constant 0 : index
      %16 = vector.load %arg5[%c0_14, %c0_15] : memref<16x32xf32, #tpu.memory_space<vmem>>, vector<16x32xf32>
      %17 = arith.addf %15, %16 : vector<16x32xf32>
      %cst_16 = arith.constant dense<0.000000e+00> : vector<16xf32>
      %18 = vector.multi_reduction <add>, %17, %cst_16 [1] : vector<16x32xf32> to vector<16xf32>
      %19 = vector.shape_cast %18 : vector<16xf32> to vector<16x1xf32>
      %cst_17 = arith.constant 3.200000e+01 : f32
      %20 = vector.broadcast %cst_17 : f32 to vector<16x1xf32>
      %21 = arith.divf %19, %20 : vector<16x1xf32>
      %22 = vector.broadcast %21 : vector<16x1xf32> to vector<16x32xf32>
      %23 = arith.subf %17, %22 : vector<16x32xf32>
      %24 = arith.mulf %23, %23 : vector<16x32xf32>
      %cst_18 = arith.constant dense<0.000000e+00> : vector<16xf32>
      %25 = vector.multi_reduction <add>, %24, %cst_18 [1] : vector<16x32xf32> to vector<16xf32>
      %26 = vector.shape_cast %25 : vector<16xf32> to vector<16x1xf32>
      %cst_19 = arith.constant 3.200000e+01 : f32
      %27 = vector.broadcast %cst_19 : f32 to vector<16x1xf32>
      %28 = arith.divf %26, %27 : vector<16x1xf32>
      %29 = vector.broadcast %21 : vector<16x1xf32> to vector<16x32xf32>
      %30 = arith.subf %17, %29 : vector<16x32xf32>
      %cst_20 = arith.constant 9.99999997E-7 : f32
      %31 = vector.broadcast %cst_20 : f32 to vector<16x1xf32>
      %32 = arith.addf %28, %31 : vector<16x1xf32>
      %33 = math.rsqrt %32 : vector<16x1xf32>
      %34 = vector.broadcast %33 : vector<16x1xf32> to vector<16x32xf32>
      %35 = arith.mulf %30, %34 : vector<16x32xf32>
      %c0_21 = arith.constant 0 : index
      %c0_22 = arith.constant 0 : index
      %36 = vector.load %arg6[%c0_21, %c0_22] : memref<1x32xf32, #tpu.memory_space<vmem>>, vector<1x32xf32>
      %37 = vector.broadcast %36 : vector<1x32xf32> to vector<16x32xf32>
      %38 = arith.mulf %35, %37 : vector<16x32xf32>
      %c0_23 = arith.constant 0 : index
      %c0_24 = arith.constant 0 : index
      %39 = vector.load %arg7[%c0_23, %c0_24] : memref<1x32xf32, #tpu.memory_space<vmem>>, vector<1x32xf32>
      %40 = vector.broadcast %39 : vector<1x32xf32> to vector<16x32xf32>
      %41 = arith.addf %38, %40 : vector<16x32xf32>
      %c0_25 = arith.constant 0 : index
      %c0_26 = arith.constant 0 : index
      %42 = vector.load %arg8[%c0_25, %c0_26] : memref<16x32xf32, #tpu.memory_space<vmem>>, vector<16x32xf32>
      tpu.vector_store %arg8[%c0_25, %c0_26], %41 {strides = array<i32>} : memref<16x32xf32, #tpu.memory_space<vmem>>, vector<16x32xf32>,
    } else {
    }
    return
  }
  func.func @transform_0(%arg0: i32, %arg1: i32) -> (i32, i32) {
    %c0_i32 = arith.constant 0 : i32
    return %arg0, %arg1 : i32, i32
  }
  func.func @transform_1(%arg0: i32, %arg1: i32) -> (i32, i32) {
    %c0_i32 = arith.constant 0 : i32
    %c0_i32_0 = arith.constant 0 : i32
    return %arg1, %c0_i32 : i32, i32
  }
  func.func @transform_2(%arg0: i32, %arg1: i32) -> (i32, i32) {
    %c0_i32 = arith.constant 0 : i32
    %c0_i32_0 = arith.constant 0 : i32
    %c0_i32_1 = arith.constant 0 : i32
    return %c0_i32, %c0_i32_0 : i32, i32
  }
  func.func @transform_3(%arg0: i32, %arg1: i32) -> (i32, i32) {
    %c0_i32 = arith.constant 0 : i32
    %c0_i32_0 = arith.constant 0 : i32
    return %arg0, %c0_i32 : i32, i32
  }
  func.func @transform_4(%arg0: i32, %arg1: i32) -> (i32, i32) {
    %c0_i32 = arith.constant 0 : i32
    %c0_i32_0 = arith.constant 0 : i32
    %c0_i32_1 = arith.constant 0 : i32
    return %c0_i32, %c0_i32_0 : i32, i32
  }
  func.func @transform_5(%arg0: i32, %arg1: i32) -> (i32, i32) {
    %c0_i32 = arith.constant 0 : i32
    %c0_i32_0 = arith.constant 0 : i32
    %c0_i32_1 = arith.constant 0 : i32
    return %c0_i32, %c0_i32_0 : i32, i32
  }
  func.func @transform_6(%arg0: i32, %arg1: i32) -> (i32, i32) {
    %c0_i32 = arith.constant 0 : i32
    %c0_i32_0 = arith.constant 0 : i32
    return %arg0, %c0_i32 : i32, i32
  }
}

module attributes {stable_mosaic.version = 11 : i64} {
  func.func @_matmul_kernel(%arg0: i32, %arg1: i32, %arg2: i32, %arg3: memref<16x32xf32, #tpu.memory_space<vmem>>, %arg4: memref<32x64xf32, #tpu.memory_space<vmem>>, %arg5: memref<16x64xf32, #tpu.memory_space<vmem>>, %arg6: memref<16x64xf32, #tpu.memory_space<vmem>>) attributes {dimension_semantics = [#tpu.dimension_semantics<parallel>, #tpu.dimension_semantics<parallel>, #tpu.dimension_semantics<arbitrary>], iteration_bounds = array<i64: 1, 1, 1>, scalar_prefetch = 0 : i64, scratch_operands = 1 : i64, tpu.core_type = #tpu.core_type<tc>, window_params = [{transform_indices = @transform_0, window_bounds = array<i64: 16, 32>}, {transform_indices = @transform_1, window_bounds = array<i64: 32, 64>}, {transform_indices = @transform_2, window_bounds = array<i64: 16, 64>}]} {
    %c0_i32 = arith.constant 0 : i32
    %0 = arith.cmpi eq, %arg2, %c0_i32 : i32
    %1 = arith.extui %0 : i1 to i32
    %c0_i32_0 = arith.constant 0 : i32
    %2 = arith.cmpi ne, %1, %c0_i32_0 : i32
    scf.if %2 {
      %cst_10 = arith.constant 0.000000e+00 : f32
      %12 = vector.broadcast %cst_10 : f32 to vector<16x64xf32>
      %c0_11 = arith.constant 0 : index
      %c0_12 = arith.constant 0 : index
      %13 = vector.load %arg6[%c0_11, %c0_12] : memref<16x64xf32, #tpu.memory_space<vmem>>, vector<16x64xf32>
      tpu.vector_store %arg6[%c0_11, %c0_12], %12 {strides = array<i32>} : memref<16x64xf32, #tpu.memory_space<vmem>>, vector<16x64xf32>,
    } else {
    }
    %c0 = arith.constant 0 : index
    %c0_1 = arith.constant 0 : index
    %3 = vector.load %arg6[%c0, %c0_1] : memref<16x64xf32, #tpu.memory_space<vmem>>, vector<16x64xf32>
    %c0_2 = arith.constant 0 : index
    %c0_3 = arith.constant 0 : index
    %4 = vector.load %arg3[%c0_2, %c0_3] : memref<16x32xf32, #tpu.memory_space<vmem>>, vector<16x32xf32>
    %c0_4 = arith.constant 0 : index
    %c0_5 = arith.constant 0 : index
    %5 = vector.load %arg4[%c0_4, %c0_5] : memref<32x64xf32, #tpu.memory_space<vmem>>, vector<32x64xf32>
    %cst = arith.constant dense<0.000000e+00> : vector<16x64xf32>
    %6 = tpu.matmul %4, %5, %cst {dimension_numbers = #tpu.dot_dimension_numbers<[1], [0], [0], [1], [0, 0, 1, 1], [], []>} : vector<16x32xf32>, vector<32x64xf32>, vector<16x64xf32> -> vector<16x64xf32>
    %7 = arith.addf %3, %6 : vector<16x64xf32>
    %c0_6 = arith.constant 0 : index
    %c0_7 = arith.constant 0 : index
    %8 = vector.load %arg6[%c0_6, %c0_7] : memref<16x64xf32, #tpu.memory_space<vmem>>, vector<16x64xf32>
    tpu.vector_store %arg6[%c0_6, %c0_7], %7 {strides = array<i32>} : memref<16x64xf32, #tpu.memory_space<vmem>>, vector<16x64xf32>,
    %c0_i32_8 = arith.constant 0 : i32
    %9 = arith.cmpi eq, %arg2, %c0_i32_8 : i32
    %10 = arith.extui %9 : i1 to i32
    %c0_i32_9 = arith.constant 0 : i32
    %11 = arith.cmpi ne, %10, %c0_i32_9 : i32
    scf.if %11 {
      %c0_10 = arith.constant 0 : index
      %c0_11 = arith.constant 0 : index
      %12 = vector.load %arg6[%c0_10, %c0_11] : memref<16x64xf32, #tpu.memory_space<vmem>>, vector<16x64xf32>
      %c0_12 = arith.constant 0 : index
      %c0_13 = arith.constant 0 : index
      %13 = vector.load %arg5[%c0_12, %c0_13] : memref<16x64xf32, #tpu.memory_space<vmem>>, vector<16x64xf32>
      tpu.vector_store %arg5[%c0_12, %c0_13], %12 {strides = array<i32>} : memref<16x64xf32, #tpu.memory_space<vmem>>, vector<16x64xf32>,
    } else {
    }
    return
  }
  func.func @transform_0(%arg0: i32, %arg1: i32, %arg2: i32) -> (i32, i32) {
    %c0_i32 = arith.constant 0 : i32
    return %arg0, %arg2 : i32, i32
  }
  func.func @transform_1(%arg0: i32, %arg1: i32, %arg2: i32) -> (i32, i32) {
    %c0_i32 = arith.constant 0 : i32
    return %arg2, %arg1 : i32, i32
  }
  func.func @transform_2(%arg0: i32, %arg1: i32, %arg2: i32) -> (i32, i32) {
    %c0_i32 = arith.constant 0 : i32
    return %arg0, %arg1 : i32, i32
  }
}

</mosaic_0001>

<llo_original>
// kernel: decoder_forward.19
$region0: #{decoder_forward.19}
  #allocation0 [shape = 'u32[]', space=smem, size = 0x4, offset = 0x4, fixed_abs, tag = 'smem constant byte address 0x4 - core index']
  #allocation1 [shape = 'u32[144,128]{1,0:T(1,128)}', space=vmem, size = 0x12000, scoped, tag = 'internal scratch']
  #allocation2 [shape = 'f32[16,96]{1,0:T(8,128)}', space=vmem, size = 0x2000, scoped, tag = 'scratch operand']
  %s0 = inlined_call_operand.vmem [shape: f32[16,32], index: 0, kind: input, shape index: {}]
  %s1 = inlined_call_operand.vmem [shape: f32[32,96], index: 1, kind: input, shape index: {}]
  %s2 = inlined_call_operand.vmem [shape: f32[16,96], index: 2, kind: output, shape index: {}]
  %s3 = sld [smem:[#allocation0]]
  $region26: #{decoder_forward.19} parent=0
    _
  %s5 = ssub.s32 1, %s3
  %s6 = scalar_select 0, %s5, %s3
  // Predicated region
  $region2: #{decoder_forward.19} parent=0 // pred_check
    _
  $region3: #{decoder_forward.19} parent=0 // pred_check_branch
    %8 = sbr.rel (0) target = $region5
  $region4: #{decoder_forward.19} parent=0 // pred_region
    _
  $region5: #{decoder_forward.19} parent=0 // pred_fallthru
    _
  // Predicated region
  $region6: #{decoder_forward.19} parent=0 // pred_check
    _
  $region7: #{decoder_forward.19} parent=0 // pred_check_branch
    %10 = sbr.rel (0) target = $region9
  $region8: #{decoder_forward.19} parent=0 // pred_region
    _
  $region9: #{decoder_forward.19} parent=0 // pred_fallthru
    _
  %p11 = scmp.eq.s32.totalorder 0, 0
  // Predicated region
  $region10: #{decoder_forward.19} parent=0 // pred_check
    %p12 = pneg %p11
  $region11: #{decoder_forward.19} parent=0 // pred_check_branch
    %14 = sbr.rel (%p12) target = $region13
  $region12: #{decoder_forward.19} parent=0 // pred_region
    %vm15 = vcmask 785408
    %16 = vst.msk [vmem:[#allocation2] sm:$0xff] %vm15, 0.0
    %17 = vst.msk [vmem:[#allocation2 + $0x8] sm:$0xff] %vm15, 0.0
  $region13: #{decoder_forward.19} parent=0 // pred_fallthru
    _
  %v18 = vld [vmem:[#allocation2] sm:$0xff]
  %v19 = vld [vmem:[#allocation2 + $0x8] sm:$0xff]
  %v20 = vld [vmem:[%s0] sm:$0xff]
  %v21 = vld [vmem:[%s0 + $0x8] sm:$0xff]
  %v22 = vld [vmem:[%s1] sm:$0xff]
  %v23 = vld [vmem:[%s1 + $0x8] sm:$0xff]
  %v24 = vld [vmem:[%s1 + $0x10] sm:$0xff]
  %v25 = vld [vmem:[%s1 + $0x18] sm:$0xff]
  %vm26 = vcmask 261120
  %v28 = vsel %vm26, %v20, 0
  %v31 = vsel %vm26, %v21, 0
  %33 = vmatprep.subr.mxu0 0.0
  %34 = vmatpush1.msra.mxu0 0.0
  %35 = vmatprep.subr.mxu0 0.0
  %36 = vmatpush1.msra.mxu0 0.0
  %37 = vmatprep.subr.mxu0 0.0
  %38 = vmatpush1.msra.mxu0 0.0
  %39 = vmatprep.subr.mxu0 0.0
  %40 = vmatpush1.msra.mxu0 0.0
  %41 = vmatprep.subr.mxu0 0.0
  %42 = vmatpush1.msra.mxu0 0.0
  %43 = vmatprep.subr.mxu0 0.0
  %44 = vmatpush1.msra.mxu0 0.0
  %45 = vmatprep.subr.mxu0 0.0
  %46 = vmatpush1.msra.mxu0 0.0
  %47 = vmatprep.subr.mxu0 0.0
  %48 = vmatpush1.msra.mxu0 0.0
  %49 = vmatprep.subr.mxu0 0.0
  %50 = vmatpush1.msra.mxu0 0.0
  %51 = vmatprep.subr.mxu0 0.0
  %52 = vmatpush1.msra.mxu0 0.0
  %53 = vmatprep.subr.mxu0 0.0
  %54 = vmatpush1.msra.mxu0 0.0
  %55 = vmatprep.subr.mxu0 0.0
  %56 = vmatpush1.msra.mxu0 0.0
  %57 = vmatprep.subr.mxu0 0.0
  %58 = vmatpush1.msra.mxu0 %v25
  %59 = vmatprep.subr.mxu0 0.0
  %60 = vmatpush1.msra.mxu0 %v24
  %61 = vmatprep.subr.mxu0 0.0
  %62 = vmatpush1.msra.mxu0 %v23
  %63 = vmatprep.subr.mxu0 0.0
  %64 = vmatpush1.msra.mxu0 %v22
  %65 = vmatprep.subr.mxu0 0.0
  %66 = vmatpush2.msra.mxu0 0.0
  %67 = vmatprep.subr.mxu0 0.0
  %68 = vmatpush2.msra.mxu0 0.0
  %69 = vmatprep.subr.mxu0 0.0
  %70 = vmatpush2.msra.mxu0 0.0
  %71 = vmatprep.subr.mxu0 0.0
  %72 = vmatpush2.msra.mxu0 0.0
  %73 = vmatprep.subr.mxu0 0.0
  %74 = vmatpush2.msra.mxu0 0.0
  %75 = vmatprep.subr.mxu0 0.0
  %76 = vmatpush2.msra.mxu0 0.0
  %77 = vmatprep.subr.mxu0 0.0
  %78 = vmatpush2.msra.mxu0 0.0
  %79 = vmatprep.subr.mxu0 0.0
  %80 = vmatpush2.msra.mxu0 0.0
  %81 = vmatprep.subr.mxu0 0.0
  %82 = vmatpush2.msra.mxu0 0.0
  %83 = vmatprep.subr.mxu0 0.0
  %84 = vmatpush2.msra.mxu0 0.0
  %85 = vmatprep.subr.mxu0 0.0
  %86 = vmatpush2.msra.mxu0 0.0
  %87 = vmatprep.subr.mxu0 0.0
  %88 = vmatpush2.msra.mxu0 0.0
  %89 = vmatprep.subr.mxu0 0.0
  %90 = vmatpush2.msra.mxu0 0.0
  %91 = vmatprep.subr.mxu0 0.0
  %92 = vmatpush2.msra.mxu0 0.0
  %93 = vmatprep.subr.mxu0 0.0
  %94 = vmatpush2.msra.mxu0 0.0
  %95 = vmatprep.subr.mxu0 0.0
  %96 = vmatpush2.msra.mxu0 0.0
  %97 = vmatprep.mubr.f32.mxu0 0.0
  %98 = vmatmul.mubr.f32.gmra.mxu0 %v28
  %v99 = vpop.f32.mrf.mxu0
  %v100 = vadd.f32 0.0, %v99
  %v101 = vpop.f32.mrf.mxu0
  %102 = vmatprep.mubr.f32.mxu0 0.0
  %103 = vmatmul.mubr.f32.gmra.mxu0 %v31
  %v104 = vpop.f32.mrf.mxu0
  %v105 = vadd.f32 0.0, %v104
  %v106 = vpop.f32.mrf.mxu0
  %107 = vdwg.mxu0
  %v108 = vadd.f32 %v18, %v100
  %v109 = vadd.f32 %v19, %v105
  %vm110 = vcmask 785408
  %111 = vst.msk [vmem:[#allocation2] sm:$0xff] %vm110, %v108
  %112 = vst.msk [vmem:[#allocation2 + $0x8] sm:$0xff] %vm110, %v109
  // Predicated region
  $region14: #{decoder_forward.19} parent=0 // pred_check
    %p113 = pneg %p11
  $region15: #{decoder_forward.19} parent=0 // pred_check_branch
    %115 = sbr.rel (%p113) target = $region17
  $region16: #{decoder_forward.19} parent=0 // pred_region
    %v116 = vld [vmem:[#allocation2] sm:$0xff]
    %v117 = vld [vmem:[#allocation2 + $0x8] sm:$0xff]
    %118 = vst.msk [vmem:[%s2] sm:$0xff] %vm110, %v116
    %119 = vst.msk [vmem:[%s2 + $0x8] sm:$0xff] %vm110, %v117
  $region17: #{decoder_forward.19} parent=0 // pred_fallthru
    _
  // Predicated region
  $region18: #{decoder_forward.19} parent=0 // pred_check
    _
  $region19: #{decoder_forward.19} parent=0 // pred_check_branch
    %121 = sbr.rel (0) target = $region21
  $region20: #{decoder_forward.19} parent=0 // pred_region
    _
  $region21: #{decoder_forward.19} parent=0 // pred_fallthru
    _
  // Predicated region
  $region22: #{decoder_forward.19} parent=0 // pred_check
    _
  $region23: #{decoder_forward.19} parent=0 // pred_check_branch
    %123 = sbr.rel (0) target = $region25
  $region24: #{decoder_forward.19} parent=0 // pred_region
    _
  $region25: #{decoder_forward.19} parent=0 // pred_fallthru
    _

// kernel: decoder_forward.22
$region0: #{decoder_forward.22}
  #allocation0 [shape = 'u32[]', space=smem, size = 0x4, offset = 0x4, fixed_abs, tag = 'smem constant byte address 0x4 - core index']
  #allocation1 [shape = 'u32[144,128]{1,0:T(1,128)}', space=vmem, size = 0x12000, scoped, tag = 'internal scratch']
  #allocation2 [shape = 'f32[16,32]{1,0:T(8,128)}', space=vmem, size = 0x2000, scoped, tag = 'scratch operand']
  %s0 = inlined_call_operand.vmem [shape: f32[16,32], index: 0, kind: input, shape index: {}]
  %s1 = inlined_call_operand.vmem [shape: f32[32,32], index: 1, kind: input, shape index: {}]
  %s2 = inlined_call_operand.vmem [shape: f32[16,32], index: 2, kind: output, shape index: {}]
  %s3 = sld [smem:[#allocation0]]
  $region26: #{decoder_forward.22} parent=0
    _
  %s5 = ssub.s32 1, %s3
  %s6 = scalar_select 0, %s5, %s3
  // Predicated region
  $region2: #{decoder_forward.22} parent=0 // pred_check
    _
  $region3: #{decoder_forward.22} parent=0 // pred_check_branch
    %8 = sbr.rel (0) target = $region5
  $region4: #{decoder_forward.22} parent=0 // pred_region
    _
  $region5: #{decoder_forward.22} parent=0 // pred_fallthru
    _
  // Predicated region
  $region6: #{decoder_forward.22} parent=0 // pred_check
    _
  $region7: #{decoder_forward.22} parent=0 // pred_check_branch
    %10 = sbr.rel (0) target = $region9
  $region8: #{decoder_forward.22} parent=0 // pred_region
    _
  $region9: #{decoder_forward.22} parent=0 // pred_fallthru
    _
  %p11 = scmp.eq.s32.totalorder 0, 0
  // Predicated region
  $region10: #{decoder_forward.22} parent=0 // pred_check
    %p12 = pneg %p11
  $region11: #{decoder_forward.22} parent=0 // pred_check_branch
    %14 = sbr.rel (%p12) target = $region13
  $region12: #{decoder_forward.22} parent=0 // pred_region
    %vm15 = vcmask 261120
    %16 = vst.msk [vmem:[#allocation2] sm:$0xff] %vm15, 0.0
    %17 = vst.msk [vmem:[#allocation2 + $0x8] sm:$0xff] %vm15, 0.0
  $region13: #{decoder_forward.22} parent=0 // pred_fallthru
    _
  %v18 = vld [vmem:[#allocation2] sm:$0xff]
  %v19 = vld [vmem:[#allocation2 + $0x8] sm:$0xff]
  %v20 = vld [vmem:[%s0] sm:$0xff]
  %v21 = vld [vmem:[%s0 + $0x8] sm:$0xff]
  %v22 = vld [vmem:[%s1] sm:$0xff]
  %v23 = vld [vmem:[%s1 + $0x8] sm:$0xff]
  %v24 = vld [vmem:[%s1 + $0x10] sm:$0xff]
  %v25 = vld [vmem:[%s1 + $0x18] sm:$0xff]
  %vm26 = vcmask 261120
  %v28 = vsel %vm26, %v20, 0
  %v31 = vsel %vm26, %v21, 0
  %33 = vmatprep.subr.mxu0 0.0
  %34 = vmatpush1.msra.mxu0 0.0
  %35 = vmatprep.subr.mxu0 0.0
  %36 = vmatpush1.msra.mxu0 0.0
  %37 = vmatprep.subr.mxu0 0.0
  %38 = vmatpush1.msra.mxu0 0.0
  %39 = vmatprep.subr.mxu0 0.0
  %40 = vmatpush1.msra.mxu0 0.0
  %41 = vmatprep.subr.mxu0 0.0
  %42 = vmatpush1.msra.mxu0 0.0
  %43 = vmatprep.subr.mxu0 0.0
  %44 = vmatpush1.msra.mxu0 0.0
  %45 = vmatprep.subr.mxu0 0.0
  %46 = vmatpush1.msra.mxu0 0.0
  %47 = vmatprep.subr.mxu0 0.0
  %48 = vmatpush1.msra.mxu0 0.0
  %49 = vmatprep.subr.mxu0 0.0
  %50 = vmatpush1.msra.mxu0 0.0
  %51 = vmatprep.subr.mxu0 0.0
  %52 = vmatpush1.msra.mxu0 0.0
  %53 = vmatprep.subr.mxu0 0.0
  %54 = vmatpush1.msra.mxu0 0.0
  %55 = vmatprep.subr.mxu0 0.0
  %56 = vmatpush1.msra.mxu0 0.0
  %57 = vmatprep.subr.mxu0 0.0
  %58 = vmatpush1.msra.mxu0 %v25
  %59 = vmatprep.subr.mxu0 0.0
  %60 = vmatpush1.msra.mxu0 %v24
  %61 = vmatprep.subr.mxu0 0.0
  %62 = vmatpush1.msra.mxu0 %v23
  %63 = vmatprep.subr.mxu0 0.0
  %64 = vmatpush1.msra.mxu0 %v22
  %65 = vmatprep.subr.mxu0 0.0
  %66 = vmatpush2.msra.mxu0 0.0
  %67 = vmatprep.subr.mxu0 0.0
  %68 = vmatpush2.msra.mxu0 0.0
  %69 = vmatprep.subr.mxu0 0.0
  %70 = vmatpush2.msra.mxu0 0.0
  %71 = vmatprep.subr.mxu0 0.0
  %72 = vmatpush2.msra.mxu0 0.0
  %73 = vmatprep.subr.mxu0 0.0
  %74 = vmatpush2.msra.mxu0 0.0
  %75 = vmatprep.subr.mxu0 0.0
  %76 = vmatpush2.msra.mxu0 0.0
  %77 = vmatprep.subr.mxu0 0.0
  %78 = vmatpush2.msra.mxu0 0.0
  %79 = vmatprep.subr.mxu0 0.0
  %80 = vmatpush2.msra.mxu0 0.0
  %81 = vmatprep.subr.mxu0 0.0
  %82 = vmatpush2.msra.mxu0 0.0
  %83 = vmatprep.subr.mxu0 0.0
  %84 = vmatpush2.msra.mxu0 0.0
  %85 = vmatprep.subr.mxu0 0.0
  %86 = vmatpush2.msra.mxu0 0.0
  %87 = vmatprep.subr.mxu0 0.0
  %88 = vmatpush2.msra.mxu0 0.0
  %89 = vmatprep.subr.mxu0 0.0
  %90 = vmatpush2.msra.mxu0 0.0
  %91 = vmatprep.subr.mxu0 0.0
  %92 = vmatpush2.msra.mxu0 0.0
  %93 = vmatprep.subr.mxu0 0.0
  %94 = vmatpush2.msra.mxu0 0.0
  %95 = vmatprep.subr.mxu0 0.0
  %96 = vmatpush2.msra.mxu0 0.0
  %97 = vmatprep.mubr.f32.mxu0 0.0
  %98 = vmatmul.mubr.f32.gmra.mxu0 %v28
  %v99 = vpop.f32.mrf.mxu0
  %v100 = vadd.f32 0.0, %v99
  %v101 = vpop.f32.mrf.mxu0
  %102 = vmatprep.mubr.f32.mxu0 0.0
  %103 = vmatmul.mubr.f32.gmra.mxu0 %v31
  %v104 = vpop.f32.mrf.mxu0
  %v105 = vadd.f32 0.0, %v104
  %v106 = vpop.f32.mrf.mxu0
  %107 = vdwg.mxu0
  %v108 = vadd.f32 %v18, %v100
  %v109 = vadd.f32 %v19, %v105
  %110 = vst.msk [vmem:[#allocation2] sm:$0xff] %vm26, %v108
  %111 = vst.msk [vmem:[#allocation2 + $0x8] sm:$0xff] %vm26, %v109
  // Predicated region
  $region14: #{decoder_forward.22} parent=0 // pred_check
    %p112 = pneg %p11
  $region15: #{decoder_forward.22} parent=0 // pred_check_branch
    %114 = sbr.rel (%p112) target = $region17
  $region16: #{decoder_forward.22} parent=0 // pred_region
    %v115 = vld [vmem:[#allocation2] sm:$0xff]
    %v116 = vld [vmem:[#allocation2 + $0x8] sm:$0xff]
    %117 = vst.msk [vmem:[%s2] sm:$0xff] %vm26, %v115
    %118 = vst.msk [vmem:[%s2 + $0x8] sm:$0xff] %vm26, %v116
  $region17: #{decoder_forward.22} parent=0 // pred_fallthru
    _
  // Predicated region
  $region18: #{decoder_forward.22} parent=0 // pred_check
    _
  $region19: #{decoder_forward.22} parent=0 // pred_check_branch
    %120 = sbr.rel (0) target = $region21
  $region20: #{decoder_forward.22} parent=0 // pred_region
    _
  $region21: #{decoder_forward.22} parent=0 // pred_fallthru
    _
  // Predicated region
  $region22: #{decoder_forward.22} parent=0 // pred_check
    _
  $region23: #{decoder_forward.22} parent=0 // pred_check_branch
    %122 = sbr.rel (0) target = $region25
  $region24: #{decoder_forward.22} parent=0 // pred_region
    _
  $region25: #{decoder_forward.22} parent=0 // pred_fallthru
    _

// kernel: decoder_forward.21
$region0: #{decoder_forward.21}
  #allocation0 [shape = 'u32[]', space=smem, size = 0x4, offset = 0x4, fixed_abs, tag = 'smem constant byte address 0x4 - core index']
  #allocation1 [shape = 'u32[144,128]{1,0:T(1,128)}', space=vmem, size = 0x12000, scoped, tag = 'internal scratch']
  #allocation2 [shape = 'f32[16,32]{1,0:T(8,128)}', space=vmem, size = 0x2000, scoped, tag = 'scratch operand']
  %s0 = inlined_call_operand.vmem [shape: f32[16,32], index: 0, kind: input, shape index: {}]
  %s1 = inlined_call_operand.vmem [shape: f32[32,32], index: 1, kind: input, shape index: {}]
  %s2 = inlined_call_operand.vmem [shape: f32[16,32], index: 2, kind: input, shape index: {}]
  %s3 = inlined_call_operand.vmem [shape: f32[1,32], index: 3, kind: input, shape index: {}]
  %s4 = inlined_call_operand.vmem [shape: f32[1,32], index: 4, kind: input, shape index: {}]
  %s5 = inlined_call_operand.vmem [shape: f32[16,32], index: 5, kind: output, shape index: {}]
  %s6 = sld [smem:[#allocation0]]
  $region38: #{decoder_forward.21} parent=0
    _
  %s8 = ssub.s32 1, %s6
  %s9 = scalar_select 0, %s8, %s6
  // Predicated region
  $region2: #{decoder_forward.21} parent=0 // pred_check
    _
  $region3: #{decoder_forward.21} parent=0 // pred_check_branch
    %11 = sbr.rel (0) target = $region5
  $region4: #{decoder_forward.21} parent=0 // pred_region
    _
  $region5: #{decoder_forward.21} parent=0 // pred_fallthru
    _
  // Predicated region
  $region6: #{decoder_forward.21} parent=0 // pred_check
    _
  $region7: #{decoder_forward.21} parent=0 // pred_check_branch
    %13 = sbr.rel (0) target = $region9
  $region8: #{decoder_forward.21} parent=0 // pred_region
    _
  $region9: #{decoder_forward.21} parent=0 // pred_fallthru
    _
  // Predicated region
  $region10: #{decoder_forward.21} parent=0 // pred_check
    _
  $region11: #{decoder_forward.21} parent=0 // pred_check_branch
    %15 = sbr.rel (0) target = $region13
  $region12: #{decoder_forward.21} parent=0 // pred_region
    _
  $region13: #{decoder_forward.21} parent=0 // pred_fallthru
    _
  // Predicated region
  $region14: #{decoder_forward.21} parent=0 // pred_check
    _
  $region15: #{decoder_forward.21} parent=0 // pred_check_branch
    %17 = sbr.rel (0) target = $region17
  $region16: #{decoder_forward.21} parent=0 // pred_region
    _
  $region17: #{decoder_forward.21} parent=0 // pred_fallthru
    _
  // Predicated region
  $region18: #{decoder_forward.21} parent=0 // pred_check
    _
  $region19: #{decoder_forward.21} parent=0 // pred_check_branch
    %19 = sbr.rel (0) target = $region21
  $region20: #{decoder_forward.21} parent=0 // pred_region
    _
  $region21: #{decoder_forward.21} parent=0 // pred_fallthru
    _
  %p20 = scmp.eq.s32.totalorder 0, 0
  // Predicated region
  $region22: #{decoder_forward.21} parent=0 // pred_check
    %p21 = pneg %p20
  $region23: #{decoder_forward.21} parent=0 // pred_check_branch
    %23 = sbr.rel (%p21) target = $region25
  $region24: #{decoder_forward.21} parent=0 // pred_region
    %vm24 = vcmask 261120
    %25 = vst.msk [vmem:[#allocation2] sm:$0xff] %vm24, 0.0
    %26 = vst.msk [vmem:[#allocation2 + $0x8] sm:$0xff] %vm24, 0.0
  $region25: #{decoder_forward.21} parent=0 // pred_fallthru
    _
  %v27 = vld [vmem:[#allocation2] sm:$0xff]
  %v28 = vld [vmem:[#allocation2 + $0x8] sm:$0xff]
  %v29 = vld [vmem:[%s0] sm:$0xff]
  %v30 = vld [vmem:[%s0 + $0x8] sm:$0xff]
  %v31 = vld [vmem:[%s1] sm:$0xff]
  %v32 = vld [vmem:[%s1 + $0x8] sm:$0xff]
  %v33 = vld [vmem:[%s1 + $0x10] sm:$0xff]
  %v34 = vld [vmem:[%s1 + $0x18] sm:$0xff]
  %vm35 = vcmask 261120
  %v37 = vsel %vm35, %v29, 0
  %v40 = vsel %vm35, %v30, 0
  %42 = vmatprep.subr.mxu0 0.0
  %43 = vmatpush1.msra.mxu0 0.0
  %44 = vmatprep.subr.mxu0 0.0
  %45 = vmatpush1.msra.mxu0 0.0
  %46 = vmatprep.subr.mxu0 0.0
  %47 = vmatpush1.msra.mxu0 0.0
  %48 = vmatprep.subr.mxu0 0.0
  %49 = vmatpush1.msra.mxu0 0.0
  %50 = vmatprep.subr.mxu0 0.0
  %51 = vmatpush1.msra.mxu0 0.0
  %52 = vmatprep.subr.mxu0 0.0
  %53 = vmatpush1.msra.mxu0 0.0
  %54 = vmatprep.subr.mxu0 0.0
  %55 = vmatpush1.msra.mxu0 0.0
  %56 = vmatprep.subr.mxu0 0.0
  %57 = vmatpush1.msra.mxu0 0.0
  %58 = vmatprep.subr.mxu0 0.0
  %59 = vmatpush1.msra.mxu0 0.0
  %60 = vmatprep.subr.mxu0 0.0
  %61 = vmatpush1.msra.mxu0 0.0
  %62 = vmatprep.subr.mxu0 0.0
  %63 = vmatpush1.msra.mxu0 0.0
  %64 = vmatprep.subr.mxu0 0.0
  %65 = vmatpush1.msra.mxu0 0.0
  %66 = vmatprep.subr.mxu0 0.0
  %67 = vmatpush1.msra.mxu0 %v34
  %68 = vmatprep.subr.mxu0 0.0
  %69 = vmatpush1.msra.mxu0 %v33
  %70 = vmatprep.subr.mxu0 0.0
  %71 = vmatpush1.msra.mxu0 %v32
  %72 = vmatprep.subr.mxu0 0.0
  %73 = vmatpush1.msra.mxu0 %v31
  %74 = vmatprep.subr.mxu0 0.0
  %75 = vmatpush2.msra.mxu0 0.0
  %76 = vmatprep.subr.mxu0 0.0
  %77 = vmatpush2.msra.mxu0 0.0
  %78 = vmatprep.subr.mxu0 0.0
  %79 = vmatpush2.msra.mxu0 0.0
  %80 = vmatprep.subr.mxu0 0.0
  %81 = vmatpush2.msra.mxu0 0.0
  %82 = vmatprep.subr.mxu0 0.0
  %83 = vmatpush2.msra.mxu0 0.0
  %84 = vmatprep.subr.mxu0 0.0
  %85 = vmatpush2.msra.mxu0 0.0
  %86 = vmatprep.subr.mxu0 0.0
  %87 = vmatpush2.msra.mxu0 0.0
  %88 = vmatprep.subr.mxu0 0.0
  %89 = vmatpush2.msra.mxu0 0.0
  %90 = vmatprep.subr.mxu0 0.0
  %91 = vmatpush2.msra.mxu0 0.0
  %92 = vmatprep.subr.mxu0 0.0
  %93 = vmatpush2.msra.mxu0 0.0
  %94 = vmatprep.subr.mxu0 0.0
  %95 = vmatpush2.msra.mxu0 0.0
  %96 = vmatprep.subr.mxu0 0.0
  %97 = vmatpush2.msra.mxu0 0.0
  %98 = vmatprep.subr.mxu0 0.0
  %99 = vmatpush2.msra.mxu0 0.0
  %100 = vmatprep.subr.mxu0 0.0
  %101 = vmatpush2.msra.mxu0 0.0
  %102 = vmatprep.subr.mxu0 0.0
  %103 = vmatpush2.msra.mxu0 0.0
  %104 = vmatprep.subr.mxu0 0.0
  %105 = vmatpush2.msra.mxu0 0.0
  %106 = vmatprep.mubr.f32.mxu0 0.0
  %107 = vmatmul.mubr.f32.gmra.mxu0 %v37
  %v108 = vpop.f32.mrf.mxu0
  %v109 = vadd.f32 0.0, %v108
  %v110 = vpop.f32.mrf.mxu0
  %111 = vmatprep.mubr.f32.mxu0 0.0
  %112 = vmatmul.mubr.f32.gmra.mxu0 %v40
  %v113 = vpop.f32.mrf.mxu0
  %v114 = vadd.f32 0.0, %v113
  %v115 = vpop.f32.mrf.mxu0
  %116 = vdwg.mxu0
  %v117 = vadd.f32 %v27, %v109
  %v118 = vadd.f32 %v28, %v114
  %119 = vst.msk [vmem:[#allocation2] sm:$0xff] %vm35, %v117
  %120 = vst.msk [vmem:[#allocation2 + $0x8] sm:$0xff] %vm35, %v118
  // Predicated region
  $region26: #{decoder_forward.21} parent=0 // pred_check
    %p121 = pneg %p20
  $region27: #{decoder_forward.21} parent=0 // pred_check_branch
    %123 = sbr.rel (%p121) target = $region29
  $region28: #{decoder_forward.21} parent=0 // pred_region
    %v124 = vld [vmem:[#allocation2] sm:$0xff]
    %v125 = vld [vmem:[#allocation2 + $0x8] sm:$0xff]
    %v126 = vld [vmem:[%s2] sm:$0xff]
    %v127 = vld [vmem:[%s2 + $0x8] sm:$0xff]
    %v128 = vadd.f32 %v124, %v126
    %v129 = vadd.f32 %v125, %v127
    %v130 = vsel %vm35, %v128, 0.0
    %131 = vadd.xlane.f32.xlu0 %v130
    %v132 = vpop.xlane.xlu0 %131
    %v133 = vsel %vm35, %v129, 0.0
    %134 = vadd.xlane.f32.xlu0 %v133
    %v135 = vpop.xlane.xlu0 %134
    %v136 = vrcp.pop 32.0
    %v137 = vmul.f32 %v132, %v136
    %v138 = vmul.f32 %v135, %v136
    %v139 = vsub.f32 %v128, %v137
    %v140 = vsub.f32 %v129, %v138
    %v141 = vmul.f32 %v139, %v139
    %v142 = vmul.f32 %v140, %v140
    %v143 = vsel %vm35, %v141, 0.0
    %144 = vadd.xlane.f32.xlu0 %v143
    %v145 = vpop.xlane.xlu0 %144
    %v146 = vsel %vm35, %v142, 0.0
    %147 = vadd.xlane.f32.xlu0 %v146
    %v148 = vpop.xlane.xlu0 %147
    %v149 = vmul.f32 %v145, %v136
    %v150 = vmul.f32 %v148, %v136
    %v151 = vadd.f32 %v149, 1e-08
    %v152 = vadd.f32 %v150, 1e-08
    %v153 = vrsqrt.pop %v151
    %v154 = vrsqrt.pop %v152
    %v155 = vmul.f32 %v139, %v153
    %v156 = vmul.f32 %v140, %v154
    %v157 = vld [vmem:[%s3] sm:$0x1]
    %v159 = vlaneseq
    %v160 = vshrl.u32 %v159, 7
    %v161 = vsub.s32 0, %v160
    %v162 = vrot.slane %v157, %v161
    %v164 = vmul.f32 %v155, %v162
    %v165 = vmul.f32 %v156, %v162
    %v166 = vld [vmem:[%s4] sm:$0x1]
    %v168 = vlaneseq
    %v169 = vshrl.u32 %v168, 7
    %v170 = vsub.s32 0, %v169
    %v171 = vrot.slane %v166, %v170
    %v173 = vadd.f32 %v164, %v171
    %v174 = vadd.f32 %v165, %v171
    %175 = vst.msk [vmem:[%s5] sm:$0xff] %vm35, %v173
    %176 = vst.msk [vmem:[%s5 + $0x8] sm:$0xff] %vm35, %v174
  $region29: #{decoder_forward.21} parent=0 // pred_fallthru
    _
  // Predicated region
  $region30: #{decoder_forward.21} parent=0 // pred_check
    _
  $region31: #{decoder_forward.21} parent=0 // pred_check_branch
    %178 = sbr.rel (0) target = $region33
  $region32: #{decoder_forward.21} parent=0 // pred_region
    _
  $region33: #{decoder_forward.21} parent=0 // pred_fallthru
    _
  // Predicated region
  $region34: #{decoder_forward.21} parent=0 // pred_check
    _
  $region35: #{decoder_forward.21} parent=0 // pred_check_branch
    %180 = sbr.rel (0) target = $region37
  $region36: #{decoder_forward.21} parent=0 // pred_region
    _
  $region37: #{decoder_forward.21} parent=0 // pred_fallthru
    _

// kernel: decoder_forward.20
$region0: #{decoder_forward.20}
  #allocation0 [shape = 'u32[]', space=smem, size = 0x4, offset = 0x4, fixed_abs, tag = 'smem constant byte address 0x4 - core index']
  #allocation1 [shape = 'u32[144,128]{1,0:T(1,128)}', space=vmem, size = 0x12000, scoped, tag = 'internal scratch']
  #allocation2 [shape = 'f32[4,8,1]{2,1,0:T(8,128)}', space=vmem, size = 0x4000, scoped, tag = 'scratch operand']
  #allocation3 [shape = 'f32[4,8,1]{2,1,0:T(8,128)}', space=vmem, size = 0x4000, scoped, tag = 'scratch operand']
  #allocation4 [shape = 'f32[4,8,8]{2,1,0:T(8,128)}', space=vmem, size = 0x4000, scoped, tag = 'scratch operand']
  %s0 = inlined_call_operand.vmem [shape: f32[2,4,8,8], index: 0, kind: input, shape index: {}]
  %s1 = inlined_call_operand.vmem [shape: f32[2,4,8,8], index: 1, kind: input, shape index: {}]
  %s2 = inlined_call_operand.vmem [shape: f32[2,4,8,8], index: 2, kind: input, shape index: {}]
  %s3 = inlined_call_operand.vmem [shape: s32[2,8,8], index: 3, kind: input, shape index: {}]
  %s4 = inlined_call_operand.vmem [shape: f32[2,4,8,8], index: 4, kind: output, shape index: {}]
  %s5 = sld [smem:[#allocation0]]
  $region57: #{decoder_forward.20} parent=0
    _
  %s7 = ssub.s32 1, %s5
  %s8 = scalar_select 0, %s7, %s5
  loop: start=0, step=1, limit=4
  $region2: #{decoder_forward.20} parent=0 // loop_pre_header
    _
  $region3: #{decoder_forward.20} parent=0 // loop_header
    %s10 = sphi 0, %s14
    %p11 = scmp.ge.s32.totalorder %s10, 4
    %s17 = sphi 0, %s36
    %s18 = sphi 0, %s32
    %s19 = sphi 0, %s28
    %s20 = sphi 0, %s17
    %s21 = sphi 0, %s18
    %s22 = sphi 0, %s19
    %s23 = sphi 0, %s20
    %s24 = sphi 0, %s21
    %s25 = sphi 0, %s22
    %s41 = sphi 0, %s43
    %s44 = sphi 0, %s41
    %s45 = sphi 0, %s44
    %s61 = sphi 0, %s45
    %s69 = sphi 0, %s71
    %s72 = sphi 0, %s69
    %s73 = sphi 0, %s72
    %s89 = sphi 0, %s73
    %s97 = sphi 0, %s99
    %s100 = sphi 0, %s97
    %s101 = sphi 0, %s100
    %s117 = sphi 0, %s101
    %s127 = sphi 0, %s129
    %s130 = sphi 0, %s127
    %s131 = sphi 0, %s130
    %s147 = sphi 0, %s131
    %s155 = sphi 0, %s157
    %s158 = sphi 0, %s155
    %s159 = sphi 0, %s158
    %s175 = sphi 0, %s159
  $region4: #{decoder_forward.20} parent=0 // loop_header_branch
    %13 = sbr.rel (%p11) target = $region8
  $region5: #{decoder_forward.20} parent=0 // loop_body
    %s15 = ssub.s32 %s10, 1
    %s16 = ssub.s32 %s10, 2
    %s26 = sadd.s32 1, %s19
    %p27 = scmp.ge.s32.totalorder %s26, 1
    %s28 = scalar_select %p27, 0, %s26
    %s29 = sadd.s32 1, %s18
    %s30 = scalar_select %p27, %s29, %s18
    %p31 = scmp.ge.s32.totalorder %s30, 1
    %s32 = scalar_select %p31, 0, %s30
    %s33 = sadd.s32 1, %s17
    %s34 = scalar_select %p31, %s33, %s17
    %p35 = scmp.ge.s32.totalorder %s34, 2
    %s36 = scalar_select %p35, 0, %s34
    %s37 = ssub.s32 %s17, %s36
    %s38 = ssub.s32 %s18, %s32
    %s39 = sor.u32 %s37, %s38
    %p40 = scmp.eq.s32.totalorder %s39, 0
    %s42 = sadd.s32 %s41, 1
    %s43 = scalar_select %p40, %s41, %s42
    %p46 = pneg %p40
    %p47 = scmp.eq.s32.totalorder %s10, 1
    %p48 = por %p46, %p47
    %p49 = scmp.ne.s32.totalorder %s41, %s44
    %p50 = scmp.eq.s32.totalorder %s10, 0
    %p51 = por %p49, %p50
    %p52 = scmp.ne.s32.totalorder %s41, %s44
    %p53 = scmp.eq.s32.totalorder %s15, 1
    %p54 = por %p52, %p53
    %p55 = scmp.ne.s32.totalorder %s44, %s45
    %p56 = scmp.eq.s32.totalorder %s15, 0
    %p57 = por %p55, %p56
    %p58 = scmp.ne.s32.totalorder %s44, %s45
    %p59 = scmp.eq.s32.totalorder %s16, 1
    %p60 = por %p58, %p59
    %p62 = scmp.ne.s32.totalorder %s45, %s61
    %p63 = scmp.eq.s32.totalorder %s16, 0
    %p64 = por %p62, %p63
    %s65 = ssub.s32 %s17, %s36
    %s66 = ssub.s32 %s19, %s28
    %s67 = sor.u32 %s65, %s66
    %p68 = scmp.eq.s32.totalorder %s67, 0
    %s70 = sadd.s32 %s69, 1
    %s71 = scalar_select %p68, %s69, %s70
    %p74 = pneg %p68
    %p75 = scmp.eq.s32.totalorder %s10, 1
    %p76 = por %p74, %p75
    %p77 = scmp.ne.s32.totalorder %s69, %s72
    %p78 = scmp.eq.s32.totalorder %s10, 0
    %p79 = por %p77, %p78
    %p80 = scmp.ne.s32.totalorder %s69, %s72
    %p81 = scmp.eq.s32.totalorder %s15, 1
    %p82 = por %p80, %p81
    %p83 = scmp.ne.s32.totalorder %s72, %s73
    %p84 = scmp.eq.s32.totalorder %s15, 0
    %p85 = por %p83, %p84
    %p86 = scmp.ne.s32.totalorder %s72, %s73
    %p87 = scmp.eq.s32.totalorder %s16, 1
    %p88 = por %p86, %p87
    %p90 = scmp.ne.s32.totalorder %s73, %s89
    %p91 = scmp.eq.s32.totalorder %s16, 0
    %p92 = por %p90, %p91
    %s93 = ssub.s32 %s17, %s36
    %s94 = ssub.s32 %s19, %s28
    %s95 = sor.u32 %s93, %s94
    %p96 = scmp.eq.s32.totalorder %s95, 0
    %s98 = sadd.s32 %s97, 1
    %s99 = scalar_select %p96, %s97, %s98
    %p102 = pneg %p96
    %p103 = scmp.eq.s32.totalorder %s10, 1
    %p104 = por %p102, %p103
    %p105 = scmp.ne.s32.totalorder %s97, %s100
    %p106 = scmp.eq.s32.totalorder %s10, 0
    %p107 = por %p105, %p106
    %p108 = scmp.ne.s32.totalorder %s97, %s100
    %p109 = scmp.eq.s32.totalorder %s15, 1
    %p110 = por %p108, %p109
    %p111 = scmp.ne.s32.totalorder %s100, %s101
    %p112 = scmp.eq.s32.totalorder %s15, 0
    %p113 = por %p111, %p112
    %p114 = scmp.ne.s32.totalorder %s100, %s101
    %p115 = scmp.eq.s32.totalorder %s16, 1
    %p116 = por %p114, %p115
    %p118 = scmp.ne.s32.totalorder %s101, %s117
    %p119 = scmp.eq.s32.totalorder %s16, 0
    %p120 = por %p118, %p119
    %s121 = ssub.s32 %s17, %s36
    %s122 = ssub.s32 %s18, %s32
    %s123 = sor.u32 %s121, %s122
    %s124 = ssub.s32 %s19, %s28
    %s125 = sor.u32 %s123, %s124
    %p126 = scmp.eq.s32.totalorder %s125, 0
    %s128 = sadd.s32 %s127, 1
    %s129 = scalar_select %p126, %s127, %s128
    %p132 = pneg %p126
    %p133 = scmp.eq.s32.totalorder %s10, 1
    %p134 = por %p132, %p133
    %p135 = scmp.ne.s32.totalorder %s127, %s130
    %p136 = scmp.eq.s32.totalorder %s10, 0
    %p137 = por %p135, %p136
    %p138 = scmp.ne.s32.totalorder %s127, %s130
    %p139 = scmp.eq.s32.totalorder %s15, 1
    %p140 = por %p138, %p139
    %p141 = scmp.ne.s32.totalorder %s130, %s131
    %p142 = scmp.eq.s32.totalorder %s15, 0
    %p143 = por %p141, %p142
    %p144 = scmp.ne.s32.totalorder %s130, %s131
    %p145 = scmp.eq.s32.totalorder %s16, 1
    %p146 = por %p144, %p145
    %p148 = scmp.ne.s32.totalorder %s131, %s147
    %p149 = scmp.eq.s32.totalorder %s16, 0
    %p150 = por %p148, %p149
    %s151 = ssub.s32 %s17, %s36
    %s152 = ssub.s32 %s18, %s32
    %s153 = sor.u32 %s151, %s152
    %p154 = scmp.eq.s32.totalorder %s153, 0
    %s156 = sadd.s32 %s155, 1
    %s157 = scalar_select %p154, %s155, %s156
    %p160 = pneg %p154
    %p161 = scmp.eq.s32.totalorder %s10, 1
    %p162 = por %p160, %p161
    %p163 = scmp.ne.s32.totalorder %s155, %s158
    %p164 = scmp.eq.s32.totalorder %s10, 0
    %p165 = por %p163, %p164
    %p166 = scmp.ne.s32.totalorder %s155, %s158
    %p167 = scmp.eq.s32.totalorder %s15, 1
    %p168 = por %p166, %p167
    %p169 = scmp.ne.s32.totalorder %s158, %s159
    %p170 = scmp.eq.s32.totalorder %s15, 0
    %p171 = por %p169, %p170
    %p172 = scmp.ne.s32.totalorder %s158, %s159
    %p173 = scmp.eq.s32.totalorder %s16, 1
    %p174 = por %p172, %p173
    %p176 = scmp.ne.s32.totalorder %s159, %s175
    %p177 = scmp.eq.s32.totalorder %s16, 0
    %p178 = por %p176, %p177
    %p179 = scmp.le.s32.totalorder 1, %s10
    %p180 = scmp.lt.s32.totalorder %s10, 3
    %p181 = pnand %p179, %p180
    %p182 = pneg %p181
    // Predicated region
    $region9: #{decoder_forward.20} parent=5 // pred_check
      _
    $region10: #{decoder_forward.20} parent=5 // pred_check_branch
      %184 = sbr.rel (%p181) target = $region12
    $region11: #{decoder_forward.20} parent=5 // pred_region
      %s185 = ssub.s32 %s10, 1
    $region12: #{decoder_forward.20} parent=5 // pred_fallthru
      _
    %p186 = scmp.lt.s32.totalorder %s10, 2
    // Predicated region
    $region13: #{decoder_forward.20} parent=5 // pred_check
      %p187 = pneg %p186
    $region14: #{decoder_forward.20} parent=5 // pred_check_branch
      %189 = sbr.rel (%p187) target = $region16
    $region15: #{decoder_forward.20} parent=5 // pred_region
      // Predicated region
      $region17: #{decoder_forward.20} parent=15 // pred_check
        %p190 = pneg %p51
      $region18: #{decoder_forward.20} parent=15 // pred_check_branch
        %192 = sbr.rel (%p190) target = $region20
      $region19: #{decoder_forward.20} parent=15 // pred_region
        %p193 = scmp.lt.s32.totalorder %s17, 1
        %s194 = scalar_select %p193, %s17, 1
        %p195 = scmp.lt.s32.totalorder %s18, 0
        %s196 = scalar_select %p195, %s18, 0
        %s197 = smul.addr %s194, 4
        %s198 = sadd.s32 %s196, %s197
        %s199 = smul.addr %s198, 8
        %s200 = scalar_lea.vmem %s0, %s199
      $region20: #{decoder_forward.20} parent=15 // pred_fallthru
        _
      // Predicated region
      $region21: #{decoder_forward.20} parent=15 // pred_check
        %p201 = pneg %p79
      $region22: #{decoder_forward.20} parent=15 // pred_check_branch
        %203 = sbr.rel (%p201) target = $region24
      $region23: #{decoder_forward.20} parent=15 // pred_region
        %p204 = scmp.lt.s32.totalorder %s17, 1
        %s205 = scalar_select %p204, %s17, 1
        %p206 = scmp.lt.s32.totalorder %s19, 0
        %s207 = scalar_select %p206, %s19, 0
        %s208 = smul.addr %s205, 4
        %s209 = sadd.s32 %s207, %s208
        %s210 = smul.addr %s209, 8
        %s211 = scalar_lea.vmem %s1, %s210
      $region24: #{decoder_forward.20} parent=15 // pred_fallthru
        _
      // Predicated region
      $region25: #{decoder_forward.20} parent=15 // pred_check
        %p212 = pneg %p107
      $region26: #{decoder_forward.20} parent=15 // pred_check_branch
        %214 = sbr.rel (%p212) target = $region28
      $region27: #{decoder_forward.20} parent=15 // pred_region
        %p215 = scmp.lt.s32.totalorder %s17, 1
        %s216 = scalar_select %p215, %s17, 1
        %p217 = scmp.lt.s32.totalorder %s19, 0
        %s218 = scalar_select %p217, %s19, 0
        %s219 = smul.addr %s216, 4
        %s220 = sadd.s32 %s218, %s219
        %s221 = smul.addr %s220, 8
        %s222 = scalar_lea.vmem %s2, %s221
      $region28: #{decoder_forward.20} parent=15 // pred_fallthru
        _
      // Predicated region
      $region29: #{decoder_forward.20} parent=15 // pred_check
        %p223 = pneg %p137
      $region30: #{decoder_forward.20} parent=15 // pred_check_branch
        %225 = sbr.rel (%p223) target = $region32
      $region31: #{decoder_forward.20} parent=15 // pred_region
        %p226 = scmp.lt.s32.totalorder %s17, 1
        %s227 = scalar_select %p226, %s17, 1
        %p228 = scmp.lt.s32.totalorder %s18, 0
        %s229 = scalar_select %p228, %s18, 0
        %p230 = scmp.lt.s32.totalorder %s19, 0
        %s231 = scalar_select %p230, %s19, 0
        %s232 = sadd.s32 %s231, %s229
        %s233 = sadd.s32 %s232, %s227
        %s234 = smul.addr %s233, 8
        %s235 = scalar_lea.vmem %s3, %s234
      $region32: #{decoder_forward.20} parent=15 // pred_fallthru
        _
    $region16: #{decoder_forward.20} parent=5 // pred_fallthru
      _
    %p236 = scmp.le.s32.totalorder 1, %s10
    %p237 = scmp.lt.s32.totalorder %s10, 3
    %p238 = pnand %p236, %p237
    %p239 = pneg %p238
    // Predicated region
    $region33: #{decoder_forward.20} parent=5 // pred_check
      _
    $region34: #{decoder_forward.20} parent=5 // pred_check_branch
      %241 = sbr.rel (%p238) target = $region36
    $region35: #{decoder_forward.20} parent=5 // pred_region
      %s242 = ssub.s32 %s10, 1
      %p243 = scmp.lt.s32.totalorder %s20, 1
      %s244 = scalar_select %p243, %s20, 1
      %p245 = scmp.lt.s32.totalorder %s21, 0
      %s246 = scalar_select %p245, %s21, 0
      %s247 = smul.addr %s244, 4
      %s248 = sadd.s32 %s246, %s247
      %s249 = smul.addr %s248, 8
      %s250 = scalar_lea.vmem %s0, %s249
      %p251 = pneg %p57
      %p252 = pneg %p54
      %p253 = scmp.lt.s32.totalorder %s20, 1
      %s254 = scalar_select %p253, %s20, 1
      %p255 = scmp.lt.s32.totalorder %s22, 0
      %s256 = scalar_select %p255, %s22, 0
      %s257 = smul.addr %s254, 4
      %s258 = sadd.s32 %s256, %s257
      %s259 = smul.addr %s258, 8
      %s260 = scalar_lea.vmem %s1, %s259
      %p261 = pneg %p85
      %p262 = pneg %p82
      %p263 = scmp.lt.s32.totalorder %s20, 1
      %s264 = scalar_select %p263, %s20, 1
      %p265 = scmp.lt.s32.totalorder %s22, 0
      %s266 = scalar_select %p265, %s22, 0
      %s267 = smul.addr %s264, 4
      %s268 = sadd.s32 %s266, %s267
      %s269 = smul.addr %s268, 8
      %s270 = scalar_lea.vmem %s2, %s269
      %p271 = pneg %p113
      %p272 = pneg %p110
      %p273 = scmp.lt.s32.totalorder %s20, 1
      %s274 = scalar_select %p273, %s20, 1
      %p275 = scmp.lt.s32.totalorder %s21, 0
      %s276 = scalar_select %p275, %s21, 0
      %p277 = scmp.lt.s32.totalorder %s22, 0
      %s278 = scalar_select %p277, %s22, 0
      %s279 = sadd.s32 %s278, %s276
      %s280 = sadd.s32 %s279, %s274
      %s281 = smul.addr %s280, 8
      %s282 = scalar_lea.vmem %s3, %s281
      %p283 = pneg %p143
      %p284 = pneg %p140
      %p285 = pneg %p171
      %p286 = pneg %p168
      %p287 = scmp.lt.s32.totalorder %s20, 1
      %s288 = scalar_select %p287, %s20, 1
      %p289 = scmp.lt.s32.totalorder %s21, 0
      %s290 = scalar_select %p289, %s21, 0
      %s291 = smul.addr %s288, 4
      %s292 = sadd.s32 %s290, %s291
      %s293 = smul.addr %s292, 8
      %s294 = scalar_lea.vmem %s4, %s293
      %p295 = scmp.lt.s32.totalorder %s20, 1
      %s296 = scalar_select %p295, %s20, 1
      %p297 = scmp.lt.s32.totalorder %s21, 0
      %s298 = scalar_select %p297, %s21, 0
      %s299 = smul.addr %s296, 4
      %s300 = sadd.s32 %s298, %s299
      %s301 = smul.addr %s300, 8
      %s302 = scalar_lea.vmem %s0, %s301
      %p303 = scmp.lt.s32.totalorder %s20, 1
      %s304 = scalar_select %p303, %s20, 1
      %p305 = scmp.lt.s32.totalorder %s22, 0
      %s306 = scalar_select %p305, %s22, 0
      %s307 = smul.addr %s304, 4
      %s308 = sadd.s32 %s306, %s307
      %s309 = smul.addr %s308, 8
      %s310 = scalar_lea.vmem %s1, %s309
      %p311 = scmp.lt.s32.totalorder %s20, 1
      %s312 = scalar_select %p311, %s20, 1
      %p313 = scmp.lt.s32.totalorder %s22, 0
      %s314 = scalar_select %p313, %s22, 0
      %s315 = smul.addr %s312, 4
      %s316 = sadd.s32 %s314, %s315
      %s317 = smul.addr %s316, 8
      %s318 = scalar_lea.vmem %s2, %s317
      %p319 = scmp.lt.s32.totalorder %s20, 1
      %s320 = scalar_select %p319, %s20, 1
      %p321 = scmp.lt.s32.totalorder %s21, 0
      %s322 = scalar_select %p321, %s21, 0
      %p323 = scmp.lt.s32.totalorder %s22, 0
      %s324 = scalar_select %p323, %s22, 0
      %s325 = sadd.s32 %s324, %s322
      %s326 = sadd.s32 %s325, %s320
      %s327 = smul.addr %s326, 8
      %s328 = scalar_lea.vmem %s3, %s327
      %p329 = scmp.lt.s32.totalorder %s20, 1
      %s330 = scalar_select %p329, %s20, 1
      %p331 = scmp.lt.s32.totalorder %s21, 0
      %s332 = scalar_select %p331, %s21, 0
      %s333 = smul.addr %s330, 4
      %s334 = sadd.s32 %s332, %s333
      %s335 = smul.addr %s334, 8
      %s336 = scalar_lea.vmem %s4, %s335
      %p337 = scmp.eq.s32.totalorder %s22, 0
      // Predicated region
      $region37: #{decoder_forward.20} parent=35 // pred_check
        %p338 = pneg %p337
      $region38: #{decoder_forward.20} parent=35 // pred_check_branch
        %340 = sbr.rel (%p338) target = $region40
      $region39: #{decoder_forward.20} parent=35 // pred_region
        %vm341 = vcmask 7168
        %342 = vst.msk [vmem:[#allocation2] sm:$0xff] %vm341, -inf
        %343 = vst.msk [vmem:[#allocation2 + $0x8] sm:$0xff] %vm341, -inf
        %344 = vst.msk [vmem:[#allocation2 + $0x10] sm:$0xff] %vm341, -inf
        %345 = vst.msk [vmem:[#allocation2 + $0x18] sm:$0xff] %vm341, -inf
        %346 = vst.msk [vmem:[#allocation3] sm:$0xff] %vm341, 0.0
        %347 = vst.msk [vmem:[#allocation3 + $0x8] sm:$0xff] %vm341, 0.0
        %348 = vst.msk [vmem:[#allocation3 + $0x10] sm:$0xff] %vm341, 0.0
        %349 = vst.msk [vmem:[#allocation3 + $0x18] sm:$0xff] %vm341, 0.0
        %vm350 = vcmask 64512
        %351 = vst.msk [vmem:[#allocation4] sm:$0xff] %vm350, 0.0
        %352 = vst.msk [vmem:[#allocation4 + $0x8] sm:$0xff] %vm350, 0.0
        %353 = vst.msk [vmem:[#allocation4 + $0x10] sm:$0xff] %vm350, 0.0
        %354 = vst.msk [vmem:[#allocation4 + $0x18] sm:$0xff] %vm350, 0.0
      $region40: #{decoder_forward.20} parent=35 // pred_fallthru
        _
      %v355 = vld [vmem:[%s302] sm:$0xff]
      %v356 = vld [vmem:[%s302 + $0x8] sm:$0xff]
      %v357 = vld [vmem:[%s302 + $0x10] sm:$0xff]
      %v358 = vld [vmem:[%s302 + $0x18] sm:$0xff]
      %v359 = vld [vmem:[%s310] sm:$0xff]
      %v360 = vld [vmem:[%s310 + $0x8] sm:$0xff]
      %v361 = vld [vmem:[%s310 + $0x10] sm:$0xff]
      %v362 = vld [vmem:[%s310 + $0x18] sm:$0xff]
      %v363 = vld [vmem:[%s318] sm:$0xff]
      %v364 = vld [vmem:[%s318 + $0x8] sm:$0xff]
      %v365 = vld [vmem:[%s318 + $0x10] sm:$0xff]
      %v366 = vld [vmem:[%s318 + $0x18] sm:$0xff]
      %vm367 = vcmask 64512
      %v369 = vsel %vm367, %v355, 0
      %v372 = vsel %vm367, %v359, 0
      %374 = vmatprep.subr.mxu0 0.0
      %375 = vmatpush1.xpose.msra.mxu0 0.0
      %376 = vmatprep.subr.mxu0 0.0
      %377 = vmatpush1.xpose.msra.mxu0 0.0
      %378 = vmatprep.subr.mxu0 0.0
      %379 = vmatpush1.xpose.msra.mxu0 0.0
      %380 = vmatprep.subr.mxu0 0.0
      %381 = vmatpush1.xpose.msra.mxu0 0.0
      %382 = vmatprep.subr.mxu0 0.0
      %383 = vmatpush1.xpose.msra.mxu0 0.0
      %384 = vmatprep.subr.mxu0 0.0
      %385 = vmatpush1.xpose.msra.mxu0 0.0
      %386 = vmatprep.subr.mxu0 0.0
      %387 = vmatpush1.xpose.msra.mxu0 0.0
      %388 = vmatprep.subr.mxu0 0.0
      %389 = vmatpush1.xpose.msra.mxu0 0.0
      %390 = vmatprep.subr.mxu0 0.0
      %391 = vmatpush1.xpose.msra.mxu0 0.0
      %392 = vmatprep.subr.mxu0 0.0
      %393 = vmatpush1.xpose.msra.mxu0 0.0
      %394 = vmatprep.subr.mxu0 0.0
      %395 = vmatpush1.xpose.msra.mxu0 0.0
      %396 = vmatprep.subr.mxu0 0.0
      %397 = vmatpush1.xpose.msra.mxu0 0.0
      %398 = vmatprep.subr.mxu0 0.0
      %399 = vmatpush1.xpose.msra.mxu0 0.0
      %400 = vmatprep.subr.mxu0 0.0
      %401 = vmatpush1.xpose.msra.mxu0 0.0
      %402 = vmatprep.subr.mxu0 0.0
      %403 = vmatpush1.xpose.msra.mxu0 0.0
      %404 = vmatprep.subr.mxu0 0.0
      %405 = vmatpush1.xpose.msra.mxu0 %v372
      %406 = vmatprep.subr.mxu0 0.0
      %407 = vmatpush2.xpose.msra.mxu0 0.0
      %408 = vmatprep.subr.mxu0 0.0
      %409 = vmatpush2.xpose.msra.mxu0 0.0
      %410 = vmatprep.subr.mxu0 0.0
      %411 = vmatpush2.xpose.msra.mxu0 0.0
      %412 = vmatprep.subr.mxu0 0.0
      %413 = vmatpush2.xpose.msra.mxu0 0.0
      %414 = vmatprep.subr.mxu0 0.0
      %415 = vmatpush2.xpose.msra.mxu0 0.0
      %416 = vmatprep.subr.mxu0 0.0
      %417 = vmatpush2.xpose.msra.mxu0 0.0
      %418 = vmatprep.subr.mxu0 0.0
      %419 = vmatpush2.xpose.msra.mxu0 0.0
      %420 = vmatprep.subr.mxu0 0.0
      %421 = vmatpush2.xpose.msra.mxu0 0.0
      %422 = vmatprep.subr.mxu0 0.0
      %423 = vmatpush2.xpose.msra.mxu0 0.0
      %424 = vmatprep.subr.mxu0 0.0
      %425 = vmatpush2.xpose.msra.mxu0 0.0
      %426 = vmatprep.subr.mxu0 0.0
      %427 = vmatpush2.xpose.msra.mxu0 0.0
      %428 = vmatprep.subr.mxu0 0.0
      %429 = vmatpush2.xpose.msra.mxu0 0.0
      %430 = vmatprep.subr.mxu0 0.0
      %431 = vmatpush2.xpose.msra.mxu0 0.0
      %432 = vmatprep.subr.mxu0 0.0
      %433 = vmatpush2.xpose.msra.mxu0 0.0
      %434 = vmatprep.subr.mxu0 0.0
      %435 = vmatpush2.xpose.msra.mxu0 0.0
      %436 = vmatprep.subr.mxu0 0.0
      %437 = vmatpush2.xpose.msra.mxu0 0.0
      %438 = vmatprep.mubr.f32.mxu0 0.0
      %439 = vmatmul.mubr.f32.gmra.mxu0 %v369
      %v440 = vpop.f32.mrf.mxu0
      %v441 = vadd.f32 0.0, %v440
      %v442 = vpop.f32.mrf.mxu0
      %443 = vdwg.mxu0
      %v445 = vsel %vm367, %v356, 0
      %v448 = vsel %vm367, %v360, 0
      %450 = vmatprep.subr.mxu0 0.0
      %451 = vmatpush1.xpose.msra.mxu0 0.0
      %452 = vmatprep.subr.mxu0 0.0
      %453 = vmatpush1.xpose.msra.mxu0 0.0
      %454 = vmatprep.subr.mxu0 0.0
      %455 = vmatpush1.xpose.msra.mxu0 0.0
      %456 = vmatprep.subr.mxu0 0.0
      %457 = vmatpush1.xpose.msra.mxu0 0.0
      %458 = vmatprep.subr.mxu0 0.0
      %459 = vmatpush1.xpose.msra.mxu0 0.0
      %460 = vmatprep.subr.mxu0 0.0
      %461 = vmatpush1.xpose.msra.mxu0 0.0
      %462 = vmatprep.subr.mxu0 0.0
      %463 = vmatpush1.xpose.msra.mxu0 0.0
      %464 = vmatprep.subr.mxu0 0.0
      %465 = vmatpush1.xpose.msra.mxu0 0.0
      %466 = vmatprep.subr.mxu0 0.0
      %467 = vmatpush1.xpose.msra.mxu0 0.0
      %468 = vmatprep.subr.mxu0 0.0
      %469 = vmatpush1.xpose.msra.mxu0 0.0
      %470 = vmatprep.subr.mxu0 0.0
      %471 = vmatpush1.xpose.msra.mxu0 0.0
      %472 = vmatprep.subr.mxu0 0.0
      %473 = vmatpush1.xpose.msra.mxu0 0.0
      %474 = vmatprep.subr.mxu0 0.0
      %475 = vmatpush1.xpose.msra.mxu0 0.0
      %476 = vmatprep.subr.mxu0 0.0
      %477 = vmatpush1.xpose.msra.mxu0 0.0
      %478 = vmatprep.subr.mxu0 0.0
      %479 = vmatpush1.xpose.msra.mxu0 0.0
      %480 = vmatprep.subr.mxu0 0.0
      %481 = vmatpush1.xpose.msra.mxu0 %v448
      %482 = vmatprep.subr.mxu0 0.0
      %483 = vmatpush2.xpose.msra.mxu0 0.0
      %484 = vmatprep.subr.mxu0 0.0
      %485 = vmatpush2.xpose.msra.mxu0 0.0
      %486 = vmatprep.subr.mxu0 0.0
      %487 = vmatpush2.xpose.msra.mxu0 0.0
      %488 = vmatprep.subr.mxu0 0.0
      %489 = vmatpush2.xpose.msra.mxu0 0.0
      %490 = vmatprep.subr.mxu0 0.0
      %491 = vmatpush2.xpose.msra.mxu0 0.0
      %492 = vmatprep.subr.mxu0 0.0
      %493 = vmatpush2.xpose.msra.mxu0 0.0
      %494 = vmatprep.subr.mxu0 0.0
      %495 = vmatpush2.xpose.msra.mxu0 0.0
      %496 = vmatprep.subr.mxu0 0.0
      %497 = vmatpush2.xpose.msra.mxu0 0.0
      %498 = vmatprep.subr.mxu0 0.0
      %499 = vmatpush2.xpose.msra.mxu0 0.0
      %500 = vmatprep.subr.mxu0 0.0
      %501 = vmatpush2.xpose.msra.mxu0 0.0
      %502 = vmatprep.subr.mxu0 0.0
      %503 = vmatpush2.xpose.msra.mxu0 0.0
      %504 = vmatprep.subr.mxu0 0.0
      %505 = vmatpush2.xpose.msra.mxu0 0.0
      %506 = vmatprep.subr.mxu0 0.0
      %507 = vmatpush2.xpose.msra.mxu0 0.0
      %508 = vmatprep.subr.mxu0 0.0
      %509 = vmatpush2.xpose.msra.mxu0 0.0
      %510 = vmatprep.subr.mxu0 0.0
      %511 = vmatpush2.xpose.msra.mxu0 0.0
      %512 = vmatprep.subr.mxu0 0.0
      %513 = vmatpush2.xpose.msra.mxu0 0.0
      %514 = vmatprep.mubr.f32.mxu0 0.0
      %515 = vmatmul.mubr.f32.gmra.mxu0 %v445
      %v516 = vpop.f32.mrf.mxu0
      %v517 = vadd.f32 0.0, %v516
      %v518 = vpop.f32.mrf.mxu0
      %519 = vdwg.mxu0
      %v521 = vsel %vm367, %v357, 0
      %v524 = vsel %vm367, %v361, 0
      %526 = vmatprep.subr.mxu0 0.0
      %527 = vmatpush1.xpose.msra.mxu0 0.0
      %528 = vmatprep.subr.mxu0 0.0
      %529 = vmatpush1.xpose.msra.mxu0 0.0
      %530 = vmatprep.subr.mxu0 0.0
      %531 = vmatpush1.xpose.msra.mxu0 0.0
      %532 = vmatprep.subr.mxu0 0.0
      %533 = vmatpush1.xpose.msra.mxu0 0.0
      %534 = vmatprep.subr.mxu0 0.0
      %535 = vmatpush1.xpose.msra.mxu0 0.0
      %536 = vmatprep.subr.mxu0 0.0
      %537 = vmatpush1.xpose.msra.mxu0 0.0
      %538 = vmatprep.subr.mxu0 0.0
      %539 = vmatpush1.xpose.msra.mxu0 0.0
      %540 = vmatprep.subr.mxu0 0.0
      %541 = vmatpush1.xpose.msra.mxu0 0.0
      %542 = vmatprep.subr.mxu0 0.0
      %543 = vmatpush1.xpose.msra.mxu0 0.0
      %544 = vmatprep.subr.mxu0 0.0
      %545 = vmatpush1.xpose.msra.mxu0 0.0
      %546 = vmatprep.subr.mxu0 0.0
      %547 = vmatpush1.xpose.msra.mxu0 0.0
      %548 = vmatprep.subr.mxu0 0.0
      %549 = vmatpush1.xpose.msra.mxu0 0.0
      %550 = vmatprep.subr.mxu0 0.0
      %551 = vmatpush1.xpose.msra.mxu0 0.0
      %552 = vmatprep.subr.mxu0 0.0
      %553 = vmatpush1.xpose.msra.mxu0 0.0
      %554 = vmatprep.subr.mxu0 0.0
      %555 = vmatpush1.xpose.msra.mxu0 0.0
      %556 = vmatprep.subr.mxu0 0.0
      %557 = vmatpush1.xpose.msra.mxu0 %v524
      %558 = vmatprep.subr.mxu0 0.0
      %559 = vmatpush2.xpose.msra.mxu0 0.0
      %560 = vmatprep.subr.mxu0 0.0
      %561 = vmatpush2.xpose.msra.mxu0 0.0
      %562 = vmatprep.subr.mxu0 0.0
      %563 = vmatpush2.xpose.msra.mxu0 0.0
      %564 = vmatprep.subr.mxu0 0.0
      %565 = vmatpush2.xpose.msra.mxu0 0.0
      %566 = vmatprep.subr.mxu0 0.0
      %567 = vmatpush2.xpose.msra.mxu0 0.0
      %568 = vmatprep.subr.mxu0 0.0
      %569 = vmatpush2.xpose.msra.mxu0 0.0
      %570 = vmatprep.subr.mxu0 0.0
      %571 = vmatpush2.xpose.msra.mxu0 0.0
      %572 = vmatprep.subr.mxu0 0.0
      %573 = vmatpush2.xpose.msra.mxu0 0.0
      %574 = vmatprep.subr.mxu0 0.0
      %575 = vmatpush2.xpose.msra.mxu0 0.0
      %576 = vmatprep.subr.mxu0 0.0
      %577 = vmatpush2.xpose.msra.mxu0 0.0
      %578 = vmatprep.subr.mxu0 0.0
      %579 = vmatpush2.xpose.msra.mxu0 0.0
      %580 = vmatprep.subr.mxu0 0.0
      %581 = vmatpush2.xpose.msra.mxu0 0.0
      %582 = vmatprep.subr.mxu0 0.0
      %583 = vmatpush2.xpose.msra.mxu0 0.0
      %584 = vmatprep.subr.mxu0 0.0
      %585 = vmatpush2.xpose.msra.mxu0 0.0
      %586 = vmatprep.subr.mxu0 0.0
      %587 = vmatpush2.xpose.msra.mxu0 0.0
      %588 = vmatprep.subr.mxu0 0.0
      %589 = vmatpush2.xpose.msra.mxu0 0.0
      %590 = vmatprep.mubr.f32.mxu0 0.0
      %591 = vmatmul.mubr.f32.gmra.mxu0 %v521
      %v592 = vpop.f32.mrf.mxu0
      %v593 = vadd.f32 0.0, %v592
      %v594 = vpop.f32.mrf.mxu0
      %595 = vdwg.mxu0
      %v597 = vsel %vm367, %v358, 0
      %v600 = vsel %vm367, %v362, 0
      %602 = vmatprep.subr.mxu0 0.0
      %603 = vmatpush1.xpose.msra.mxu0 0.0
      %604 = vmatprep.subr.mxu0 0.0
      %605 = vmatpush1.xpose.msra.mxu0 0.0
      %606 = vmatprep.subr.mxu0 0.0
      %607 = vmatpush1.xpose.msra.mxu0 0.0
      %608 = vmatprep.subr.mxu0 0.0
      %609 = vmatpush1.xpose.msra.mxu0 0.0
      %610 = vmatprep.subr.mxu0 0.0
      %611 = vmatpush1.xpose.msra.mxu0 0.0
      %612 = vmatprep.subr.mxu0 0.0
      %613 = vmatpush1.xpose.msra.mxu0 0.0
      %614 = vmatprep.subr.mxu0 0.0
      %615 = vmatpush1.xpose.msra.mxu0 0.0
      %616 = vmatprep.subr.mxu0 0.0
      %617 = vmatpush1.xpose.msra.mxu0 0.0
      %618 = vmatprep.subr.mxu0 0.0
      %619 = vmatpush1.xpose.msra.mxu0 0.0
      %620 = vmatprep.subr.mxu0 0.0
      %621 = vmatpush1.xpose.msra.mxu0 0.0
      %622 = vmatprep.subr.mxu0 0.0
      %623 = vmatpush1.xpose.msra.mxu0 0.0
      %624 = vmatprep.subr.mxu0 0.0
      %625 = vmatpush1.xpose.msra.mxu0 0.0
      %626 = vmatprep.subr.mxu0 0.0
      %627 = vmatpush1.xpose.msra.mxu0 0.0
      %628 = vmatprep.subr.mxu0 0.0
      %629 = vmatpush1.xpose.msra.mxu0 0.0
      %630 = vmatprep.subr.mxu0 0.0
      %631 = vmatpush1.xpose.msra.mxu0 0.0
      %632 = vmatprep.subr.mxu0 0.0
      %633 = vmatpush1.xpose.msra.mxu0 %v600
      %634 = vmatprep.subr.mxu0 0.0
      %635 = vmatpush2.xpose.msra.mxu0 0.0
      %636 = vmatprep.subr.mxu0 0.0
      %637 = vmatpush2.xpose.msra.mxu0 0.0
      %638 = vmatprep.subr.mxu0 0.0
      %639 = vmatpush2.xpose.msra.mxu0 0.0
      %640 = vmatprep.subr.mxu0 0.0
      %641 = vmatpush2.xpose.msra.mxu0 0.0
      %642 = vmatprep.subr.mxu0 0.0
      %643 = vmatpush2.xpose.msra.mxu0 0.0
      %644 = vmatprep.subr.mxu0 0.0
      %645 = vmatpush2.xpose.msra.mxu0 0.0
      %646 = vmatprep.subr.mxu0 0.0
      %647 = vmatpush2.xpose.msra.mxu0 0.0
      %648 = vmatprep.subr.mxu0 0.0
      %649 = vmatpush2.xpose.msra.mxu0 0.0
      %650 = vmatprep.subr.mxu0 0.0
      %651 = vmatpush2.xpose.msra.mxu0 0.0
      %652 = vmatprep.subr.mxu0 0.0
      %653 = vmatpush2.xpose.msra.mxu0 0.0
      %654 = vmatprep.subr.mxu0 0.0
      %655 = vmatpush2.xpose.msra.mxu0 0.0
      %656 = vmatprep.subr.mxu0 0.0
      %657 = vmatpush2.xpose.msra.mxu0 0.0
      %658 = vmatprep.subr.mxu0 0.0
      %659 = vmatpush2.xpose.msra.mxu0 0.0
      %660 = vmatprep.subr.mxu0 0.0
      %661 = vmatpush2.xpose.msra.mxu0 0.0
      %662 = vmatprep.subr.mxu0 0.0
      %663 = vmatpush2.xpose.msra.mxu0 0.0
      %664 = vmatprep.subr.mxu0 0.0
      %665 = vmatpush2.xpose.msra.mxu0 0.0
      %666 = vmatprep.mubr.f32.mxu0 0.0
      %667 = vmatmul.mubr.f32.gmra.mxu0 %v597
      %v668 = vpop.f32.mrf.mxu0
      %v669 = vadd.f32 0.0, %v668
      %v670 = vpop.f32.mrf.mxu0
      %671 = vdwg.mxu0
      %v672 = vmul.f32 %v441, 0.125
      %v673 = vmul.f32 %v517, 0.125
      %v674 = vmul.f32 %v593, 0.125
      %v675 = vmul.f32 %v669, 0.125
      %v676 = vld [vmem:[%s328] sm:$0xff]
      %vm677 = vcmp.eq.s32.totalorder %v676, 0
      %v678 = vsel %vm677, 1, 0
      %vm679 = vcmp.eq.s32.totalorder %v678, 1
      %v680 = vsel %vm679, -1e+09, %v672
      %v681 = vsel %vm679, -1e+09, %v673
      %v682 = vsel %vm679, -1e+09, %v674
      %v683 = vsel %vm679, -1e+09, %v675
      %v684 = vld [vmem:[#allocation2] sm:$0xff]
      %v685 = vld [vmem:[#allocation2 + $0x8] sm:$0xff]
      %v686 = vld [vmem:[#allocation2 + $0x10] sm:$0xff]
      %v687 = vld [vmem:[#allocation2 + $0x18] sm:$0xff]
      %v688 = vsel %vm367, %v680, -inf
      %689 = vmax.xlane.f32.xlu0 %v688
      %v690 = vpop.xlane.xlu0 %689
      %v691 = vsel %vm367, %v681, -inf
      %692 = vmax.xlane.f32.xlu0 %v691
      %v693 = vpop.xlane.xlu0 %692
      %v694 = vsel %vm367, %v682, -inf
      %695 = vmax.xlane.f32.xlu0 %v694
      %v696 = vpop.xlane.xlu0 %695
      %v697 = vsel %vm367, %v683, -inf
      %698 = vmax.xlane.f32.xlu0 %v697
      %v699 = vpop.xlane.xlu0 %698
      %v700 = vmax.f32 %v684, %v690
      %v701 = vmax.f32 %v685, %v693
      %v702 = vmax.f32 %v686, %v696
      %v703 = vmax.f32 %v687, %v699
      %v704 = vsub.f32 %v684, %v700
      %v705 = vsub.f32 %v685, %v701
      %v706 = vsub.f32 %v686, %v702
      %v707 = vsub.f32 %v687, %v703
      %v708 = vmul.f32 %v704, 1.442695
      %v709 = vpow.pop %v708
      %v710 = vmul.f32 %v705, 1.442695
      %v711 = vpow.pop %v710
      %v712 = vmul.f32 %v706, 1.442695
      %v713 = vpow.pop %v712
      %v714 = vmul.f32 %v707, 1.442695
      %v715 = vpow.pop %v714
      %717 = vset.pattern.permute.xlu0 0
      %718 = vperm.xlu0 %717, %v700
      %v719 = vpop.permute.xlu0 %718
      %722 = vset.pattern.permute.xlu0 0
      %723 = vperm.xlu0 %722, %v701
      %v724 = vpop.permute.xlu0 %723
      %727 = vset.pattern.permute.xlu0 0
      %728 = vperm.xlu0 %727, %v702
      %v729 = vpop.permute.xlu0 %728
      %732 = vset.pattern.permute.xlu0 0
      %733 = vperm.xlu0 %732, %v703
      %v734 = vpop.permute.xlu0 %733
      %v736 = vsub.f32 %v680, %v719
      %v737 = vsub.f32 %v681, %v724
      %v738 = vsub.f32 %v682, %v729
      %v739 = vsub.f32 %v683, %v734
      %v740 = vmul.f32 %v736, 1.442695
      %v741 = vpow.pop %v740
      %v742 = vmul.f32 %v737, 1.442695
      %v743 = vpow.pop %v742
      %v744 = vmul.f32 %v738, 1.442695
      %v745 = vpow.pop %v744
      %v746 = vmul.f32 %v739, 1.442695
      %v747 = vpow.pop %v746
      %v748 = vld [vmem:[#allocation3] sm:$0xff]
      %v749 = vld [vmem:[#allocation3 + $0x8] sm:$0xff]
      %v750 = vld [vmem:[#allocation3 + $0x10] sm:$0xff]
      %v751 = vld [vmem:[#allocation3 + $0x18] sm:$0xff]
      %v752 = vmul.f32 %v709, %v748
      %v753 = vmul.f32 %v711, %v749
      %v754 = vmul.f32 %v713, %v750
      %v755 = vmul.f32 %v715, %v751
      %v756 = vsel %vm367, %v741, 0.0
      %757 = vadd.xlane.f32.xlu0 %v756
      %v758 = vpop.xlane.xlu0 %757
      %v759 = vsel %vm367, %v743, 0.0
      %760 = vadd.xlane.f32.xlu0 %v759
      %v761 = vpop.xlane.xlu0 %760
      %v762 = vsel %vm367, %v745, 0.0
      %763 = vadd.xlane.f32.xlu0 %v762
      %v764 = vpop.xlane.xlu0 %763
      %v765 = vsel %vm367, %v747, 0.0
      %766 = vadd.xlane.f32.xlu0 %v765
      %v767 = vpop.xlane.xlu0 %766
      %v768 = vadd.f32 %v752, %v758
      %v769 = vadd.f32 %v753, %v761
      %v770 = vadd.f32 %v754, %v764
      %v771 = vadd.f32 %v755, %v767
      %vm772 = vcmask 7168
      %773 = vst.msk [vmem:[#allocation3] sm:$0xff] %vm772, %v768
      %774 = vst.msk [vmem:[#allocation3 + $0x8] sm:$0xff] %vm772, %v769
      %775 = vst.msk [vmem:[#allocation3 + $0x10] sm:$0xff] %vm772, %v770
      %776 = vst.msk [vmem:[#allocation3 + $0x18] sm:$0xff] %vm772, %v771
      %v777 = vld [vmem:[#allocation4] sm:$0xff]
      %v778 = vld [vmem:[#allocation4 + $0x8] sm:$0xff]
      %v779 = vld [vmem:[#allocation4 + $0x10] sm:$0xff]
      %v780 = vld [vmem:[#allocation4 + $0x18] sm:$0xff]
      %782 = vset.pattern.permute.xlu0 0
      %783 = vperm.xlu0 %782, %v709
      %v784 = vpop.permute.xlu0 %783
      %787 = vset.pattern.permute.xlu0 0
      %788 = vperm.xlu0 %787, %v711
      %v789 = vpop.permute.xlu0 %788
      %792 = vset.pattern.permute.xlu0 0
      %793 = vperm.xlu0 %792, %v713
      %v794 = vpop.permute.xlu0 %793
      %797 = vset.pattern.permute.xlu0 0
      %798 = vperm.xlu0 %797, %v715
      %v799 = vpop.permute.xlu0 %798
      %v801 = vmul.f32 %v784, %v777
      %v802 = vmul.f32 %v789, %v778
      %v803 = vmul.f32 %v794, %v779
      %v804 = vmul.f32 %v799, %v780
      %v806 = vsel %vm367, %v741, 0
      %808 = vmatprep.subr.mxu0 0.0
      %809 = vmatpush1.msra.mxu0 0.0
      %810 = vmatprep.subr.mxu0 0.0
      %811 = vmatpush1.msra.mxu0 0.0
      %812 = vmatprep.subr.mxu0 0.0
      %813 = vmatpush1.msra.mxu0 0.0
      %814 = vmatprep.subr.mxu0 0.0
      %815 = vmatpush1.msra.mxu0 0.0
      %816 = vmatprep.subr.mxu0 0.0
      %817 = vmatpush1.msra.mxu0 0.0
      %818 = vmatprep.subr.mxu0 0.0
      %819 = vmatpush1.msra.mxu0 0.0
      %820 = vmatprep.subr.mxu0 0.0
      %821 = vmatpush1.msra.mxu0 0.0
      %822 = vmatprep.subr.mxu0 0.0
      %823 = vmatpush1.msra.mxu0 0.0
      %824 = vmatprep.subr.mxu0 0.0
      %825 = vmatpush1.msra.mxu0 0.0
      %826 = vmatprep.subr.mxu0 0.0
      %827 = vmatpush1.msra.mxu0 0.0
      %828 = vmatprep.subr.mxu0 0.0
      %829 = vmatpush1.msra.mxu0 0.0
      %830 = vmatprep.subr.mxu0 0.0
      %831 = vmatpush1.msra.mxu0 0.0
      %832 = vmatprep.subr.mxu0 0.0
      %833 = vmatpush1.msra.mxu0 0.0
      %834 = vmatprep.subr.mxu0 0.0
      %835 = vmatpush1.msra.mxu0 0.0
      %836 = vmatprep.subr.mxu0 0.0
      %837 = vmatpush1.msra.mxu0 0.0
      %838 = vmatprep.subr.mxu0 0.0
      %839 = vmatpush1.msra.mxu0 %v363
      %840 = vmatprep.subr.mxu0 0.0
      %841 = vmatpush2.msra.mxu0 0.0
      %842 = vmatprep.subr.mxu0 0.0
      %843 = vmatpush2.msra.mxu0 0.0
      %844 = vmatprep.subr.mxu0 0.0
      %845 = vmatpush2.msra.mxu0 0.0
      %846 = vmatprep.subr.mxu0 0.0
      %847 = vmatpush2.msra.mxu0 0.0
      %848 = vmatprep.subr.mxu0 0.0
      %849 = vmatpush2.msra.mxu0 0.0
      %850 = vmatprep.subr.mxu0 0.0
      %851 = vmatpush2.msra.mxu0 0.0
      %852 = vmatprep.subr.mxu0 0.0
      %853 = vmatpush2.msra.mxu0 0.0
      %854 = vmatprep.subr.mxu0 0.0
      %855 = vmatpush2.msra.mxu0 0.0
      %856 = vmatprep.subr.mxu0 0.0
      %857 = vmatpush2.msra.mxu0 0.0
      %858 = vmatprep.subr.mxu0 0.0
      %859 = vmatpush2.msra.mxu0 0.0
      %860 = vmatprep.subr.mxu0 0.0
      %861 = vmatpush2.msra.mxu0 0.0
      %862 = vmatprep.subr.mxu0 0.0
      %863 = vmatpush2.msra.mxu0 0.0
      %864 = vmatprep.subr.mxu0 0.0
      %865 = vmatpush2.msra.mxu0 0.0
      %866 = vmatprep.subr.mxu0 0.0
      %867 = vmatpush2.msra.mxu0 0.0
      %868 = vmatprep.subr.mxu0 0.0
      %869 = vmatpush2.msra.mxu0 0.0
      %870 = vmatprep.subr.mxu0 0.0
      %871 = vmatpush2.msra.mxu0 0.0
      %872 = vmatprep.mubr.f32.mxu0 0.0
      %873 = vmatmul.mubr.f32.gmra.mxu0 %v806
      %v874 = vpop.f32.mrf.mxu0
      %v875 = vadd.f32 0.0, %v874
      %v876 = vpop.f32.mrf.mxu0
      %877 = vdwg.mxu0
      %v879 = vsel %vm367, %v743, 0
      %881 = vmatprep.subr.mxu0 0.0
      %882 = vmatpush1.msra.mxu0 0.0
      %883 = vmatprep.subr.mxu0 0.0
      %884 = vmatpush1.msra.mxu0 0.0
      %885 = vmatprep.subr.mxu0 0.0
      %886 = vmatpush1.msra.mxu0 0.0
      %887 = vmatprep.subr.mxu0 0.0
      %888 = vmatpush1.msra.mxu0 0.0
      %889 = vmatprep.subr.mxu0 0.0
      %890 = vmatpush1.msra.mxu0 0.0
      %891 = vmatprep.subr.mxu0 0.0
      %892 = vmatpush1.msra.mxu0 0.0
      %893 = vmatprep.subr.mxu0 0.0
      %894 = vmatpush1.msra.mxu0 0.0
      %895 = vmatprep.subr.mxu0 0.0
      %896 = vmatpush1.msra.mxu0 0.0
      %897 = vmatprep.subr.mxu0 0.0
      %898 = vmatpush1.msra.mxu0 0.0
      %899 = vmatprep.subr.mxu0 0.0
      %900 = vmatpush1.msra.mxu0 0.0
      %901 = vmatprep.subr.mxu0 0.0
      %902 = vmatpush1.msra.mxu0 0.0
      %903 = vmatprep.subr.mxu0 0.0
      %904 = vmatpush1.msra.mxu0 0.0
      %905 = vmatprep.subr.mxu0 0.0
      %906 = vmatpush1.msra.mxu0 0.0
      %907 = vmatprep.subr.mxu0 0.0
      %908 = vmatpush1.msra.mxu0 0.0
      %909 = vmatprep.subr.mxu0 0.0
      %910 = vmatpush1.msra.mxu0 0.0
      %911 = vmatprep.subr.mxu0 0.0
      %912 = vmatpush1.msra.mxu0 %v364
      %913 = vmatprep.subr.mxu0 0.0
      %914 = vmatpush2.msra.mxu0 0.0
      %915 = vmatprep.subr.mxu0 0.0
      %916 = vmatpush2.msra.mxu0 0.0
      %917 = vmatprep.subr.mxu0 0.0
      %918 = vmatpush2.msra.mxu0 0.0
      %919 = vmatprep.subr.mxu0 0.0
      %920 = vmatpush2.msra.mxu0 0.0
      %921 = vmatprep.subr.mxu0 0.0
      %922 = vmatpush2.msra.mxu0 0.0
      %923 = vmatprep.subr.mxu0 0.0
      %924 = vmatpush2.msra.mxu0 0.0
      %925 = vmatprep.subr.mxu0 0.0
      %926 = vmatpush2.msra.mxu0 0.0
      %927 = vmatprep.subr.mxu0 0.0
      %928 = vmatpush2.msra.mxu0 0.0
      %929 = vmatprep.subr.mxu0 0.0
      %930 = vmatpush2.msra.mxu0 0.0
      %931 = vmatprep.subr.mxu0 0.0
      %932 = vmatpush2.msra.mxu0 0.0
      %933 = vmatprep.subr.mxu0 0.0
      %934 = vmatpush2.msra.mxu0 0.0
      %935 = vmatprep.subr.mxu0 0.0
      %936 = vmatpush2.msra.mxu0 0.0
      %937 = vmatprep.subr.mxu0 0.0
      %938 = vmatpush2.msra.mxu0 0.0
      %939 = vmatprep.subr.mxu0 0.0
      %940 = vmatpush2.msra.mxu0 0.0
      %941 = vmatprep.subr.mxu0 0.0
      %942 = vmatpush2.msra.mxu0 0.0
      %943 = vmatprep.subr.mxu0 0.0
      %944 = vmatpush2.msra.mxu0 0.0
      %945 = vmatprep.mubr.f32.mxu0 0.0
      %946 = vmatmul.mubr.f32.gmra.mxu0 %v879
      %v947 = vpop.f32.mrf.mxu0
      %v948 = vadd.f32 0.0, %v947
      %v949 = vpop.f32.mrf.mxu0
      %950 = vdwg.mxu0
      %v952 = vsel %vm367, %v745, 0
      %954 = vmatprep.subr.mxu0 0.0
      %955 = vmatpush1.msra.mxu0 0.0
      %956 = vmatprep.subr.mxu0 0.0
      %957 = vmatpush1.msra.mxu0 0.0
      %958 = vmatprep.subr.mxu0 0.0
      %959 = vmatpush1.msra.mxu0 0.0
      %960 = vmatprep.subr.mxu0 0.0
      %961 = vmatpush1.msra.mxu0 0.0
      %962 = vmatprep.subr.mxu0 0.0
      %963 = vmatpush1.msra.mxu0 0.0
      %964 = vmatprep.subr.mxu0 0.0
      %965 = vmatpush1.msra.mxu0 0.0
      %966 = vmatprep.subr.mxu0 0.0
      %967 = vmatpush1.msra.mxu0 0.0
      %968 = vmatprep.subr.mxu0 0.0
      %969 = vmatpush1.msra.mxu0 0.0
      %970 = vmatprep.subr.mxu0 0.0
      %971 = vmatpush1.msra.mxu0 0.0
      %972 = vmatprep.subr.mxu0 0.0
      %973 = vmatpush1.msra.mxu0 0.0
      %974 = vmatprep.subr.mxu0 0.0
      %975 = vmatpush1.msra.mxu0 0.0
      %976 = vmatprep.subr.mxu0 0.0
      %977 = vmatpush1.msra.mxu0 0.0
      %978 = vmatprep.subr.mxu0 0.0
      %979 = vmatpush1.msra.mxu0 0.0
      %980 = vmatprep.subr.mxu0 0.0
      %981 = vmatpush1.msra.mxu0 0.0
      %982 = vmatprep.subr.mxu0 0.0
      %983 = vmatpush1.msra.mxu0 0.0
      %984 = vmatprep.subr.mxu0 0.0
      %985 = vmatpush1.msra.mxu0 %v365
      %986 = vmatprep.subr.mxu0 0.0
      %987 = vmatpush2.msra.mxu0 0.0
      %988 = vmatprep.subr.mxu0 0.0
      %989 = vmatpush2.msra.mxu0 0.0
      %990 = vmatprep.subr.mxu0 0.0
      %991 = vmatpush2.msra.mxu0 0.0
      %992 = vmatprep.subr.mxu0 0.0
      %993 = vmatpush2.msra.mxu0 0.0
      %994 = vmatprep.subr.mxu0 0.0
      %995 = vmatpush2.msra.mxu0 0.0
      %996 = vmatprep.subr.mxu0 0.0
      %997 = vmatpush2.msra.mxu0 0.0
      %998 = vmatprep.subr.mxu0 0.0
      %999 = vmatpush2.msra.mxu0 0.0
      %1000 = vmatprep.subr.mxu0 0.0
      %1001 = vmatpush2.msra.mxu0 0.0
      %1002 = vmatprep.subr.mxu0 0.0
      %1003 = vmatpush2.msra.mxu0 0.0
      %1004 = vmatprep.subr.mxu0 0.0
      %1005 = vmatpush2.msra.mxu0 0.0
      %1006 = vmatprep.subr.mxu0 0.0
      %1007 = vmatpush2.msra.mxu0 0.0
      %1008 = vmatprep.subr.mxu0 0.0
      %1009 = vmatpush2.msra.mxu0 0.0
      %1010 = vmatprep.subr.mxu0 0.0
      %1011 = vmatpush2.msra.mxu0 0.0
      %1012 = vmatprep.subr.mxu0 0.0
      %1013 = vmatpush2.msra.mxu0 0.0
      %1014 = vmatprep.subr.mxu0 0.0
      %1015 = vmatpush2.msra.mxu0 0.0
      %1016 = vmatprep.subr.mxu0 0.0
      %1017 = vmatpush2.msra.mxu0 0.0
      %1018 = vmatprep.mubr.f32.mxu0 0.0
      %1019 = vmatmul.mubr.f32.gmra.mxu0 %v952
      %v1020 = vpop.f32.mrf.mxu0
      %v1021 = vadd.f32 0.0, %v1020
      %v1022 = vpop.f32.mrf.mxu0
      %1023 = vdwg.mxu0
      %v1025 = vsel %vm367, %v747, 0
      %1027 = vmatprep.subr.mxu0 0.0
      %1028 = vmatpush1.msra.mxu0 0.0
      %1029 = vmatprep.subr.mxu0 0.0
      %1030 = vmatpush1.msra.mxu0 0.0
      %1031 = vmatprep.subr.mxu0 0.0
      %1032 = vmatpush1.msra.mxu0 0.0
      %1033 = vmatprep.subr.mxu0 0.0
      %1034 = vmatpush1.msra.mxu0 0.0
      %1035 = vmatprep.subr.mxu0 0.0
      %1036 = vmatpush1.msra.mxu0 0.0
      %1037 = vmatprep.subr.mxu0 0.0
      %1038 = vmatpush1.msra.mxu0 0.0
      %1039 = vmatprep.subr.mxu0 0.0
      %1040 = vmatpush1.msra.mxu0 0.0
      %1041 = vmatprep.subr.mxu0 0.0
      %1042 = vmatpush1.msra.mxu0 0.0
      %1043 = vmatprep.subr.mxu0 0.0
      %1044 = vmatpush1.msra.mxu0 0.0
      %1045 = vmatprep.subr.mxu0 0.0
      %1046 = vmatpush1.msra.mxu0 0.0
      %1047 = vmatprep.subr.mxu0 0.0
      %1048 = vmatpush1.msra.mxu0 0.0
      %1049 = vmatprep.subr.mxu0 0.0
      %1050 = vmatpush1.msra.mxu0 0.0
      %1051 = vmatprep.subr.mxu0 0.0
      %1052 = vmatpush1.msra.mxu0 0.0
      %1053 = vmatprep.subr.mxu0 0.0
      %1054 = vmatpush1.msra.mxu0 0.0
      %1055 = vmatprep.subr.mxu0 0.0
      %1056 = vmatpush1.msra.mxu0 0.0
      %1057 = vmatprep.subr.mxu0 0.0
      %1058 = vmatpush1.msra.mxu0 %v366
      %1059 = vmatprep.subr.mxu0 0.0
      %1060 = vmatpush2.msra.mxu0 0.0
      %1061 = vmatprep.subr.mxu0 0.0
      %1062 = vmatpush2.msra.mxu0 0.0
      %1063 = vmatprep.subr.mxu0 0.0
      %1064 = vmatpush2.msra.mxu0 0.0
      %1065 = vmatprep.subr.mxu0 0.0
      %1066 = vmatpush2.msra.mxu0 0.0
      %1067 = vmatprep.subr.mxu0 0.0
      %1068 = vmatpush2.msra.mxu0 0.0
      %1069 = vmatprep.subr.mxu0 0.0
      %1070 = vmatpush2.msra.mxu0 0.0
      %1071 = vmatprep.subr.mxu0 0.0
      %1072 = vmatpush2.msra.mxu0 0.0
      %1073 = vmatprep.subr.mxu0 0.0
      %1074 = vmatpush2.msra.mxu0 0.0
      %1075 = vmatprep.subr.mxu0 0.0
      %1076 = vmatpush2.msra.mxu0 0.0
      %1077 = vmatprep.subr.mxu0 0.0
      %1078 = vmatpush2.msra.mxu0 0.0
      %1079 = vmatprep.subr.mxu0 0.0
      %1080 = vmatpush2.msra.mxu0 0.0
      %1081 = vmatprep.subr.mxu0 0.0
      %1082 = vmatpush2.msra.mxu0 0.0
      %1083 = vmatprep.subr.mxu0 0.0
      %1084 = vmatpush2.msra.mxu0 0.0
      %1085 = vmatprep.subr.mxu0 0.0
      %1086 = vmatpush2.msra.mxu0 0.0
      %1087 = vmatprep.subr.mxu0 0.0
      %1088 = vmatpush2.msra.mxu0 0.0
      %1089 = vmatprep.subr.mxu0 0.0
      %1090 = vmatpush2.msra.mxu0 0.0
      %1091 = vmatprep.mubr.f32.mxu0 0.0
      %1092 = vmatmul.mubr.f32.gmra.mxu0 %v1025
      %v1093 = vpop.f32.mrf.mxu0
      %v1094 = vadd.f32 0.0, %v1093
      %v1095 = vpop.f32.mrf.mxu0
      %1096 = vdwg.mxu0
      %v1097 = vadd.f32 %v801, %v875
      %v1098 = vadd.f32 %v802, %v948
      %v1099 = vadd.f32 %v803, %v1021
      %v1100 = vadd.f32 %v804, %v1094
      %1101 = vst.msk [vmem:[#allocation4] sm:$0xff] %vm367, %v1097
      %1102 = vst.msk [vmem:[#allocation4 + $0x8] sm:$0xff] %vm367, %v1098
      %1103 = vst.msk [vmem:[#allocation4 + $0x10] sm:$0xff] %vm367, %v1099
      %1104 = vst.msk [vmem:[#allocation4 + $0x18] sm:$0xff] %vm367, %v1100
      %1105 = vst.msk [vmem:[#allocation2] sm:$0xff] %vm772, %v700
      %1106 = vst.msk [vmem:[#allocation2 + $0x8] sm:$0xff] %vm772, %v701
      %1107 = vst.msk [vmem:[#allocation2 + $0x10] sm:$0xff] %vm772, %v702
      %1108 = vst.msk [vmem:[#allocation2 + $0x18] sm:$0xff] %vm772, %v703
      // Predicated region
      $region41: #{decoder_forward.20} parent=35 // pred_check
        %p1109 = pneg %p337
      $region42: #{decoder_forward.20} parent=35 // pred_check_branch
        %1111 = sbr.rel (%p1109) target = $region44
      $region43: #{decoder_forward.20} parent=35 // pred_region
        %v1112 = vld [vmem:[#allocation4] sm:$0xff]
        %v1113 = vld [vmem:[#allocation4 + $0x8] sm:$0xff]
        %v1114 = vld [vmem:[#allocation4 + $0x10] sm:$0xff]
        %v1115 = vld [vmem:[#allocation4 + $0x18] sm:$0xff]
        %v1116 = vld [vmem:[#allocation3] sm:$0xff]
        %v1117 = vld [vmem:[#allocation3 + $0x8] sm:$0xff]
        %v1118 = vld [vmem:[#allocation3 + $0x10] sm:$0xff]
        %v1119 = vld [vmem:[#allocation3 + $0x18] sm:$0xff]
        %v1120 = vrcp.pop %v1116
        %v1121 = vrcp.pop %v1117
        %v1122 = vrcp.pop %v1118
        %v1123 = vrcp.pop %v1119
        %1125 = vset.pattern.permute.xlu0 0
        %1126 = vperm.xlu0 %1125, %v1120
        %v1127 = vpop.permute.xlu0 %1126
        %1130 = vset.pattern.permute.xlu0 0
        %1131 = vperm.xlu0 %1130, %v1121
        %v1132 = vpop.permute.xlu0 %1131
        %1135 = vset.pattern.permute.xlu0 0
        %1136 = vperm.xlu0 %1135, %v1122
        %v1137 = vpop.permute.xlu0 %1136
        %1140 = vset.pattern.permute.xlu0 0
        %1141 = vperm.xlu0 %1140, %v1123
        %v1142 = vpop.permute.xlu0 %1141
        %v1144 = vmul.f32 %v1112, %v1127
        %v1145 = vmul.f32 %v1113, %v1132
        %v1146 = vmul.f32 %v1114, %v1137
        %v1147 = vmul.f32 %v1115, %v1142
        %1148 = vst.msk [vmem:[%s336] sm:$0xff] %vm367, %v1144
        %1149 = vst.msk [vmem:[%s336 + $0x8] sm:$0xff] %vm367, %v1145
        %1150 = vst.msk [vmem:[%s336 + $0x10] sm:$0xff] %vm367, %v1146
        %1151 = vst.msk [vmem:[%s336 + $0x18] sm:$0xff] %vm367, %v1147
      $region44: #{decoder_forward.20} parent=35 // pred_fallthru
        _
      %p1152 = scmp.lt.s32.totalorder %s20, 1
      %s1153 = scalar_select %p1152, %s20, 1
      %p1154 = scmp.lt.s32.totalorder %s21, 0
      %s1155 = scalar_select %p1154, %s21, 0
      %s1156 = smul.addr %s1153, 4
      %s1157 = sadd.s32 %s1155, %s1156
      %s1158 = smul.addr %s1157, 8
      %s1159 = scalar_lea.vmem %s4, %s1158
      // Predicated region
      $region45: #{decoder_forward.20} parent=35 // pred_check
        %p1160 = pneg %p168
      $region46: #{decoder_forward.20} parent=35 // pred_check_branch
        %1162 = sbr.rel (%p1160) target = $region48
      $region47: #{decoder_forward.20} parent=35 // pred_region
        _
      $region48: #{decoder_forward.20} parent=35 // pred_fallthru
        _
    $region36: #{decoder_forward.20} parent=5 // pred_fallthru
      _
    %p1163 = scmp.le.s32.totalorder 2, %s10
    // Predicated region
    $region49: #{decoder_forward.20} parent=5 // pred_check
      %p1164 = pneg %p1163
    $region50: #{decoder_forward.20} parent=5 // pred_check_branch
      %1166 = sbr.rel (%p1164) target = $region52
    $region51: #{decoder_forward.20} parent=5 // pred_region
      %s1167 = ssub.s32 %s10, 2
      // Predicated region
      $region53: #{decoder_forward.20} parent=51 // pred_check
        %p1168 = pneg %p174
      $region54: #{decoder_forward.20} parent=51 // pred_check_branch
        %1170 = sbr.rel (%p1168) target = $region56
      $region55: #{decoder_forward.20} parent=51 // pred_region
        %p1171 = scmp.lt.s32.totalorder %s23, 1
        %s1172 = scalar_select %p1171, %s23, 1
        %p1173 = scmp.lt.s32.totalorder %s24, 0
        %s1174 = scalar_select %p1173, %s24, 0
        %s1175 = smul.addr %s1172, 4
        %s1176 = sadd.s32 %s1174, %s1175
        %s1177 = smul.addr %s1176, 8
        %s1178 = scalar_lea.vmem %s4, %s1177
      $region56: #{decoder_forward.20} parent=51 // pred_fallthru
        _
    $region52: #{decoder_forward.20} parent=5 // pred_fallthru
      _
  $region6: #{decoder_forward.20} parent=0 // loop_footer
    %s14 = sadd.s32 1, %s10
  $region7: #{decoder_forward.20} parent=0 // loop_footer_branch
    %9 = sbr.rel target = $region3
  $region8: #{decoder_forward.20} parent=0 // loop_exit
    _

// kernel: decoder_forward.23
$region0: #{decoder_forward.23}
  #allocation0 [shape = 'u32[]', space=smem, size = 0x4, offset = 0x4, fixed_abs, tag = 'smem constant byte address 0x4 - core index']
  #allocation1 [shape = 'u32[144,128]{1,0:T(1,128)}', space=vmem, size = 0x12000, scoped, tag = 'internal scratch']
  #allocation2 [shape = 'f32[16,64]{1,0:T(8,128)}', space=vmem, size = 0x2000, scoped, tag = 'scratch operand']
  %s0 = inlined_call_operand.vmem [shape: f32[16,32], index: 0, kind: input, shape index: {}]
  %s1 = inlined_call_operand.vmem [shape: f32[32,64], index: 1, kind: input, shape index: {}]
  %s2 = inlined_call_operand.vmem [shape: f32[16,64], index: 2, kind: output, shape index: {}]
  %s3 = sld [smem:[#allocation0]]
  $region26: #{decoder_forward.23} parent=0
    _
  %s5 = ssub.s32 1, %s3
  %s6 = scalar_select 0, %s5, %s3
  // Predicated region
  $region2: #{decoder_forward.23} parent=0 // pred_check
    _
  $region3: #{decoder_forward.23} parent=0 // pred_check_branch
    %8 = sbr.rel (0) target = $region5
  $region4: #{decoder_forward.23} parent=0 // pred_region
    _
  $region5: #{decoder_forward.23} parent=0 // pred_fallthru
    _
  // Predicated region
  $region6: #{decoder_forward.23} parent=0 // pred_check
    _
  $region7: #{decoder_forward.23} parent=0 // pred_check_branch
    %10 = sbr.rel (0) target = $region9
  $region8: #{decoder_forward.23} parent=0 // pred_region
    _
  $region9: #{decoder_forward.23} parent=0 // pred_fallthru
    _
  %p11 = scmp.eq.s32.totalorder 0, 0
  // Predicated region
  $region10: #{decoder_forward.23} parent=0 // pred_check
    %p12 = pneg %p11
  $region11: #{decoder_forward.23} parent=0 // pred_check_branch
    %14 = sbr.rel (%p12) target = $region13
  $region12: #{decoder_forward.23} parent=0 // pred_region
    %vm15 = vcmask 523264
    %16 = vst.msk [vmem:[#allocation2] sm:$0xff] %vm15, 0.0
    %17 = vst.msk [vmem:[#allocation2 + $0x8] sm:$0xff] %vm15, 0.0
  $region13: #{decoder_forward.23} parent=0 // pred_fallthru
    _
  %v18 = vld [vmem:[#allocation2] sm:$0xff]
  %v19 = vld [vmem:[#allocation2 + $0x8] sm:$0xff]
  %v20 = vld [vmem:[%s0] sm:$0xff]
  %v21 = vld [vmem:[%s0 + $0x8] sm:$0xff]
  %v22 = vld [vmem:[%s1] sm:$0xff]
  %v23 = vld [vmem:[%s1 + $0x8] sm:$0xff]
  %v24 = vld [vmem:[%s1 + $0x10] sm:$0xff]
  %v25 = vld [vmem:[%s1 + $0x18] sm:$0xff]
  %vm26 = vcmask 261120
  %v28 = vsel %vm26, %v20, 0
  %v31 = vsel %vm26, %v21, 0
  %33 = vmatprep.subr.mxu0 0.0
  %34 = vmatpush1.msra.mxu0 0.0
  %35 = vmatprep.subr.mxu0 0.0
  %36 = vmatpush1.msra.mxu0 0.0
  %37 = vmatprep.subr.mxu0 0.0
  %38 = vmatpush1.msra.mxu0 0.0
  %39 = vmatprep.subr.mxu0 0.0
  %40 = vmatpush1.msra.mxu0 0.0
  %41 = vmatprep.subr.mxu0 0.0
  %42 = vmatpush1.msra.mxu0 0.0
  %43 = vmatprep.subr.mxu0 0.0
  %44 = vmatpush1.msra.mxu0 0.0
  %45 = vmatprep.subr.mxu0 0.0
  %46 = vmatpush1.msra.mxu0 0.0
  %47 = vmatprep.subr.mxu0 0.0
  %48 = vmatpush1.msra.mxu0 0.0
  %49 = vmatprep.subr.mxu0 0.0
  %50 = vmatpush1.msra.mxu0 0.0
  %51 = vmatprep.subr.mxu0 0.0
  %52 = vmatpush1.msra.mxu0 0.0
  %53 = vmatprep.subr.mxu0 0.0
  %54 = vmatpush1.msra.mxu0 0.0
  %55 = vmatprep.subr.mxu0 0.0
  %56 = vmatpush1.msra.mxu0 0.0
  %57 = vmatprep.subr.mxu0 0.0
  %58 = vmatpush1.msra.mxu0 %v25
  %59 = vmatprep.subr.mxu0 0.0
  %60 = vmatpush1.msra.mxu0 %v24
  %61 = vmatprep.subr.mxu0 0.0
  %62 = vmatpush1.msra.mxu0 %v23
  %63 = vmatprep.subr.mxu0 0.0
  %64 = vmatpush1.msra.mxu0 %v22
  %65 = vmatprep.subr.mxu0 0.0
  %66 = vmatpush2.msra.mxu0 0.0
  %67 = vmatprep.subr.mxu0 0.0
  %68 = vmatpush2.msra.mxu0 0.0
  %69 = vmatprep.subr.mxu0 0.0
  %70 = vmatpush2.msra.mxu0 0.0
  %71 = vmatprep.subr.mxu0 0.0
  %72 = vmatpush2.msra.mxu0 0.0
  %73 = vmatprep.subr.mxu0 0.0
  %74 = vmatpush2.msra.mxu0 0.0
  %75 = vmatprep.subr.mxu0 0.0
  %76 = vmatpush2.msra.mxu0 0.0
  %77 = vmatprep.subr.mxu0 0.0
  %78 = vmatpush2.msra.mxu0 0.0
  %79 = vmatprep.subr.mxu0 0.0
  %80 = vmatpush2.msra.mxu0 0.0
  %81 = vmatprep.subr.mxu0 0.0
  %82 = vmatpush2.msra.mxu0 0.0
  %83 = vmatprep.subr.mxu0 0.0
  %84 = vmatpush2.msra.mxu0 0.0
  %85 = vmatprep.subr.mxu0 0.0
  %86 = vmatpush2.msra.mxu0 0.0
  %87 = vmatprep.subr.mxu0 0.0
  %88 = vmatpush2.msra.mxu0 0.0
  %89 = vmatprep.subr.mxu0 0.0
  %90 = vmatpush2.msra.mxu0 0.0
  %91 = vmatprep.subr.mxu0 0.0
  %92 = vmatpush2.msra.mxu0 0.0
  %93 = vmatprep.subr.mxu0 0.0
  %94 = vmatpush2.msra.mxu0 0.0
  %95 = vmatprep.subr.mxu0 0.0
  %96 = vmatpush2.msra.mxu0 0.0
  %97 = vmatprep.mubr.f32.mxu0 0.0
  %98 = vmatmul.mubr.f32.gmra.mxu0 %v28
  %v99 = vpop.f32.mrf.mxu0
  %v100 = vadd.f32 0.0, %v99
  %v101 = vpop.f32.mrf.mxu0
  %102 = vmatprep.mubr.f32.mxu0 0.0
  %103 = vmatmul.mubr.f32.gmra.mxu0 %v31
  %v104 = vpop.f32.mrf.mxu0
  %v105 = vadd.f32 0.0, %v104
  %v106 = vpop.f32.mrf.mxu0
  %107 = vdwg.mxu0
  %v108 = vadd.f32 %v18, %v100
  %v109 = vadd.f32 %v19, %v105
  %vm110 = vcmask 523264
  %111 = vst.msk [vmem:[#allocation2] sm:$0xff] %vm110, %v108
  %112 = vst.msk [vmem:[#allocation2 + $0x8] sm:$0xff] %vm110, %v109
  // Predicated region
  $region14: #{decoder_forward.23} parent=0 // pred_check
    %p113 = pneg %p11
  $region15: #{decoder_forward.23} parent=0 // pred_check_branch
    %115 = sbr.rel (%p113) target = $region17
  $region16: #{decoder_forward.23} parent=0 // pred_region
    %v116 = vld [vmem:[#allocation2] sm:$0xff]
    %v117 = vld [vmem:[#allocation2 + $0x8] sm:$0xff]
    %118 = vst.msk [vmem:[%s2] sm:$0xff] %vm110, %v116
    %119 = vst.msk [vmem:[%s2 + $0x8] sm:$0xff] %vm110, %v117
  $region17: #{decoder_forward.23} parent=0 // pred_fallthru
    _
  // Predicated region
  $region18: #{decoder_forward.23} parent=0 // pred_check
    _
  $region19: #{decoder_forward.23} parent=0 // pred_check_branch
    %121 = sbr.rel (0) target = $region21
  $region20: #{decoder_forward.23} parent=0 // pred_region
    _
  $region21: #{decoder_forward.23} parent=0 // pred_fallthru
    _
  // Predicated region
  $region22: #{decoder_forward.23} parent=0 // pred_check
    _
  $region23: #{decoder_forward.23} parent=0 // pred_check_branch
    %123 = sbr.rel (0) target = $region25
  $region24: #{decoder_forward.23} parent=0 // pred_region
    _
  $region25: #{decoder_forward.23} parent=0 // pred_fallthru
    _

// kernel: decoder_forward.26
$region0: #{decoder_forward.26}
  #allocation0 [shape = 'u32[]', space=smem, size = 0x4, offset = 0x4, fixed_abs, tag = 'smem constant byte address 0x4 - core index']
  #allocation1 [shape = 'u32[144,128]{1,0:T(1,128)}', space=vmem, size = 0x12000, scoped, tag = 'internal scratch']
  #allocation2 [shape = 'f32[16,128]{1,0:T(8,128)}', space=vmem, size = 0x2000, scoped, tag = 'scratch operand']
  %s0 = inlined_call_operand.vmem [shape: f32[16,32], index: 0, kind: input, shape index: {}]
  %s1 = inlined_call_operand.vmem [shape: f32[32,128], index: 1, kind: input, shape index: {}]
  %s2 = inlined_call_operand.vmem [shape: f32[1,128], index: 2, kind: input, shape index: {}]
  %s3 = inlined_call_operand.vmem [shape: f32[16,128], index: 3, kind: output, shape index: {}]
  %s4 = sld [smem:[#allocation0]]
  $region30: #{decoder_forward.26} parent=0
    _
  %s6 = ssub.s32 1, %s4
  %s7 = scalar_select 0, %s6, %s4
  // Predicated region
  $region2: #{decoder_forward.26} parent=0 // pred_check
    _
  $region3: #{decoder_forward.26} parent=0 // pred_check_branch
    %9 = sbr.rel (0) target = $region5
  $region4: #{decoder_forward.26} parent=0 // pred_region
    _
  $region5: #{decoder_forward.26} parent=0 // pred_fallthru
    _
  // Predicated region
  $region6: #{decoder_forward.26} parent=0 // pred_check
    _
  $region7: #{decoder_forward.26} parent=0 // pred_check_branch
    %11 = sbr.rel (0) target = $region9
  $region8: #{decoder_forward.26} parent=0 // pred_region
    _
  $region9: #{decoder_forward.26} parent=0 // pred_fallthru
    _
  // Predicated region
  $region10: #{decoder_forward.26} parent=0 // pred_check
    _
  $region11: #{decoder_forward.26} parent=0 // pred_check_branch
    %13 = sbr.rel (0) target = $region13
  $region12: #{decoder_forward.26} parent=0 // pred_region
    _
  $region13: #{decoder_forward.26} parent=0 // pred_fallthru
    _
  %p14 = scmp.eq.s32.totalorder 0, 0
  // Predicated region
  $region14: #{decoder_forward.26} parent=0 // pred_check
    %p15 = pneg %p14
  $region15: #{decoder_forward.26} parent=0 // pred_check_branch
    %17 = sbr.rel (%p15) target = $region17
  $region16: #{decoder_forward.26} parent=0 // pred_region
    %18 = vst [vmem:[#allocation2] sm:$0xff] 0.0
    %19 = vst [vmem:[#allocation2 + $0x8] sm:$0xff] 0.0
  $region17: #{decoder_forward.26} parent=0 // pred_fallthru
    _
  %v20 = vld [vmem:[#allocation2] sm:$0xff]
  %v21 = vld [vmem:[#allocation2 + $0x8] sm:$0xff]
  %v22 = vld [vmem:[%s0] sm:$0xff]
  %v23 = vld [vmem:[%s0 + $0x8] sm:$0xff]
  %v24 = vld [vmem:[%s1] sm:$0xff]
  %v25 = vld [vmem:[%s1 + $0x8] sm:$0xff]
  %v26 = vld [vmem:[%s1 + $0x10] sm:$0xff]
  %v27 = vld [vmem:[%s1 + $0x18] sm:$0xff]
  %vm28 = vcmask 261120
  %v30 = vsel %vm28, %v22, 0
  %v33 = vsel %vm28, %v23, 0
  %35 = vmatprep.subr.mxu0 0.0
  %36 = vmatpush1.msra.mxu0 0.0
  %37 = vmatprep.subr.mxu0 0.0
  %38 = vmatpush1.msra.mxu0 0.0
  %39 = vmatprep.subr.mxu0 0.0
  %40 = vmatpush1.msra.mxu0 0.0
  %41 = vmatprep.subr.mxu0 0.0
  %42 = vmatpush1.msra.mxu0 0.0
  %43 = vmatprep.subr.mxu0 0.0
  %44 = vmatpush1.msra.mxu0 0.0
  %45 = vmatprep.subr.mxu0 0.0
  %46 = vmatpush1.msra.mxu0 0.0
  %47 = vmatprep.subr.mxu0 0.0
  %48 = vmatpush1.msra.mxu0 0.0
  %49 = vmatprep.subr.mxu0 0.0
  %50 = vmatpush1.msra.mxu0 0.0
  %51 = vmatprep.subr.mxu0 0.0
  %52 = vmatpush1.msra.mxu0 0.0
  %53 = vmatprep.subr.mxu0 0.0
  %54 = vmatpush1.msra.mxu0 0.0
  %55 = vmatprep.subr.mxu0 0.0
  %56 = vmatpush1.msra.mxu0 0.0
  %57 = vmatprep.subr.mxu0 0.0
  %58 = vmatpush1.msra.mxu0 0.0
  %59 = vmatprep.subr.mxu0 0.0
  %60 = vmatpush1.msra.mxu0 %v27
  %61 = vmatprep.subr.mxu0 0.0
  %62 = vmatpush1.msra.mxu0 %v26
  %63 = vmatprep.subr.mxu0 0.0
  %64 = vmatpush1.msra.mxu0 %v25
  %65 = vmatprep.subr.mxu0 0.0
  %66 = vmatpush1.msra.mxu0 %v24
  %67 = vmatprep.subr.mxu0 0.0
  %68 = vmatpush2.msra.mxu0 0.0
  %69 = vmatprep.subr.mxu0 0.0
  %70 = vmatpush2.msra.mxu0 0.0
  %71 = vmatprep.subr.mxu0 0.0
  %72 = vmatpush2.msra.mxu0 0.0
  %73 = vmatprep.subr.mxu0 0.0
  %74 = vmatpush2.msra.mxu0 0.0
  %75 = vmatprep.subr.mxu0 0.0
  %76 = vmatpush2.msra.mxu0 0.0
  %77 = vmatprep.subr.mxu0 0.0
  %78 = vmatpush2.msra.mxu0 0.0
  %79 = vmatprep.subr.mxu0 0.0
  %80 = vmatpush2.msra.mxu0 0.0
  %81 = vmatprep.subr.mxu0 0.0
  %82 = vmatpush2.msra.mxu0 0.0
  %83 = vmatprep.subr.mxu0 0.0
  %84 = vmatpush2.msra.mxu0 0.0
  %85 = vmatprep.subr.mxu0 0.0
  %86 = vmatpush2.msra.mxu0 0.0
  %87 = vmatprep.subr.mxu0 0.0
  %88 = vmatpush2.msra.mxu0 0.0
  %89 = vmatprep.subr.mxu0 0.0
  %90 = vmatpush2.msra.mxu0 0.0
  %91 = vmatprep.subr.mxu0 0.0
  %92 = vmatpush2.msra.mxu0 0.0
  %93 = vmatprep.subr.mxu0 0.0
  %94 = vmatpush2.msra.mxu0 0.0
  %95 = vmatprep.subr.mxu0 0.0
  %96 = vmatpush2.msra.mxu0 0.0
  %97 = vmatprep.subr.mxu0 0.0
  %98 = vmatpush2.msra.mxu0 0.0
  %99 = vmatprep.mubr.f32.mxu0 0.0
  %100 = vmatmul.mubr.f32.gmra.mxu0 %v30
  %v101 = vpop.f32.mrf.mxu0
  %v102 = vadd.f32 0.0, %v101
  %v103 = vpop.f32.mrf.mxu0
  %104 = vmatprep.mubr.f32.mxu0 0.0
  %105 = vmatmul.mubr.f32.gmra.mxu0 %v33
  %v106 = vpop.f32.mrf.mxu0
  %v107 = vadd.f32 0.0, %v106
  %v108 = vpop.f32.mrf.mxu0
  %109 = vdwg.mxu0
  %v110 = vadd.f32 %v20, %v102
  %v111 = vadd.f32 %v21, %v107
  %112 = vst [vmem:[#allocation2] sm:$0xff] %v110
  %113 = vst [vmem:[#allocation2 + $0x8] sm:$0xff] %v111
  // Predicated region
  $region18: #{decoder_forward.26} parent=0 // pred_check
    %p114 = pneg %p14
  $region19: #{decoder_forward.26} parent=0 // pred_check_branch
    %116 = sbr.rel (%p114) target = $region21
  $region20: #{decoder_forward.26} parent=0 // pred_region
    %v117 = vld [vmem:[#allocation2] sm:$0xff]
    %v118 = vld [vmem:[#allocation2 + $0x8] sm:$0xff]
    %v119 = vld [vmem:[%s2] sm:$0x1]
    %v121 = vlaneseq
    %v122 = vshrl.u32 %v121, 7
    %v123 = vsub.s32 0, %v122
    %v124 = vrot.slane %v119, %v123
    %v126 = vadd.f32 %v117, %v124
    %v127 = vadd.f32 %v118, %v124
    %v128 = vmax.f32 %v126, 0.0
    %v129 = vmax.f32 %v127, 0.0
    %130 = vst [vmem:[%s3] sm:$0xff] %v128
    %131 = vst [vmem:[%s3 + $0x8] sm:$0xff] %v129
  $region21: #{decoder_forward.26} parent=0 // pred_fallthru
    _
  // Predicated region
  $region22: #{decoder_forward.26} parent=0 // pred_check
    _
  $region23: #{decoder_forward.26} parent=0 // pred_check_branch
    %133 = sbr.rel (0) target = $region25
  $region24: #{decoder_forward.26} parent=0 // pred_region
    _
  $region25: #{decoder_forward.26} parent=0 // pred_fallthru
    _
  // Predicated region
  $region26: #{decoder_forward.26} parent=0 // pred_check
    _
  $region27: #{decoder_forward.26} parent=0 // pred_check_branch
    %135 = sbr.rel (0) target = $region29
  $region28: #{decoder_forward.26} parent=0 // pred_region
    _
  $region29: #{decoder_forward.26} parent=0 // pred_fallthru
    _

// kernel: decoder_forward.37
$region0: #{decoder_forward.37}
  #allocation0 [shape = 'u32[]', space=smem, size = 0x4, offset = 0x4, fixed_abs, tag = 'smem constant byte address 0x4 - core index']
  #allocation1 [shape = 'u32[144,128]{1,0:T(1,128)}', space=vmem, size = 0x12000, scoped, tag = 'internal scratch']
  #allocation2 [shape = 'f32[16,64]{1,0:T(8,128)}', space=vmem, size = 0x2000, scoped, tag = 'scratch operand']
  %s0 = inlined_call_operand.vmem [shape: f32[16,32], index: 0, kind: input, shape index: {}]
  %s1 = inlined_call_operand.vmem [shape: f32[32,64], index: 1, kind: input, shape index: {}]
  %s2 = inlined_call_operand.hbm [shape: f32[16,64], index: 2, kind: output, shape index: {}]
  %s3 = sld [smem:[#allocation0]]
  $region26: #{decoder_forward.37} parent=0
    _
  %s5 = ssub.s32 1, %s3
  %s6 = scalar_select 0, %s5, %s3
  $region1: #{decoder_forward.37} parent=0
    #allocation3 [shape = 'u8[8192]{0}', space=vmem, size = 0x2000, scoped, tag = 'output window, operand 0, single buffered']
    #allocation4 [shape = 's32[1]{0}', space=sflag, size = 0x4, scoped, tag = 'scoped memory for decoder_forward.37']
    %7 = vsyncpa [#allocation4], 0
    // Predicated region
    $region2: #{decoder_forward.37} parent=1 // pred_check
      _
    $region3: #{decoder_forward.37} parent=1 // pred_check_branch
      %9 = sbr.rel (0) target = $region5
    $region4: #{decoder_forward.37} parent=1 // pred_region
      _
    $region5: #{decoder_forward.37} parent=1 // pred_fallthru
      _
    // Predicated region
    $region6: #{decoder_forward.37} parent=1 // pred_check
      _
    $region7: #{decoder_forward.37} parent=1 // pred_check_branch
      %11 = sbr.rel (0) target = $region9
    $region8: #{decoder_forward.37} parent=1 // pred_region
      _
    $region9: #{decoder_forward.37} parent=1 // pred_fallthru
      _
    %p12 = scmp.eq.s32.totalorder 0, 0
    // Predicated region
    $region10: #{decoder_forward.37} parent=1 // pred_check
      %p13 = pneg %p12
    $region11: #{decoder_forward.37} parent=1 // pred_check_branch
      %15 = sbr.rel (%p13) target = $region13
    $region12: #{decoder_forward.37} parent=1 // pred_region
      %vm16 = vcmask 523264
      %17 = vst.msk [vmem:[#allocation2] sm:$0xff] %vm16, 0.0
      %18 = vst.msk [vmem:[#allocation2 + $0x8] sm:$0xff] %vm16, 0.0
    $region13: #{decoder_forward.37} parent=1 // pred_fallthru
      _
    %v19 = vld [vmem:[#allocation2] sm:$0xff]
    %v20 = vld [vmem:[#allocation2 + $0x8] sm:$0xff]
    %v21 = vld [vmem:[%s0] sm:$0xff]
    %v22 = vld [vmem:[%s0 + $0x8] sm:$0xff]
    %v23 = vld [vmem:[%s1] sm:$0xff]
    %v24 = vld [vmem:[%s1 + $0x8] sm:$0xff]
    %v25 = vld [vmem:[%s1 + $0x10] sm:$0xff]
    %v26 = vld [vmem:[%s1 + $0x18] sm:$0xff]
    %vm27 = vcmask 261120
    %v29 = vsel %vm27, %v21, 0
    %v32 = vsel %vm27, %v22, 0
    %34 = vmatprep.subr.mxu0 0.0
    %35 = vmatpush1.msra.mxu0 0.0
    %36 = vmatprep.subr.mxu0 0.0
    %37 = vmatpush1.msra.mxu0 0.0
    %38 = vmatprep.subr.mxu0 0.0
    %39 = vmatpush1.msra.mxu0 0.0
    %40 = vmatprep.subr.mxu0 0.0
    %41 = vmatpush1.msra.mxu0 0.0
    %42 = vmatprep.subr.mxu0 0.0
    %43 = vmatpush1.msra.mxu0 0.0
    %44 = vmatprep.subr.mxu0 0.0
    %45 = vmatpush1.msra.mxu0 0.0
    %46 = vmatprep.subr.mxu0 0.0
    %47 = vmatpush1.msra.mxu0 0.0
    %48 = vmatprep.subr.mxu0 0.0
    %49 = vmatpush1.msra.mxu0 0.0
    %50 = vmatprep.subr.mxu0 0.0
    %51 = vmatpush1.msra.mxu0 0.0
    %52 = vmatprep.subr.mxu0 0.0
    %53 = vmatpush1.msra.mxu0 0.0
    %54 = vmatprep.subr.mxu0 0.0
    %55 = vmatpush1.msra.mxu0 0.0
    %56 = vmatprep.subr.mxu0 0.0
    %57 = vmatpush1.msra.mxu0 0.0
    %58 = vmatprep.subr.mxu0 0.0
    %59 = vmatpush1.msra.mxu0 %v26
    %60 = vmatprep.subr.mxu0 0.0
    %61 = vmatpush1.msra.mxu0 %v25
    %62 = vmatprep.subr.mxu0 0.0
    %63 = vmatpush1.msra.mxu0 %v24
    %64 = vmatprep.subr.mxu0 0.0
    %65 = vmatpush1.msra.mxu0 %v23
    %66 = vmatprep.subr.mxu0 0.0
    %67 = vmatpush2.msra.mxu0 0.0
    %68 = vmatprep.subr.mxu0 0.0
    %69 = vmatpush2.msra.mxu0 0.0
    %70 = vmatprep.subr.mxu0 0.0
    %71 = vmatpush2.msra.mxu0 0.0
    %72 = vmatprep.subr.mxu0 0.0
    %73 = vmatpush2.msra.mxu0 0.0
    %74 = vmatprep.subr.mxu0 0.0
    %75 = vmatpush2.msra.mxu0 0.0
    %76 = vmatprep.subr.mxu0 0.0
    %77 = vmatpush2.msra.mxu0 0.0
    %78 = vmatprep.subr.mxu0 0.0
    %79 = vmatpush2.msra.mxu0 0.0
    %80 = vmatprep.subr.mxu0 0.0
    %81 = vmatpush2.msra.mxu0 0.0
    %82 = vmatprep.subr.mxu0 0.0
    %83 = vmatpush2.msra.mxu0 0.0
    %84 = vmatprep.subr.mxu0 0.0
    %85 = vmatpush2.msra.mxu0 0.0
    %86 = vmatprep.subr.mxu0 0.0
    %87 = vmatpush2.msra.mxu0 0.0
    %88 = vmatprep.subr.mxu0 0.0
    %89 = vmatpush2.msra.mxu0 0.0
    %90 = vmatprep.subr.mxu0 0.0
    %91 = vmatpush2.msra.mxu0 0.0
    %92 = vmatprep.subr.mxu0 0.0
    %93 = vmatpush2.msra.mxu0 0.0
    %94 = vmatprep.subr.mxu0 0.0
    %95 = vmatpush2.msra.mxu0 0.0
    %96 = vmatprep.subr.mxu0 0.0
    %97 = vmatpush2.msra.mxu0 0.0
    %98 = vmatprep.mubr.f32.mxu0 0.0
    %99 = vmatmul.mubr.f32.gmra.mxu0 %v29
    %v100 = vpop.f32.mrf.mxu0
    %v101 = vadd.f32 0.0, %v100
    %v102 = vpop.f32.mrf.mxu0
    %103 = vmatprep.mubr.f32.mxu0 0.0
    %104 = vmatmul.mubr.f32.gmra.mxu0 %v32
    %v105 = vpop.f32.mrf.mxu0
    %v106 = vadd.f32 0.0, %v105
    %v107 = vpop.f32.mrf.mxu0
    %108 = vdwg.mxu0
    %v109 = vadd.f32 %v19, %v101
    %v110 = vadd.f32 %v20, %v106
    %vm111 = vcmask 523264
    %112 = vst.msk [vmem:[#allocation2] sm:$0xff] %vm111, %v109
    %113 = vst.msk [vmem:[#allocation2 + $0x8] sm:$0xff] %vm111, %v110
    // Predicated region
    $region14: #{decoder_forward.37} parent=1 // pred_check
      %p114 = pneg %p12
    $region15: #{decoder_forward.37} parent=1 // pred_check_branch
      %116 = sbr.rel (%p114) target = $region17
    $region16: #{decoder_forward.37} parent=1 // pred_region
      %v117 = vld [vmem:[#allocation2] sm:$0xff]
      %v118 = vld [vmem:[#allocation2 + $0x8] sm:$0xff]
      %119 = vst.msk [vmem:[#allocation3] sm:$0xff] %vm111, %v117
      %120 = vst.msk [vmem:[#allocation3 + $0x8] sm:$0xff] %vm111, %v118
    $region17: #{decoder_forward.37} parent=1 // pred_fallthru
      _
    // Predicated region
    $region18: #{decoder_forward.37} parent=1 // pred_check
      _
    $region19: #{decoder_forward.37} parent=1 // pred_check_branch
      %122 = sbr.rel (0) target = $region21
    $region20: #{decoder_forward.37} parent=1 // pred_region
      %s124 = ssub.s32 256, 256
      %125 = vsyncadd [#allocation4], %s124
      %s126 = sshll.u32 [#allocation3], 4
      %s127 = int_to_ptr.vmem [resolvable:$true] %s126
      %132 = dma.vmem_to_hbm [thread:$0]  %s127, 256, %s2, [#allocation4], 128, 128, 8
    $region21: #{decoder_forward.37} parent=1 // pred_fallthru
      _
    // Predicated region
    $region22: #{decoder_forward.37} parent=1 // pred_check
      _
    $region23: #{decoder_forward.37} parent=1 // pred_check_branch
      %134 = sbr.rel (0) target = $region25
    $region24: #{decoder_forward.37} parent=1 // pred_region
      %135 = dma.done [#allocation4], 256
    $region25: #{decoder_forward.37} parent=1 // pred_fallthru
      _
    %136 = vsyncpa [#allocation4], 1

// kernel: decoder_forward.24
$region0: #{decoder_forward.24}
  #allocation0 [shape = 'u32[]', space=smem, size = 0x4, offset = 0x4, fixed_abs, tag = 'smem constant byte address 0x4 - core index']
  #allocation1 [shape = 'u32[144,128]{1,0:T(1,128)}', space=vmem, size = 0x12000, scoped, tag = 'internal scratch']
  #allocation2 [shape = 'f32[4,8,1]{2,1,0:T(8,128)}', space=vmem, size = 0x4000, scoped, tag = 'scratch operand']
  #allocation3 [shape = 'f32[4,8,1]{2,1,0:T(8,128)}', space=vmem, size = 0x4000, scoped, tag = 'scratch operand']
  #allocation4 [shape = 'f32[4,8,8]{2,1,0:T(8,128)}', space=vmem, size = 0x4000, scoped, tag = 'scratch operand']
  %s0 = inlined_call_operand.vmem [shape: f32[2,4,8,8], index: 0, kind: input, shape index: {}]
  %s1 = inlined_call_operand.vmem [shape: f32[2,4,8,8], index: 1, kind: input, shape index: {}]
  %s2 = inlined_call_operand.vmem [shape: f32[2,4,8,8], index: 2, kind: input, shape index: {}]
  %s3 = inlined_call_operand.vmem [shape: f32[2,4,8,8], index: 3, kind: output, shape index: {}]
  %s4 = sld [smem:[#allocation0]]
  $region53: #{decoder_forward.24} parent=0
    _
  %s6 = ssub.s32 1, %s4
  %s7 = scalar_select 0, %s6, %s4
  loop: start=0, step=1, limit=4
  $region2: #{decoder_forward.24} parent=0 // loop_pre_header
    _
  $region3: #{decoder_forward.24} parent=0 // loop_header
    %s9 = sphi 0, %s13
    %p10 = scmp.ge.s32.totalorder %s9, 4
    %s16 = sphi 0, %s35
    %s17 = sphi 0, %s31
    %s18 = sphi 0, %s27
    %s19 = sphi 0, %s16
    %s20 = sphi 0, %s17
    %s21 = sphi 0, %s18
    %s22 = sphi 0, %s19
    %s23 = sphi 0, %s20
    %s24 = sphi 0, %s21
    %s40 = sphi 0, %s42
    %s43 = sphi 0, %s40
    %s44 = sphi 0, %s43
    %s60 = sphi 0, %s44
    %s68 = sphi 0, %s70
    %s71 = sphi 0, %s68
    %s72 = sphi 0, %s71
    %s88 = sphi 0, %s72
    %s96 = sphi 0, %s98
    %s99 = sphi 0, %s96
    %s100 = sphi 0, %s99
    %s116 = sphi 0, %s100
    %s124 = sphi 0, %s126
    %s127 = sphi 0, %s124
    %s128 = sphi 0, %s127
    %s144 = sphi 0, %s128
  $region4: #{decoder_forward.24} parent=0 // loop_header_branch
    %12 = sbr.rel (%p10) target = $region8
  $region5: #{decoder_forward.24} parent=0 // loop_body
    %s14 = ssub.s32 %s9, 1
    %s15 = ssub.s32 %s9, 2
    %s25 = sadd.s32 1, %s18
    %p26 = scmp.ge.s32.totalorder %s25, 1
    %s27 = scalar_select %p26, 0, %s25
    %s28 = sadd.s32 1, %s17
    %s29 = scalar_select %p26, %s28, %s17
    %p30 = scmp.ge.s32.totalorder %s29, 1
    %s31 = scalar_select %p30, 0, %s29
    %s32 = sadd.s32 1, %s16
    %s33 = scalar_select %p30, %s32, %s16
    %p34 = scmp.ge.s32.totalorder %s33, 2
    %s35 = scalar_select %p34, 0, %s33
    %s36 = ssub.s32 %s16, %s35
    %s37 = ssub.s32 %s17, %s31
    %s38 = sor.u32 %s36, %s37
    %p39 = scmp.eq.s32.totalorder %s38, 0
    %s41 = sadd.s32 %s40, 1
    %s42 = scalar_select %p39, %s40, %s41
    %p45 = pneg %p39
    %p46 = scmp.eq.s32.totalorder %s9, 1
    %p47 = por %p45, %p46
    %p48 = scmp.ne.s32.totalorder %s40, %s43
    %p49 = scmp.eq.s32.totalorder %s9, 0
    %p50 = por %p48, %p49
    %p51 = scmp.ne.s32.totalorder %s40, %s43
    %p52 = scmp.eq.s32.totalorder %s14, 1
    %p53 = por %p51, %p52
    %p54 = scmp.ne.s32.totalorder %s43, %s44
    %p55 = scmp.eq.s32.totalorder %s14, 0
    %p56 = por %p54, %p55
    %p57 = scmp.ne.s32.totalorder %s43, %s44
    %p58 = scmp.eq.s32.totalorder %s15, 1
    %p59 = por %p57, %p58
    %p61 = scmp.ne.s32.totalorder %s44, %s60
    %p62 = scmp.eq.s32.totalorder %s15, 0
    %p63 = por %p61, %p62
    %s64 = ssub.s32 %s16, %s35
    %s65 = ssub.s32 %s18, %s27
    %s66 = sor.u32 %s64, %s65
    %p67 = scmp.eq.s32.totalorder %s66, 0
    %s69 = sadd.s32 %s68, 1
    %s70 = scalar_select %p67, %s68, %s69
    %p73 = pneg %p67
    %p74 = scmp.eq.s32.totalorder %s9, 1
    %p75 = por %p73, %p74
    %p76 = scmp.ne.s32.totalorder %s68, %s71
    %p77 = scmp.eq.s32.totalorder %s9, 0
    %p78 = por %p76, %p77
    %p79 = scmp.ne.s32.totalorder %s68, %s71
    %p80 = scmp.eq.s32.totalorder %s14, 1
    %p81 = por %p79, %p80
    %p82 = scmp.ne.s32.totalorder %s71, %s72
    %p83 = scmp.eq.s32.totalorder %s14, 0
    %p84 = por %p82, %p83
    %p85 = scmp.ne.s32.totalorder %s71, %s72
    %p86 = scmp.eq.s32.totalorder %s15, 1
    %p87 = por %p85, %p86
    %p89 = scmp.ne.s32.totalorder %s72, %s88
    %p90 = scmp.eq.s32.totalorder %s15, 0
    %p91 = por %p89, %p90
    %s92 = ssub.s32 %s16, %s35
    %s93 = ssub.s32 %s18, %s27
    %s94 = sor.u32 %s92, %s93
    %p95 = scmp.eq.s32.totalorder %s94, 0
    %s97 = sadd.s32 %s96, 1
    %s98 = scalar_select %p95, %s96, %s97
    %p101 = pneg %p95
    %p102 = scmp.eq.s32.totalorder %s9, 1
    %p103 = por %p101, %p102
    %p104 = scmp.ne.s32.totalorder %s96, %s99
    %p105 = scmp.eq.s32.totalorder %s9, 0
    %p106 = por %p104, %p105
    %p107 = scmp.ne.s32.totalorder %s96, %s99
    %p108 = scmp.eq.s32.totalorder %s14, 1
    %p109 = por %p107, %p108
    %p110 = scmp.ne.s32.totalorder %s99, %s100
    %p111 = scmp.eq.s32.totalorder %s14, 0
    %p112 = por %p110, %p111
    %p113 = scmp.ne.s32.totalorder %s99, %s100
    %p114 = scmp.eq.s32.totalorder %s15, 1
    %p115 = por %p113, %p114
    %p117 = scmp.ne.s32.totalorder %s100, %s116
    %p118 = scmp.eq.s32.totalorder %s15, 0
    %p119 = por %p117, %p118
    %s120 = ssub.s32 %s16, %s35
    %s121 = ssub.s32 %s17, %s31
    %s122 = sor.u32 %s120, %s121
    %p123 = scmp.eq.s32.totalorder %s122, 0
    %s125 = sadd.s32 %s124, 1
    %s126 = scalar_select %p123, %s124, %s125
    %p129 = pneg %p123
    %p130 = scmp.eq.s32.totalorder %s9, 1
    %p131 = por %p129, %p130
    %p132 = scmp.ne.s32.totalorder %s124, %s127
    %p133 = scmp.eq.s32.totalorder %s9, 0
    %p134 = por %p132, %p133
    %p135 = scmp.ne.s32.totalorder %s124, %s127
    %p136 = scmp.eq.s32.totalorder %s14, 1
    %p137 = por %p135, %p136
    %p138 = scmp.ne.s32.totalorder %s127, %s128
    %p139 = scmp.eq.s32.totalorder %s14, 0
    %p140 = por %p138, %p139
    %p141 = scmp.ne.s32.totalorder %s127, %s128
    %p142 = scmp.eq.s32.totalorder %s15, 1
    %p143 = por %p141, %p142
    %p145 = scmp.ne.s32.totalorder %s128, %s144
    %p146 = scmp.eq.s32.totalorder %s15, 0
    %p147 = por %p145, %p146
    %p148 = scmp.le.s32.totalorder 1, %s9
    %p149 = scmp.lt.s32.totalorder %s9, 3
    %p150 = pnand %p148, %p149
    %p151 = pneg %p150
    // Predicated region
    $region9: #{decoder_forward.24} parent=5 // pred_check
      _
    $region10: #{decoder_forward.24} parent=5 // pred_check_branch
      %153 = sbr.rel (%p150) target = $region12
    $region11: #{decoder_forward.24} parent=5 // pred_region
      %s154 = ssub.s32 %s9, 1
    $region12: #{decoder_forward.24} parent=5 // pred_fallthru
      _
    %p155 = scmp.lt.s32.totalorder %s9, 2
    // Predicated region
    $region13: #{decoder_forward.24} parent=5 // pred_check
      %p156 = pneg %p155
    $region14: #{decoder_forward.24} parent=5 // pred_check_branch
      %158 = sbr.rel (%p156) target = $region16
    $region15: #{decoder_forward.24} parent=5 // pred_region
      // Predicated region
      $region17: #{decoder_forward.24} parent=15 // pred_check
        %p159 = pneg %p50
      $region18: #{decoder_forward.24} parent=15 // pred_check_branch
        %161 = sbr.rel (%p159) target = $region20
      $region19: #{decoder_forward.24} parent=15 // pred_region
        %p162 = scmp.lt.s32.totalorder %s16, 1
        %s163 = scalar_select %p162, %s16, 1
        %p164 = scmp.lt.s32.totalorder %s17, 0
        %s165 = scalar_select %p164, %s17, 0
        %s166 = smul.addr %s163, 4
        %s167 = sadd.s32 %s165, %s166
        %s168 = smul.addr %s167, 8
        %s169 = scalar_lea.vmem %s0, %s168
      $region20: #{decoder_forward.24} parent=15 // pred_fallthru
        _
      // Predicated region
      $region21: #{decoder_forward.24} parent=15 // pred_check
        %p170 = pneg %p78
      $region22: #{decoder_forward.24} parent=15 // pred_check_branch
        %172 = sbr.rel (%p170) target = $region24
      $region23: #{decoder_forward.24} parent=15 // pred_region
        %p173 = scmp.lt.s32.totalorder %s16, 1
        %s174 = scalar_select %p173, %s16, 1
        %p175 = scmp.lt.s32.totalorder %s18, 0
        %s176 = scalar_select %p175, %s18, 0
        %s177 = smul.addr %s174, 4
        %s178 = sadd.s32 %s176, %s177
        %s179 = smul.addr %s178, 8
        %s180 = scalar_lea.vmem %s1, %s179
      $region24: #{decoder_forward.24} parent=15 // pred_fallthru
        _
      // Predicated region
      $region25: #{decoder_forward.24} parent=15 // pred_check
        %p181 = pneg %p106
      $region26: #{decoder_forward.24} parent=15 // pred_check_branch
        %183 = sbr.rel (%p181) target = $region28
      $region27: #{decoder_forward.24} parent=15 // pred_region
        %p184 = scmp.lt.s32.totalorder %s16, 1
        %s185 = scalar_select %p184, %s16, 1
        %p186 = scmp.lt.s32.totalorder %s18, 0
        %s187 = scalar_select %p186, %s18, 0
        %s188 = smul.addr %s185, 4
        %s189 = sadd.s32 %s187, %s188
        %s190 = smul.addr %s189, 8
        %s191 = scalar_lea.vmem %s2, %s190
      $region28: #{decoder_forward.24} parent=15 // pred_fallthru
        _
    $region16: #{decoder_forward.24} parent=5 // pred_fallthru
      _
    %p192 = scmp.le.s32.totalorder 1, %s9
    %p193 = scmp.lt.s32.totalorder %s9, 3
    %p194 = pnand %p192, %p193
    %p195 = pneg %p194
    // Predicated region
    $region29: #{decoder_forward.24} parent=5 // pred_check
      _
    $region30: #{decoder_forward.24} parent=5 // pred_check_branch
      %197 = sbr.rel (%p194) target = $region32
    $region31: #{decoder_forward.24} parent=5 // pred_region
      %s198 = ssub.s32 %s9, 1
      %p199 = scmp.lt.s32.totalorder %s19, 1
      %s200 = scalar_select %p199, %s19, 1
      %p201 = scmp.lt.s32.totalorder %s20, 0
      %s202 = scalar_select %p201, %s20, 0
      %s203 = smul.addr %s200, 4
      %s204 = sadd.s32 %s202, %s203
      %s205 = smul.addr %s204, 8
      %s206 = scalar_lea.vmem %s0, %s205
      %p207 = pneg %p56
      %p208 = pneg %p53
      %p209 = scmp.lt.s32.totalorder %s19, 1
      %s210 = scalar_select %p209, %s19, 1
      %p211 = scmp.lt.s32.totalorder %s21, 0
      %s212 = scalar_select %p211, %s21, 0
      %s213 = smul.addr %s210, 4
      %s214 = sadd.s32 %s212, %s213
      %s215 = smul.addr %s214, 8
      %s216 = scalar_lea.vmem %s1, %s215
      %p217 = pneg %p84
      %p218 = pneg %p81
      %p219 = scmp.lt.s32.totalorder %s19, 1
      %s220 = scalar_select %p219, %s19, 1
      %p221 = scmp.lt.s32.totalorder %s21, 0
      %s222 = scalar_select %p221, %s21, 0
      %s223 = smul.addr %s220, 4
      %s224 = sadd.s32 %s222, %s223
      %s225 = smul.addr %s224, 8
      %s226 = scalar_lea.vmem %s2, %s225
      %p227 = pneg %p112
      %p228 = pneg %p109
      %p229 = pneg %p140
      %p230 = pneg %p137
      %p231 = scmp.lt.s32.totalorder %s19, 1
      %s232 = scalar_select %p231, %s19, 1
      %p233 = scmp.lt.s32.totalorder %s20, 0
      %s234 = scalar_select %p233, %s20, 0
      %s235 = smul.addr %s232, 4
      %s236 = sadd.s32 %s234, %s235
      %s237 = smul.addr %s236, 8
      %s238 = scalar_lea.vmem %s3, %s237
      %p239 = scmp.lt.s32.totalorder %s19, 1
      %s240 = scalar_select %p239, %s19, 1
      %p241 = scmp.lt.s32.totalorder %s20, 0
      %s242 = scalar_select %p241, %s20, 0
      %s243 = smul.addr %s240, 4
      %s244 = sadd.s32 %s242, %s243
      %s245 = smul.addr %s244, 8
      %s246 = scalar_lea.vmem %s0, %s245
      %p247 = scmp.lt.s32.totalorder %s19, 1
      %s248 = scalar_select %p247, %s19, 1
      %p249 = scmp.lt.s32.totalorder %s21, 0
      %s250 = scalar_select %p249, %s21, 0
      %s251 = smul.addr %s248, 4
      %s252 = sadd.s32 %s250, %s251
      %s253 = smul.addr %s252, 8
      %s254 = scalar_lea.vmem %s1, %s253
      %p255 = scmp.lt.s32.totalorder %s19, 1
      %s256 = scalar_select %p255, %s19, 1
      %p257 = scmp.lt.s32.totalorder %s21, 0
      %s258 = scalar_select %p257, %s21, 0
      %s259 = smul.addr %s256, 4
      %s260 = sadd.s32 %s258, %s259
      %s261 = smul.addr %s260, 8
      %s262 = scalar_lea.vmem %s2, %s261
      %p263 = scmp.lt.s32.totalorder %s19, 1
      %s264 = scalar_select %p263, %s19, 1
      %p265 = scmp.lt.s32.totalorder %s20, 0
      %s266 = scalar_select %p265, %s20, 0
      %s267 = smul.addr %s264, 4
      %s268 = sadd.s32 %s266, %s267
      %s269 = smul.addr %s268, 8
      %s270 = scalar_lea.vmem %s3, %s269
      %p271 = scmp.eq.s32.totalorder %s21, 0
      // Predicated region
      $region33: #{decoder_forward.24} parent=31 // pred_check
        %p272 = pneg %p271
      $region34: #{decoder_forward.24} parent=31 // pred_check_branch
        %274 = sbr.rel (%p272) target = $region36
      $region35: #{decoder_forward.24} parent=31 // pred_region
        %vm275 = vcmask 7168
        %276 = vst.msk [vmem:[#allocation2] sm:$0xff] %vm275, -inf
        %277 = vst.msk [vmem:[#allocation2 + $0x8] sm:$0xff] %vm275, -inf
        %278 = vst.msk [vmem:[#allocation2 + $0x10] sm:$0xff] %vm275, -inf
        %279 = vst.msk [vmem:[#allocation2 + $0x18] sm:$0xff] %vm275, -inf
        %280 = vst.msk [vmem:[#allocation3] sm:$0xff] %vm275, 0.0
        %281 = vst.msk [vmem:[#allocation3 + $0x8] sm:$0xff] %vm275, 0.0
        %282 = vst.msk [vmem:[#allocation3 + $0x10] sm:$0xff] %vm275, 0.0
        %283 = vst.msk [vmem:[#allocation3 + $0x18] sm:$0xff] %vm275, 0.0
        %vm284 = vcmask 64512
        %285 = vst.msk [vmem:[#allocation4] sm:$0xff] %vm284, 0.0
        %286 = vst.msk [vmem:[#allocation4 + $0x8] sm:$0xff] %vm284, 0.0
        %287 = vst.msk [vmem:[#allocation4 + $0x10] sm:$0xff] %vm284, 0.0
        %288 = vst.msk [vmem:[#allocation4 + $0x18] sm:$0xff] %vm284, 0.0
      $region36: #{decoder_forward.24} parent=31 // pred_fallthru
        _
      %v289 = vld [vmem:[%s246] sm:$0xff]
      %v290 = vld [vmem:[%s246 + $0x8] sm:$0xff]
      %v291 = vld [vmem:[%s246 + $0x10] sm:$0xff]
      %v292 = vld [vmem:[%s246 + $0x18] sm:$0xff]
      %v293 = vld [vmem:[%s254] sm:$0xff]
      %v294 = vld [vmem:[%s254 + $0x8] sm:$0xff]
      %v295 = vld [vmem:[%s254 + $0x10] sm:$0xff]
      %v296 = vld [vmem:[%s254 + $0x18] sm:$0xff]
      %v297 = vld [vmem:[%s262] sm:$0xff]
      %v298 = vld [vmem:[%s262 + $0x8] sm:$0xff]
      %v299 = vld [vmem:[%s262 + $0x10] sm:$0xff]
      %v300 = vld [vmem:[%s262 + $0x18] sm:$0xff]
      %vm301 = vcmask 64512
      %v303 = vsel %vm301, %v289, 0
      %v306 = vsel %vm301, %v293, 0
      %308 = vmatprep.subr.mxu0 0.0
      %309 = vmatpush1.xpose.msra.mxu0 0.0
      %310 = vmatprep.subr.mxu0 0.0
      %311 = vmatpush1.xpose.msra.mxu0 0.0
      %312 = vmatprep.subr.mxu0 0.0
      %313 = vmatpush1.xpose.msra.mxu0 0.0
      %314 = vmatprep.subr.mxu0 0.0
      %315 = vmatpush1.xpose.msra.mxu0 0.0
      %316 = vmatprep.subr.mxu0 0.0
      %317 = vmatpush1.xpose.msra.mxu0 0.0
      %318 = vmatprep.subr.mxu0 0.0
      %319 = vmatpush1.xpose.msra.mxu0 0.0
      %320 = vmatprep.subr.mxu0 0.0
      %321 = vmatpush1.xpose.msra.mxu0 0.0
      %322 = vmatprep.subr.mxu0 0.0
      %323 = vmatpush1.xpose.msra.mxu0 0.0
      %324 = vmatprep.subr.mxu0 0.0
      %325 = vmatpush1.xpose.msra.mxu0 0.0
      %326 = vmatprep.subr.mxu0 0.0
      %327 = vmatpush1.xpose.msra.mxu0 0.0
      %328 = vmatprep.subr.mxu0 0.0
      %329 = vmatpush1.xpose.msra.mxu0 0.0
      %330 = vmatprep.subr.mxu0 0.0
      %331 = vmatpush1.xpose.msra.mxu0 0.0
      %332 = vmatprep.subr.mxu0 0.0
      %333 = vmatpush1.xpose.msra.mxu0 0.0
      %334 = vmatprep.subr.mxu0 0.0
      %335 = vmatpush1.xpose.msra.mxu0 0.0
      %336 = vmatprep.subr.mxu0 0.0
      %337 = vmatpush1.xpose.msra.mxu0 0.0
      %338 = vmatprep.subr.mxu0 0.0
      %339 = vmatpush1.xpose.msra.mxu0 %v306
      %340 = vmatprep.subr.mxu0 0.0
      %341 = vmatpush2.xpose.msra.mxu0 0.0
      %342 = vmatprep.subr.mxu0 0.0
      %343 = vmatpush2.xpose.msra.mxu0 0.0
      %344 = vmatprep.subr.mxu0 0.0
      %345 = vmatpush2.xpose.msra.mxu0 0.0
      %346 = vmatprep.subr.mxu0 0.0
      %347 = vmatpush2.xpose.msra.mxu0 0.0
      %348 = vmatprep.subr.mxu0 0.0
      %349 = vmatpush2.xpose.msra.mxu0 0.0
      %350 = vmatprep.subr.mxu0 0.0
      %351 = vmatpush2.xpose.msra.mxu0 0.0
      %352 = vmatprep.subr.mxu0 0.0
      %353 = vmatpush2.xpose.msra.mxu0 0.0
      %354 = vmatprep.subr.mxu0 0.0
      %355 = vmatpush2.xpose.msra.mxu0 0.0
      %356 = vmatprep.subr.mxu0 0.0
      %357 = vmatpush2.xpose.msra.mxu0 0.0
      %358 = vmatprep.subr.mxu0 0.0
      %359 = vmatpush2.xpose.msra.mxu0 0.0
      %360 = vmatprep.subr.mxu0 0.0
      %361 = vmatpush2.xpose.msra.mxu0 0.0
      %362 = vmatprep.subr.mxu0 0.0
      %363 = vmatpush2.xpose.msra.mxu0 0.0
      %364 = vmatprep.subr.mxu0 0.0
      %365 = vmatpush2.xpose.msra.mxu0 0.0
      %366 = vmatprep.subr.mxu0 0.0
      %367 = vmatpush2.xpose.msra.mxu0 0.0
      %368 = vmatprep.subr.mxu0 0.0
      %369 = vmatpush2.xpose.msra.mxu0 0.0
      %370 = vmatprep.subr.mxu0 0.0
      %371 = vmatpush2.xpose.msra.mxu0 0.0
      %372 = vmatprep.mubr.f32.mxu0 0.0
      %373 = vmatmul.mubr.f32.gmra.mxu0 %v303
      %v374 = vpop.f32.mrf.mxu0
      %v375 = vadd.f32 0.0, %v374
      %v376 = vpop.f32.mrf.mxu0
      %377 = vdwg.mxu0
      %v379 = vsel %vm301, %v290, 0
      %v382 = vsel %vm301, %v294, 0
      %384 = vmatprep.subr.mxu0 0.0
      %385 = vmatpush1.xpose.msra.mxu0 0.0
      %386 = vmatprep.subr.mxu0 0.0
      %387 = vmatpush1.xpose.msra.mxu0 0.0
      %388 = vmatprep.subr.mxu0 0.0
      %389 = vmatpush1.xpose.msra.mxu0 0.0
      %390 = vmatprep.subr.mxu0 0.0
      %391 = vmatpush1.xpose.msra.mxu0 0.0
      %392 = vmatprep.subr.mxu0 0.0
      %393 = vmatpush1.xpose.msra.mxu0 0.0
      %394 = vmatprep.subr.mxu0 0.0
      %395 = vmatpush1.xpose.msra.mxu0 0.0
      %396 = vmatprep.subr.mxu0 0.0
      %397 = vmatpush1.xpose.msra.mxu0 0.0
      %398 = vmatprep.subr.mxu0 0.0
      %399 = vmatpush1.xpose.msra.mxu0 0.0
      %400 = vmatprep.subr.mxu0 0.0
      %401 = vmatpush1.xpose.msra.mxu0 0.0
      %402 = vmatprep.subr.mxu0 0.0
      %403 = vmatpush1.xpose.msra.mxu0 0.0
      %404 = vmatprep.subr.mxu0 0.0
      %405 = vmatpush1.xpose.msra.mxu0 0.0
      %406 = vmatprep.subr.mxu0 0.0
      %407 = vmatpush1.xpose.msra.mxu0 0.0
      %408 = vmatprep.subr.mxu0 0.0
      %409 = vmatpush1.xpose.msra.mxu0 0.0
      %410 = vmatprep.subr.mxu0 0.0
      %411 = vmatpush1.xpose.msra.mxu0 0.0
      %412 = vmatprep.subr.mxu0 0.0
      %413 = vmatpush1.xpose.msra.mxu0 0.0
      %414 = vmatprep.subr.mxu0 0.0
      %415 = vmatpush1.xpose.msra.mxu0 %v382
      %416 = vmatprep.subr.mxu0 0.0
      %417 = vmatpush2.xpose.msra.mxu0 0.0
      %418 = vmatprep.subr.mxu0 0.0
      %419 = vmatpush2.xpose.msra.mxu0 0.0
      %420 = vmatprep.subr.mxu0 0.0
      %421 = vmatpush2.xpose.msra.mxu0 0.0
      %422 = vmatprep.subr.mxu0 0.0
      %423 = vmatpush2.xpose.msra.mxu0 0.0
      %424 = vmatprep.subr.mxu0 0.0
      %425 = vmatpush2.xpose.msra.mxu0 0.0
      %426 = vmatprep.subr.mxu0 0.0
      %427 = vmatpush2.xpose.msra.mxu0 0.0
      %428 = vmatprep.subr.mxu0 0.0
      %429 = vmatpush2.xpose.msra.mxu0 0.0
      %430 = vmatprep.subr.mxu0 0.0
      %431 = vmatpush2.xpose.msra.mxu0 0.0
      %432 = vmatprep.subr.mxu0 0.0
      %433 = vmatpush2.xpose.msra.mxu0 0.0
      %434 = vmatprep.subr.mxu0 0.0
      %435 = vmatpush2.xpose.msra.mxu0 0.0
      %436 = vmatprep.subr.mxu0 0.0
      %437 = vmatpush2.xpose.msra.mxu0 0.0
      %438 = vmatprep.subr.mxu0 0.0
      %439 = vmatpush2.xpose.msra.mxu0 0.0
      %440 = vmatprep.subr.mxu0 0.0
      %441 = vmatpush2.xpose.msra.mxu0 0.0
      %442 = vmatprep.subr.mxu0 0.0
      %443 = vmatpush2.xpose.msra.mxu0 0.0
      %444 = vmatprep.subr.mxu0 0.0
      %445 = vmatpush2.xpose.msra.mxu0 0.0
      %446 = vmatprep.subr.mxu0 0.0
      %447 = vmatpush2.xpose.msra.mxu0 0.0
      %448 = vmatprep.mubr.f32.mxu0 0.0
      %449 = vmatmul.mubr.f32.gmra.mxu0 %v379
      %v450 = vpop.f32.mrf.mxu0
      %v451 = vadd.f32 0.0, %v450
      %v452 = vpop.f32.mrf.mxu0
      %453 = vdwg.mxu0
      %v455 = vsel %vm301, %v291, 0
      %v458 = vsel %vm301, %v295, 0
      %460 = vmatprep.subr.mxu0 0.0
      %461 = vmatpush1.xpose.msra.mxu0 0.0
      %462 = vmatprep.subr.mxu0 0.0
      %463 = vmatpush1.xpose.msra.mxu0 0.0
      %464 = vmatprep.subr.mxu0 0.0
      %465 = vmatpush1.xpose.msra.mxu0 0.0
      %466 = vmatprep.subr.mxu0 0.0
      %467 = vmatpush1.xpose.msra.mxu0 0.0
      %468 = vmatprep.subr.mxu0 0.0
      %469 = vmatpush1.xpose.msra.mxu0 0.0
      %470 = vmatprep.subr.mxu0 0.0
      %471 = vmatpush1.xpose.msra.mxu0 0.0
      %472 = vmatprep.subr.mxu0 0.0
      %473 = vmatpush1.xpose.msra.mxu0 0.0
      %474 = vmatprep.subr.mxu0 0.0
      %475 = vmatpush1.xpose.msra.mxu0 0.0
      %476 = vmatprep.subr.mxu0 0.0
      %477 = vmatpush1.xpose.msra.mxu0 0.0
      %478 = vmatprep.subr.mxu0 0.0
      %479 = vmatpush1.xpose.msra.mxu0 0.0
      %480 = vmatprep.subr.mxu0 0.0
      %481 = vmatpush1.xpose.msra.mxu0 0.0
      %482 = vmatprep.subr.mxu0 0.0
      %483 = vmatpush1.xpose.msra.mxu0 0.0
      %484 = vmatprep.subr.mxu0 0.0
      %485 = vmatpush1.xpose.msra.mxu0 0.0
      %486 = vmatprep.subr.mxu0 0.0
      %487 = vmatpush1.xpose.msra.mxu0 0.0
      %488 = vmatprep.subr.mxu0 0.0
      %489 = vmatpush1.xpose.msra.mxu0 0.0
      %490 = vmatprep.subr.mxu0 0.0
      %491 = vmatpush1.xpose.msra.mxu0 %v458
      %492 = vmatprep.subr.mxu0 0.0
      %493 = vmatpush2.xpose.msra.mxu0 0.0
      %494 = vmatprep.subr.mxu0 0.0
      %495 = vmatpush2.xpose.msra.mxu0 0.0
      %496 = vmatprep.subr.mxu0 0.0
      %497 = vmatpush2.xpose.msra.mxu0 0.0
      %498 = vmatprep.subr.mxu0 0.0
      %499 = vmatpush2.xpose.msra.mxu0 0.0
      %500 = vmatprep.subr.mxu0 0.0
      %501 = vmatpush2.xpose.msra.mxu0 0.0
      %502 = vmatprep.subr.mxu0 0.0
      %503 = vmatpush2.xpose.msra.mxu0 0.0
      %504 = vmatprep.subr.mxu0 0.0
      %505 = vmatpush2.xpose.msra.mxu0 0.0
      %506 = vmatprep.subr.mxu0 0.0
      %507 = vmatpush2.xpose.msra.mxu0 0.0
      %508 = vmatprep.subr.mxu0 0.0
      %509 = vmatpush2.xpose.msra.mxu0 0.0
      %510 = vmatprep.subr.mxu0 0.0
      %511 = vmatpush2.xpose.msra.mxu0 0.0
      %512 = vmatprep.subr.mxu0 0.0
      %513 = vmatpush2.xpose.msra.mxu0 0.0
      %514 = vmatprep.subr.mxu0 0.0
      %515 = vmatpush2.xpose.msra.mxu0 0.0
      %516 = vmatprep.subr.mxu0 0.0
      %517 = vmatpush2.xpose.msra.mxu0 0.0
      %518 = vmatprep.subr.mxu0 0.0
      %519 = vmatpush2.xpose.msra.mxu0 0.0
      %520 = vmatprep.subr.mxu0 0.0
      %521 = vmatpush2.xpose.msra.mxu0 0.0
      %522 = vmatprep.subr.mxu0 0.0
      %523 = vmatpush2.xpose.msra.mxu0 0.0
      %524 = vmatprep.mubr.f32.mxu0 0.0
      %525 = vmatmul.mubr.f32.gmra.mxu0 %v455
      %v526 = vpop.f32.mrf.mxu0
      %v527 = vadd.f32 0.0, %v526
      %v528 = vpop.f32.mrf.mxu0
      %529 = vdwg.mxu0
      %v531 = vsel %vm301, %v292, 0
      %v534 = vsel %vm301, %v296, 0
      %536 = vmatprep.subr.mxu0 0.0
      %537 = vmatpush1.xpose.msra.mxu0 0.0
      %538 = vmatprep.subr.mxu0 0.0
      %539 = vmatpush1.xpose.msra.mxu0 0.0
      %540 = vmatprep.subr.mxu0 0.0
      %541 = vmatpush1.xpose.msra.mxu0 0.0
      %542 = vmatprep.subr.mxu0 0.0
      %543 = vmatpush1.xpose.msra.mxu0 0.0
      %544 = vmatprep.subr.mxu0 0.0
      %545 = vmatpush1.xpose.msra.mxu0 0.0
      %546 = vmatprep.subr.mxu0 0.0
      %547 = vmatpush1.xpose.msra.mxu0 0.0
      %548 = vmatprep.subr.mxu0 0.0
      %549 = vmatpush1.xpose.msra.mxu0 0.0
      %550 = vmatprep.subr.mxu0 0.0
      %551 = vmatpush1.xpose.msra.mxu0 0.0
      %552 = vmatprep.subr.mxu0 0.0
      %553 = vmatpush1.xpose.msra.mxu0 0.0
      %554 = vmatprep.subr.mxu0 0.0
      %555 = vmatpush1.xpose.msra.mxu0 0.0
      %556 = vmatprep.subr.mxu0 0.0
      %557 = vmatpush1.xpose.msra.mxu0 0.0
      %558 = vmatprep.subr.mxu0 0.0
      %559 = vmatpush1.xpose.msra.mxu0 0.0
      %560 = vmatprep.subr.mxu0 0.0
      %561 = vmatpush1.xpose.msra.mxu0 0.0
      %562 = vmatprep.subr.mxu0 0.0
      %563 = vmatpush1.xpose.msra.mxu0 0.0
      %564 = vmatprep.subr.mxu0 0.0
      %565 = vmatpush1.xpose.msra.mxu0 0.0
      %566 = vmatprep.subr.mxu0 0.0
      %567 = vmatpush1.xpose.msra.mxu0 %v534
      %568 = vmatprep.subr.mxu0 0.0
      %569 = vmatpush2.xpose.msra.mxu0 0.0
      %570 = vmatprep.subr.mxu0 0.0
      %571 = vmatpush2.xpose.msra.mxu0 0.0
      %572 = vmatprep.subr.mxu0 0.0
      %573 = vmatpush2.xpose.msra.mxu0 0.0
      %574 = vmatprep.subr.mxu0 0.0
      %575 = vmatpush2.xpose.msra.mxu0 0.0
      %576 = vmatprep.subr.mxu0 0.0
      %577 = vmatpush2.xpose.msra.mxu0 0.0
      %578 = vmatprep.subr.mxu0 0.0
      %579 = vmatpush2.xpose.msra.mxu0 0.0
      %580 = vmatprep.subr.mxu0 0.0
      %581 = vmatpush2.xpose.msra.mxu0 0.0
      %582 = vmatprep.subr.mxu0 0.0
      %583 = vmatpush2.xpose.msra.mxu0 0.0
      %584 = vmatprep.subr.mxu0 0.0
      %585 = vmatpush2.xpose.msra.mxu0 0.0
      %586 = vmatprep.subr.mxu0 0.0
      %587 = vmatpush2.xpose.msra.mxu0 0.0
      %588 = vmatprep.subr.mxu0 0.0
      %589 = vmatpush2.xpose.msra.mxu0 0.0
      %590 = vmatprep.subr.mxu0 0.0
      %591 = vmatpush2.xpose.msra.mxu0 0.0
      %592 = vmatprep.subr.mxu0 0.0
      %593 = vmatpush2.xpose.msra.mxu0 0.0
      %594 = vmatprep.subr.mxu0 0.0
      %595 = vmatpush2.xpose.msra.mxu0 0.0
      %596 = vmatprep.subr.mxu0 0.0
      %597 = vmatpush2.xpose.msra.mxu0 0.0
      %598 = vmatprep.subr.mxu0 0.0
      %599 = vmatpush2.xpose.msra.mxu0 0.0
      %600 = vmatprep.mubr.f32.mxu0 0.0
      %601 = vmatmul.mubr.f32.gmra.mxu0 %v531
      %v602 = vpop.f32.mrf.mxu0
      %v603 = vadd.f32 0.0, %v602
      %v604 = vpop.f32.mrf.mxu0
      %605 = vdwg.mxu0
      %v606 = vmul.f32 %v375, 0.125
      %v607 = vmul.f32 %v451, 0.125
      %v608 = vmul.f32 %v527, 0.125
      %v609 = vmul.f32 %v603, 0.125
      %v610 = vld [vmem:[#allocation2] sm:$0xff]
      %v611 = vld [vmem:[#allocation2 + $0x8] sm:$0xff]
      %v612 = vld [vmem:[#allocation2 + $0x10] sm:$0xff]
      %v613 = vld [vmem:[#allocation2 + $0x18] sm:$0xff]
      %v614 = vsel %vm301, %v606, -inf
      %615 = vmax.xlane.f32.xlu0 %v614
      %v616 = vpop.xlane.xlu0 %615
      %v617 = vsel %vm301, %v607, -inf
      %618 = vmax.xlane.f32.xlu0 %v617
      %v619 = vpop.xlane.xlu0 %618
      %v620 = vsel %vm301, %v608, -inf
      %621 = vmax.xlane.f32.xlu0 %v620
      %v622 = vpop.xlane.xlu0 %621
      %v623 = vsel %vm301, %v609, -inf
      %624 = vmax.xlane.f32.xlu0 %v623
      %v625 = vpop.xlane.xlu0 %624
      %v626 = vmax.f32 %v610, %v616
      %v627 = vmax.f32 %v611, %v619
      %v628 = vmax.f32 %v612, %v622
      %v629 = vmax.f32 %v613, %v625
      %v630 = vsub.f32 %v610, %v626
      %v631 = vsub.f32 %v611, %v627
      %v632 = vsub.f32 %v612, %v628
      %v633 = vsub.f32 %v613, %v629
      %v634 = vmul.f32 %v630, 1.442695
      %v635 = vpow.pop %v634
      %v636 = vmul.f32 %v631, 1.442695
      %v637 = vpow.pop %v636
      %v638 = vmul.f32 %v632, 1.442695
      %v639 = vpow.pop %v638
      %v640 = vmul.f32 %v633, 1.442695
      %v641 = vpow.pop %v640
      %643 = vset.pattern.permute.xlu0 0
      %644 = vperm.xlu0 %643, %v626
      %v645 = vpop.permute.xlu0 %644
      %648 = vset.pattern.permute.xlu0 0
      %649 = vperm.xlu0 %648, %v627
      %v650 = vpop.permute.xlu0 %649
      %653 = vset.pattern.permute.xlu0 0
      %654 = vperm.xlu0 %653, %v628
      %v655 = vpop.permute.xlu0 %654
      %658 = vset.pattern.permute.xlu0 0
      %659 = vperm.xlu0 %658, %v629
      %v660 = vpop.permute.xlu0 %659
      %v662 = vsub.f32 %v606, %v645
      %v663 = vsub.f32 %v607, %v650
      %v664 = vsub.f32 %v608, %v655
      %v665 = vsub.f32 %v609, %v660
      %v666 = vmul.f32 %v662, 1.442695
      %v667 = vpow.pop %v666
      %v668 = vmul.f32 %v663, 1.442695
      %v669 = vpow.pop %v668
      %v670 = vmul.f32 %v664, 1.442695
      %v671 = vpow.pop %v670
      %v672 = vmul.f32 %v665, 1.442695
      %v673 = vpow.pop %v672
      %v674 = vld [vmem:[#allocation3] sm:$0xff]
      %v675 = vld [vmem:[#allocation3 + $0x8] sm:$0xff]
      %v676 = vld [vmem:[#allocation3 + $0x10] sm:$0xff]
      %v677 = vld [vmem:[#allocation3 + $0x18] sm:$0xff]
      %v678 = vmul.f32 %v635, %v674
      %v679 = vmul.f32 %v637, %v675
      %v680 = vmul.f32 %v639, %v676
      %v681 = vmul.f32 %v641, %v677
      %v682 = vsel %vm301, %v667, 0.0
      %683 = vadd.xlane.f32.xlu0 %v682
      %v684 = vpop.xlane.xlu0 %683
      %v685 = vsel %vm301, %v669, 0.0
      %686 = vadd.xlane.f32.xlu0 %v685
      %v687 = vpop.xlane.xlu0 %686
      %v688 = vsel %vm301, %v671, 0.0
      %689 = vadd.xlane.f32.xlu0 %v688
      %v690 = vpop.xlane.xlu0 %689
      %v691 = vsel %vm301, %v673, 0.0
      %692 = vadd.xlane.f32.xlu0 %v691
      %v693 = vpop.xlane.xlu0 %692
      %v694 = vadd.f32 %v678, %v684
      %v695 = vadd.f32 %v679, %v687
      %v696 = vadd.f32 %v680, %v690
      %v697 = vadd.f32 %v681, %v693
      %vm698 = vcmask 7168
      %699 = vst.msk [vmem:[#allocation3] sm:$0xff] %vm698, %v694
      %700 = vst.msk [vmem:[#allocation3 + $0x8] sm:$0xff] %vm698, %v695
      %701 = vst.msk [vmem:[#allocation3 + $0x10] sm:$0xff] %vm698, %v696
      %702 = vst.msk [vmem:[#allocation3 + $0x18] sm:$0xff] %vm698, %v697
      %v703 = vld [vmem:[#allocation4] sm:$0xff]
      %v704 = vld [vmem:[#allocation4 + $0x8] sm:$0xff]
      %v705 = vld [vmem:[#allocation4 + $0x10] sm:$0xff]
      %v706 = vld [vmem:[#allocation4 + $0x18] sm:$0xff]
      %708 = vset.pattern.permute.xlu0 0
      %709 = vperm.xlu0 %708, %v635
      %v710 = vpop.permute.xlu0 %709
      %713 = vset.pattern.permute.xlu0 0
      %714 = vperm.xlu0 %713, %v637
      %v715 = vpop.permute.xlu0 %714
      %718 = vset.pattern.permute.xlu0 0
      %719 = vperm.xlu0 %718, %v639
      %v720 = vpop.permute.xlu0 %719
      %723 = vset.pattern.permute.xlu0 0
      %724 = vperm.xlu0 %723, %v641
      %v725 = vpop.permute.xlu0 %724
      %v727 = vmul.f32 %v710, %v703
      %v728 = vmul.f32 %v715, %v704
      %v729 = vmul.f32 %v720, %v705
      %v730 = vmul.f32 %v725, %v706
      %v732 = vsel %vm301, %v667, 0
      %734 = vmatprep.subr.mxu0 0.0
      %735 = vmatpush1.msra.mxu0 0.0
      %736 = vmatprep.subr.mxu0 0.0
      %737 = vmatpush1.msra.mxu0 0.0
      %738 = vmatprep.subr.mxu0 0.0
      %739 = vmatpush1.msra.mxu0 0.0
      %740 = vmatprep.subr.mxu0 0.0
      %741 = vmatpush1.msra.mxu0 0.0
      %742 = vmatprep.subr.mxu0 0.0
      %743 = vmatpush1.msra.mxu0 0.0
      %744 = vmatprep.subr.mxu0 0.0
      %745 = vmatpush1.msra.mxu0 0.0
      %746 = vmatprep.subr.mxu0 0.0
      %747 = vmatpush1.msra.mxu0 0.0
      %748 = vmatprep.subr.mxu0 0.0
      %749 = vmatpush1.msra.mxu0 0.0
      %750 = vmatprep.subr.mxu0 0.0
      %751 = vmatpush1.msra.mxu0 0.0
      %752 = vmatprep.subr.mxu0 0.0
      %753 = vmatpush1.msra.mxu0 0.0
      %754 = vmatprep.subr.mxu0 0.0
      %755 = vmatpush1.msra.mxu0 0.0
      %756 = vmatprep.subr.mxu0 0.0
      %757 = vmatpush1.msra.mxu0 0.0
      %758 = vmatprep.subr.mxu0 0.0
      %759 = vmatpush1.msra.mxu0 0.0
      %760 = vmatprep.subr.mxu0 0.0
      %761 = vmatpush1.msra.mxu0 0.0
      %762 = vmatprep.subr.mxu0 0.0
      %763 = vmatpush1.msra.mxu0 0.0
      %764 = vmatprep.subr.mxu0 0.0
      %765 = vmatpush1.msra.mxu0 %v297
      %766 = vmatprep.subr.mxu0 0.0
      %767 = vmatpush2.msra.mxu0 0.0
      %768 = vmatprep.subr.mxu0 0.0
      %769 = vmatpush2.msra.mxu0 0.0
      %770 = vmatprep.subr.mxu0 0.0
      %771 = vmatpush2.msra.mxu0 0.0
      %772 = vmatprep.subr.mxu0 0.0
      %773 = vmatpush2.msra.mxu0 0.0
      %774 = vmatprep.subr.mxu0 0.0
      %775 = vmatpush2.msra.mxu0 0.0
      %776 = vmatprep.subr.mxu0 0.0
      %777 = vmatpush2.msra.mxu0 0.0
      %778 = vmatprep.subr.mxu0 0.0
      %779 = vmatpush2.msra.mxu0 0.0
      %780 = vmatprep.subr.mxu0 0.0
      %781 = vmatpush2.msra.mxu0 0.0
      %782 = vmatprep.subr.mxu0 0.0
      %783 = vmatpush2.msra.mxu0 0.0
      %784 = vmatprep.subr.mxu0 0.0
      %785 = vmatpush2.msra.mxu0 0.0
      %786 = vmatprep.subr.mxu0 0.0
      %787 = vmatpush2.msra.mxu0 0.0
      %788 = vmatprep.subr.mxu0 0.0
      %789 = vmatpush2.msra.mxu0 0.0
      %790 = vmatprep.subr.mxu0 0.0
      %791 = vmatpush2.msra.mxu0 0.0
      %792 = vmatprep.subr.mxu0 0.0
      %793 = vmatpush2.msra.mxu0 0.0
      %794 = vmatprep.subr.mxu0 0.0
      %795 = vmatpush2.msra.mxu0 0.0
      %796 = vmatprep.subr.mxu0 0.0
      %797 = vmatpush2.msra.mxu0 0.0
      %798 = vmatprep.mubr.f32.mxu0 0.0
      %799 = vmatmul.mubr.f32.gmra.mxu0 %v732
      %v800 = vpop.f32.mrf.mxu0
      %v801 = vadd.f32 0.0, %v800
      %v802 = vpop.f32.mrf.mxu0
      %803 = vdwg.mxu0
      %v805 = vsel %vm301, %v669, 0
      %807 = vmatprep.subr.mxu0 0.0
      %808 = vmatpush1.msra.mxu0 0.0
      %809 = vmatprep.subr.mxu0 0.0
      %810 = vmatpush1.msra.mxu0 0.0
      %811 = vmatprep.subr.mxu0 0.0
      %812 = vmatpush1.msra.mxu0 0.0
      %813 = vmatprep.subr.mxu0 0.0
      %814 = vmatpush1.msra.mxu0 0.0
      %815 = vmatprep.subr.mxu0 0.0
      %816 = vmatpush1.msra.mxu0 0.0
      %817 = vmatprep.subr.mxu0 0.0
      %818 = vmatpush1.msra.mxu0 0.0
      %819 = vmatprep.subr.mxu0 0.0
      %820 = vmatpush1.msra.mxu0 0.0
      %821 = vmatprep.subr.mxu0 0.0
      %822 = vmatpush1.msra.mxu0 0.0
      %823 = vmatprep.subr.mxu0 0.0
      %824 = vmatpush1.msra.mxu0 0.0
      %825 = vmatprep.subr.mxu0 0.0
      %826 = vmatpush1.msra.mxu0 0.0
      %827 = vmatprep.subr.mxu0 0.0
      %828 = vmatpush1.msra.mxu0 0.0
      %829 = vmatprep.subr.mxu0 0.0
      %830 = vmatpush1.msra.mxu0 0.0
      %831 = vmatprep.subr.mxu0 0.0
      %832 = vmatpush1.msra.mxu0 0.0
      %833 = vmatprep.subr.mxu0 0.0
      %834 = vmatpush1.msra.mxu0 0.0
      %835 = vmatprep.subr.mxu0 0.0
      %836 = vmatpush1.msra.mxu0 0.0
      %837 = vmatprep.subr.mxu0 0.0
      %838 = vmatpush1.msra.mxu0 %v298
      %839 = vmatprep.subr.mxu0 0.0
      %840 = vmatpush2.msra.mxu0 0.0
      %841 = vmatprep.subr.mxu0 0.0
      %842 = vmatpush2.msra.mxu0 0.0
      %843 = vmatprep.subr.mxu0 0.0
      %844 = vmatpush2.msra.mxu0 0.0
      %845 = vmatprep.subr.mxu0 0.0
      %846 = vmatpush2.msra.mxu0 0.0
      %847 = vmatprep.subr.mxu0 0.0
      %848 = vmatpush2.msra.mxu0 0.0
      %849 = vmatprep.subr.mxu0 0.0
      %850 = vmatpush2.msra.mxu0 0.0
      %851 = vmatprep.subr.mxu0 0.0
      %852 = vmatpush2.msra.mxu0 0.0
      %853 = vmatprep.subr.mxu0 0.0
      %854 = vmatpush2.msra.mxu0 0.0
      %855 = vmatprep.subr.mxu0 0.0
      %856 = vmatpush2.msra.mxu0 0.0
      %857 = vmatprep.subr.mxu0 0.0
      %858 = vmatpush2.msra.mxu0 0.0
      %859 = vmatprep.subr.mxu0 0.0
      %860 = vmatpush2.msra.mxu0 0.0
      %861 = vmatprep.subr.mxu0 0.0
      %862 = vmatpush2.msra.mxu0 0.0
      %863 = vmatprep.subr.mxu0 0.0
      %864 = vmatpush2.msra.mxu0 0.0
      %865 = vmatprep.subr.mxu0 0.0
      %866 = vmatpush2.msra.mxu0 0.0
      %867 = vmatprep.subr.mxu0 0.0
      %868 = vmatpush2.msra.mxu0 0.0
      %869 = vmatprep.subr.mxu0 0.0
      %870 = vmatpush2.msra.mxu0 0.0
      %871 = vmatprep.mubr.f32.mxu0 0.0
      %872 = vmatmul.mubr.f32.gmra.mxu0 %v805
      %v873 = vpop.f32.mrf.mxu0
      %v874 = vadd.f32 0.0, %v873
      %v875 = vpop.f32.mrf.mxu0
      %876 = vdwg.mxu0
      %v878 = vsel %vm301, %v671, 0
      %880 = vmatprep.subr.mxu0 0.0
      %881 = vmatpush1.msra.mxu0 0.0
      %882 = vmatprep.subr.mxu0 0.0
      %883 = vmatpush1.msra.mxu0 0.0
      %884 = vmatprep.subr.mxu0 0.0
      %885 = vmatpush1.msra.mxu0 0.0
      %886 = vmatprep.subr.mxu0 0.0
      %887 = vmatpush1.msra.mxu0 0.0
      %888 = vmatprep.subr.mxu0 0.0
      %889 = vmatpush1.msra.mxu0 0.0
      %890 = vmatprep.subr.mxu0 0.0
      %891 = vmatpush1.msra.mxu0 0.0
      %892 = vmatprep.subr.mxu0 0.0
      %893 = vmatpush1.msra.mxu0 0.0
      %894 = vmatprep.subr.mxu0 0.0
      %895 = vmatpush1.msra.mxu0 0.0
      %896 = vmatprep.subr.mxu0 0.0
      %897 = vmatpush1.msra.mxu0 0.0
      %898 = vmatprep.subr.mxu0 0.0
      %899 = vmatpush1.msra.mxu0 0.0
      %900 = vmatprep.subr.mxu0 0.0
      %901 = vmatpush1.msra.mxu0 0.0
      %902 = vmatprep.subr.mxu0 0.0
      %903 = vmatpush1.msra.mxu0 0.0
      %904 = vmatprep.subr.mxu0 0.0
      %905 = vmatpush1.msra.mxu0 0.0
      %906 = vmatprep.subr.mxu0 0.0
      %907 = vmatpush1.msra.mxu0 0.0
      %908 = vmatprep.subr.mxu0 0.0
      %909 = vmatpush1.msra.mxu0 0.0
      %910 = vmatprep.subr.mxu0 0.0
      %911 = vmatpush1.msra.mxu0 %v299
      %912 = vmatprep.subr.mxu0 0.0
      %913 = vmatpush2.msra.mxu0 0.0
      %914 = vmatprep.subr.mxu0 0.0
      %915 = vmatpush2.msra.mxu0 0.0
      %916 = vmatprep.subr.mxu0 0.0
      %917 = vmatpush2.msra.mxu0 0.0
      %918 = vmatprep.subr.mxu0 0.0
      %919 = vmatpush2.msra.mxu0 0.0
      %920 = vmatprep.subr.mxu0 0.0
      %921 = vmatpush2.msra.mxu0 0.0
      %922 = vmatprep.subr.mxu0 0.0
      %923 = vmatpush2.msra.mxu0 0.0
      %924 = vmatprep.subr.mxu0 0.0
      %925 = vmatpush2.msra.mxu0 0.0
      %926 = vmatprep.subr.mxu0 0.0
      %927 = vmatpush2.msra.mxu0 0.0
      %928 = vmatprep.subr.mxu0 0.0
      %929 = vmatpush2.msra.mxu0 0.0
      %930 = vmatprep.subr.mxu0 0.0
      %931 = vmatpush2.msra.mxu0 0.0
      %932 = vmatprep.subr.mxu0 0.0
      %933 = vmatpush2.msra.mxu0 0.0
      %934 = vmatprep.subr.mxu0 0.0
      %935 = vmatpush2.msra.mxu0 0.0
      %936 = vmatprep.subr.mxu0 0.0
      %937 = vmatpush2.msra.mxu0 0.0
      %938 = vmatprep.subr.mxu0 0.0
      %939 = vmatpush2.msra.mxu0 0.0
      %940 = vmatprep.subr.mxu0 0.0
      %941 = vmatpush2.msra.mxu0 0.0
      %942 = vmatprep.subr.mxu0 0.0
      %943 = vmatpush2.msra.mxu0 0.0
      %944 = vmatprep.mubr.f32.mxu0 0.0
      %945 = vmatmul.mubr.f32.gmra.mxu0 %v878
      %v946 = vpop.f32.mrf.mxu0
      %v947 = vadd.f32 0.0, %v946
      %v948 = vpop.f32.mrf.mxu0
      %949 = vdwg.mxu0
      %v951 = vsel %vm301, %v673, 0
      %953 = vmatprep.subr.mxu0 0.0
      %954 = vmatpush1.msra.mxu0 0.0
      %955 = vmatprep.subr.mxu0 0.0
      %956 = vmatpush1.msra.mxu0 0.0
      %957 = vmatprep.subr.mxu0 0.0
      %958 = vmatpush1.msra.mxu0 0.0
      %959 = vmatprep.subr.mxu0 0.0
      %960 = vmatpush1.msra.mxu0 0.0
      %961 = vmatprep.subr.mxu0 0.0
      %962 = vmatpush1.msra.mxu0 0.0
      %963 = vmatprep.subr.mxu0 0.0
      %964 = vmatpush1.msra.mxu0 0.0
      %965 = vmatprep.subr.mxu0 0.0
      %966 = vmatpush1.msra.mxu0 0.0
      %967 = vmatprep.subr.mxu0 0.0
      %968 = vmatpush1.msra.mxu0 0.0
      %969 = vmatprep.subr.mxu0 0.0
      %970 = vmatpush1.msra.mxu0 0.0
      %971 = vmatprep.subr.mxu0 0.0
      %972 = vmatpush1.msra.mxu0 0.0
      %973 = vmatprep.subr.mxu0 0.0
      %974 = vmatpush1.msra.mxu0 0.0
      %975 = vmatprep.subr.mxu0 0.0
      %976 = vmatpush1.msra.mxu0 0.0
      %977 = vmatprep.subr.mxu0 0.0
      %978 = vmatpush1.msra.mxu0 0.0
      %979 = vmatprep.subr.mxu0 0.0
      %980 = vmatpush1.msra.mxu0 0.0
      %981 = vmatprep.subr.mxu0 0.0
      %982 = vmatpush1.msra.mxu0 0.0
      %983 = vmatprep.subr.mxu0 0.0
      %984 = vmatpush1.msra.mxu0 %v300
      %985 = vmatprep.subr.mxu0 0.0
      %986 = vmatpush2.msra.mxu0 0.0
      %987 = vmatprep.subr.mxu0 0.0
      %988 = vmatpush2.msra.mxu0 0.0
      %989 = vmatprep.subr.mxu0 0.0
      %990 = vmatpush2.msra.mxu0 0.0
      %991 = vmatprep.subr.mxu0 0.0
      %992 = vmatpush2.msra.mxu0 0.0
      %993 = vmatprep.subr.mxu0 0.0
      %994 = vmatpush2.msra.mxu0 0.0
      %995 = vmatprep.subr.mxu0 0.0
      %996 = vmatpush2.msra.mxu0 0.0
      %997 = vmatprep.subr.mxu0 0.0
      %998 = vmatpush2.msra.mxu0 0.0
      %999 = vmatprep.subr.mxu0 0.0
      %1000 = vmatpush2.msra.mxu0 0.0
      %1001 = vmatprep.subr.mxu0 0.0
      %1002 = vmatpush2.msra.mxu0 0.0
      %1003 = vmatprep.subr.mxu0 0.0
      %1004 = vmatpush2.msra.mxu0 0.0
      %1005 = vmatprep.subr.mxu0 0.0
      %1006 = vmatpush2.msra.mxu0 0.0
      %1007 = vmatprep.subr.mxu0 0.0
      %1008 = vmatpush2.msra.mxu0 0.0
      %1009 = vmatprep.subr.mxu0 0.0
      %1010 = vmatpush2.msra.mxu0 0.0
      %1011 = vmatprep.subr.mxu0 0.0
      %1012 = vmatpush2.msra.mxu0 0.0
      %1013 = vmatprep.subr.mxu0 0.0
      %1014 = vmatpush2.msra.mxu0 0.0
      %1015 = vmatprep.subr.mxu0 0.0
      %1016 = vmatpush2.msra.mxu0 0.0
      %1017 = vmatprep.mubr.f32.mxu0 0.0
      %1018 = vmatmul.mubr.f32.gmra.mxu0 %v951
      %v1019 = vpop.f32.mrf.mxu0
      %v1020 = vadd.f32 0.0, %v1019
      %v1021 = vpop.f32.mrf.mxu0
      %1022 = vdwg.mxu0
      %v1023 = vadd.f32 %v727, %v801
      %v1024 = vadd.f32 %v728, %v874
      %v1025 = vadd.f32 %v729, %v947
      %v1026 = vadd.f32 %v730, %v1020
      %1027 = vst.msk [vmem:[#allocation4] sm:$0xff] %vm301, %v1023
      %1028 = vst.msk [vmem:[#allocation4 + $0x8] sm:$0xff] %vm301, %v1024
      %1029 = vst.msk [vmem:[#allocation4 + $0x10] sm:$0xff] %vm301, %v1025
      %1030 = vst.msk [vmem:[#allocation4 + $0x18] sm:$0xff] %vm301, %v1026
      %1031 = vst.msk [vmem:[#allocation2] sm:$0xff] %vm698, %v626
      %1032 = vst.msk [vmem:[#allocation2 + $0x8] sm:$0xff] %vm698, %v627
      %1033 = vst.msk [vmem:[#allocation2 + $0x10] sm:$0xff] %vm698, %v628
      %1034 = vst.msk [vmem:[#allocation2 + $0x18] sm:$0xff] %vm698, %v629
      // Predicated region
      $region37: #{decoder_forward.24} parent=31 // pred_check
        %p1035 = pneg %p271
      $region38: #{decoder_forward.24} parent=31 // pred_check_branch
        %1037 = sbr.rel (%p1035) target = $region40
      $region39: #{decoder_forward.24} parent=31 // pred_region
        %v1038 = vld [vmem:[#allocation4] sm:$0xff]
        %v1039 = vld [vmem:[#allocation4 + $0x8] sm:$0xff]
        %v1040 = vld [vmem:[#allocation4 + $0x10] sm:$0xff]
        %v1041 = vld [vmem:[#allocation4 + $0x18] sm:$0xff]
        %v1042 = vld [vmem:[#allocation3] sm:$0xff]
        %v1043 = vld [vmem:[#allocation3 + $0x8] sm:$0xff]
        %v1044 = vld [vmem:[#allocation3 + $0x10] sm:$0xff]
        %v1045 = vld [vmem:[#allocation3 + $0x18] sm:$0xff]
        %v1046 = vrcp.pop %v1042
        %v1047 = vrcp.pop %v1043
        %v1048 = vrcp.pop %v1044
        %v1049 = vrcp.pop %v1045
        %1051 = vset.pattern.permute.xlu0 0
        %1052 = vperm.xlu0 %1051, %v1046
        %v1053 = vpop.permute.xlu0 %1052
        %1056 = vset.pattern.permute.xlu0 0
        %1057 = vperm.xlu0 %1056, %v1047
        %v1058 = vpop.permute.xlu0 %1057
        %1061 = vset.pattern.permute.xlu0 0
        %1062 = vperm.xlu0 %1061, %v1048
        %v1063 = vpop.permute.xlu0 %1062
        %1066 = vset.pattern.permute.xlu0 0
        %1067 = vperm.xlu0 %1066, %v1049
        %v1068 = vpop.permute.xlu0 %1067
        %v1070 = vmul.f32 %v1038, %v1053
        %v1071 = vmul.f32 %v1039, %v1058
        %v1072 = vmul.f32 %v1040, %v1063
        %v1073 = vmul.f32 %v1041, %v1068
        %1074 = vst.msk [vmem:[%s270] sm:$0xff] %vm301, %v1070
        %1075 = vst.msk [vmem:[%s270 + $0x8] sm:$0xff] %vm301, %v1071
        %1076 = vst.msk [vmem:[%s270 + $0x10] sm:$0xff] %vm301, %v1072
        %1077 = vst.msk [vmem:[%s270 + $0x18] sm:$0xff] %vm301, %v1073
      $region40: #{decoder_forward.24} parent=31 // pred_fallthru
        _
      %p1078 = scmp.lt.s32.totalorder %s19, 1
      %s1079 = scalar_select %p1078, %s19, 1
      %p1080 = scmp.lt.s32.totalorder %s20, 0
      %s1081 = scalar_select %p1080, %s20, 0
      %s1082 = smul.addr %s1079, 4
      %s1083 = sadd.s32 %s1081, %s1082
      %s1084 = smul.addr %s1083, 8
      %s1085 = scalar_lea.vmem %s3, %s1084
      // Predicated region
      $region41: #{decoder_forward.24} parent=31 // pred_check
        %p1086 = pneg %p137
      $region42: #{decoder_forward.24} parent=31 // pred_check_branch
        %1088 = sbr.rel (%p1086) target = $region44
      $region43: #{decoder_forward.24} parent=31 // pred_region
        _
      $region44: #{decoder_forward.24} parent=31 // pred_fallthru
        _
    $region32: #{decoder_forward.24} parent=5 // pred_fallthru
      _
    %p1089 = scmp.le.s32.totalorder 2, %s9
    // Predicated region
    $region45: #{decoder_forward.24} parent=5 // pred_check
      %p1090 = pneg %p1089
    $region46: #{decoder_forward.24} parent=5 // pred_check_branch
      %1092 = sbr.rel (%p1090) target = $region48
    $region47: #{decoder_forward.24} parent=5 // pred_region
      %s1093 = ssub.s32 %s9, 2
      // Predicated region
      $region49: #{decoder_forward.24} parent=47 // pred_check
        %p1094 = pneg %p143
      $region50: #{decoder_forward.24} parent=47 // pred_check_branch
        %1096 = sbr.rel (%p1094) target = $region52
      $region51: #{decoder_forward.24} parent=47 // pred_region
        %p1097 = scmp.lt.s32.totalorder %s22, 1
        %s1098 = scalar_select %p1097, %s22, 1
        %p1099 = scmp.lt.s32.totalorder %s23, 0
        %s1100 = scalar_select %p1099, %s23, 0
        %s1101 = smul.addr %s1098, 4
        %s1102 = sadd.s32 %s1100, %s1101
        %s1103 = smul.addr %s1102, 8
        %s1104 = scalar_lea.vmem %s3, %s1103
      $region52: #{decoder_forward.24} parent=47 // pred_fallthru
        _
    $region48: #{decoder_forward.24} parent=5 // pred_fallthru
      _
  $region6: #{decoder_forward.24} parent=0 // loop_footer
    %s13 = sadd.s32 1, %s9
  $region7: #{decoder_forward.24} parent=0 // loop_footer_branch
    %8 = sbr.rel target = $region3
  $region8: #{decoder_forward.24} parent=0 // loop_exit
    _

// kernel: decoder_forward.27
$region0: #{decoder_forward.27}
  #allocation0 [shape = 'u32[]', space=smem, size = 0x4, offset = 0x4, fixed_abs, tag = 'smem constant byte address 0x4 - core index']
  #allocation1 [shape = 'u32[144,128]{1,0:T(1,128)}', space=vmem, size = 0x12000, scoped, tag = 'internal scratch']
  #allocation2 [shape = 'f32[16,32]{1,0:T(8,128)}', space=vmem, size = 0x2000, scoped, tag = 'scratch operand']
  %s0 = inlined_call_operand.vmem [shape: f32[16,128], index: 0, kind: input, shape index: {}]
  %s1 = inlined_call_operand.vmem [shape: f32[128,32], index: 1, kind: input, shape index: {}]
  %s2 = inlined_call_operand.vmem [shape: f32[1,32], index: 2, kind: input, shape index: {}]
  %s3 = inlined_call_operand.vmem [shape: f32[16,32], index: 3, kind: input, shape index: {}]
  %s4 = inlined_call_operand.vmem [shape: f32[1,32], index: 4, kind: input, shape index: {}]
  %s5 = inlined_call_operand.vmem [shape: f32[1,32], index: 5, kind: input, shape index: {}]
  %s6 = inlined_call_operand.vmem [shape: f32[16,32], index: 6, kind: output, shape index: {}]
  %s7 = sld [smem:[#allocation0]]
  $region42: #{decoder_forward.27} parent=0
    _
  %s9 = ssub.s32 1, %s7
  %s10 = scalar_select 0, %s9, %s7
  // Predicated region
  $region2: #{decoder_forward.27} parent=0 // pred_check
    _
  $region3: #{decoder_forward.27} parent=0 // pred_check_branch
    %12 = sbr.rel (0) target = $region5
  $region4: #{decoder_forward.27} parent=0 // pred_region
    _
  $region5: #{decoder_forward.27} parent=0 // pred_fallthru
    _
  // Predicated region
  $region6: #{decoder_forward.27} parent=0 // pred_check
    _
  $region7: #{decoder_forward.27} parent=0 // pred_check_branch
    %14 = sbr.rel (0) target = $region9
  $region8: #{decoder_forward.27} parent=0 // pred_region
    _
  $region9: #{decoder_forward.27} parent=0 // pred_fallthru
    _
  // Predicated region
  $region10: #{decoder_forward.27} parent=0 // pred_check
    _
  $region11: #{decoder_forward.27} parent=0 // pred_check_branch
    %16 = sbr.rel (0) target = $region13
  $region12: #{decoder_forward.27} parent=0 // pred_region
    _
  $region13: #{decoder_forward.27} parent=0 // pred_fallthru
    _
  // Predicated region
  $region14: #{decoder_forward.27} parent=0 // pred_check
    _
  $region15: #{decoder_forward.27} parent=0 // pred_check_branch
    %18 = sbr.rel (0) target = $region17
  $region16: #{decoder_forward.27} parent=0 // pred_region
    _
  $region17: #{decoder_forward.27} parent=0 // pred_fallthru
    _
  // Predicated region
  $region18: #{decoder_forward.27} parent=0 // pred_check
    _
  $region19: #{decoder_forward.27} parent=0 // pred_check_branch
    %20 = sbr.rel (0) target = $region21
  $region20: #{decoder_forward.27} parent=0 // pred_region
    _
  $region21: #{decoder_forward.27} parent=0 // pred_fallthru
    _
  // Predicated region
  $region22: #{decoder_forward.27} parent=0 // pred_check
    _
  $region23: #{decoder_forward.27} parent=0 // pred_check_branch
    %22 = sbr.rel (0) target = $region25
  $region24: #{decoder_forward.27} parent=0 // pred_region
    _
  $region25: #{decoder_forward.27} parent=0 // pred_fallthru
    _
  %p23 = scmp.eq.s32.totalorder 0, 0
  // Predicated region
  $region26: #{decoder_forward.27} parent=0 // pred_check
    %p24 = pneg %p23
  $region27: #{decoder_forward.27} parent=0 // pred_check_branch
    %26 = sbr.rel (%p24) target = $region29
  $region28: #{decoder_forward.27} parent=0 // pred_region
    %vm27 = vcmask 261120
    %28 = vst.msk [vmem:[#allocation2] sm:$0xff] %vm27, 0.0
    %29 = vst.msk [vmem:[#allocation2 + $0x8] sm:$0xff] %vm27, 0.0
  $region29: #{decoder_forward.27} parent=0 // pred_fallthru
    _
  %v30 = vld [vmem:[#allocation2] sm:$0xff]
  %v31 = vld [vmem:[#allocation2 + $0x8] sm:$0xff]
  %v32 = vld [vmem:[%s0] sm:$0xff]
  %v33 = vld [vmem:[%s0 + $0x8] sm:$0xff]
  %v34 = vld [vmem:[%s1] sm:$0xff]
  %v35 = vld [vmem:[%s1 + $0x8] sm:$0xff]
  %v36 = vld [vmem:[%s1 + $0x10] sm:$0xff]
  %v37 = vld [vmem:[%s1 + $0x18] sm:$0xff]
  %v38 = vld [vmem:[%s1 + $0x20] sm:$0xff]
  %v39 = vld [vmem:[%s1 + $0x28] sm:$0xff]
  %v40 = vld [vmem:[%s1 + $0x30] sm:$0xff]
  %v41 = vld [vmem:[%s1 + $0x38] sm:$0xff]
  %v42 = vld [vmem:[%s1 + $0x40] sm:$0xff]
  %v43 = vld [vmem:[%s1 + $0x48] sm:$0xff]
  %v44 = vld [vmem:[%s1 + $0x50] sm:$0xff]
  %v45 = vld [vmem:[%s1 + $0x58] sm:$0xff]
  %v46 = vld [vmem:[%s1 + $0x60] sm:$0xff]
  %v47 = vld [vmem:[%s1 + $0x68] sm:$0xff]
  %v48 = vld [vmem:[%s1 + $0x70] sm:$0xff]
  %v49 = vld [vmem:[%s1 + $0x78] sm:$0xff]
  %50 = vmatprep.subr.mxu0 0.0
  %51 = vmatpush1.msra.mxu0 %v49
  %52 = vmatprep.subr.mxu0 0.0
  %53 = vmatpush1.msra.mxu0 %v48
  %54 = vmatprep.subr.mxu0 0.0
  %55 = vmatpush1.msra.mxu0 %v47
  %56 = vmatprep.subr.mxu0 0.0
  %57 = vmatpush1.msra.mxu0 %v46
  %58 = vmatprep.subr.mxu0 0.0
  %59 = vmatpush1.msra.mxu0 %v45
  %60 = vmatprep.subr.mxu0 0.0
  %61 = vmatpush1.msra.mxu0 %v44
  %62 = vmatprep.subr.mxu0 0.0
  %63 = vmatpush1.msra.mxu0 %v43
  %64 = vmatprep.subr.mxu0 0.0
  %65 = vmatpush1.msra.mxu0 %v42
  %66 = vmatprep.subr.mxu0 0.0
  %67 = vmatpush1.msra.mxu0 %v41
  %68 = vmatprep.subr.mxu0 0.0
  %69 = vmatpush1.msra.mxu0 %v40
  %70 = vmatprep.subr.mxu0 0.0
  %71 = vmatpush1.msra.mxu0 %v39
  %72 = vmatprep.subr.mxu0 0.0
  %73 = vmatpush1.msra.mxu0 %v38
  %74 = vmatprep.subr.mxu0 0.0
  %75 = vmatpush1.msra.mxu0 %v37
  %76 = vmatprep.subr.mxu0 0.0
  %77 = vmatpush1.msra.mxu0 %v36
  %78 = vmatprep.subr.mxu0 0.0
  %79 = vmatpush1.msra.mxu0 %v35
  %80 = vmatprep.subr.mxu0 0.0
  %81 = vmatpush1.msra.mxu0 %v34
  %82 = vmatprep.subr.mxu0 0.0
  %83 = vmatpush2.msra.mxu0 0.0
  %84 = vmatprep.subr.mxu0 0.0
  %85 = vmatpush2.msra.mxu0 0.0
  %86 = vmatprep.subr.mxu0 0.0
  %87 = vmatpush2.msra.mxu0 0.0
  %88 = vmatprep.subr.mxu0 0.0
  %89 = vmatpush2.msra.mxu0 0.0
  %90 = vmatprep.subr.mxu0 0.0
  %91 = vmatpush2.msra.mxu0 0.0
  %92 = vmatprep.subr.mxu0 0.0
  %93 = vmatpush2.msra.mxu0 0.0
  %94 = vmatprep.subr.mxu0 0.0
  %95 = vmatpush2.msra.mxu0 0.0
  %96 = vmatprep.subr.mxu0 0.0
  %97 = vmatpush2.msra.mxu0 0.0
  %98 = vmatprep.subr.mxu0 0.0
  %99 = vmatpush2.msra.mxu0 0.0
  %100 = vmatprep.subr.mxu0 0.0
  %101 = vmatpush2.msra.mxu0 0.0
  %102 = vmatprep.subr.mxu0 0.0
  %103 = vmatpush2.msra.mxu0 0.0
  %104 = vmatprep.subr.mxu0 0.0
  %105 = vmatpush2.msra.mxu0 0.0
  %106 = vmatprep.subr.mxu0 0.0
  %107 = vmatpush2.msra.mxu0 0.0
  %108 = vmatprep.subr.mxu0 0.0
  %109 = vmatpush2.msra.mxu0 0.0
  %110 = vmatprep.subr.mxu0 0.0
  %111 = vmatpush2.msra.mxu0 0.0
  %112 = vmatprep.subr.mxu0 0.0
  %113 = vmatpush2.msra.mxu0 0.0
  %114 = vmatprep.mubr.f32.mxu0 0.0
  %115 = vmatmul.mubr.f32.gmra.mxu0 %v32
  %v116 = vpop.f32.mrf.mxu0
  %v117 = vadd.f32 0.0, %v116
  %v118 = vpop.f32.mrf.mxu0
  %119 = vmatprep.mubr.f32.mxu0 0.0
  %120 = vmatmul.mubr.f32.gmra.mxu0 %v33
  %v121 = vpop.f32.mrf.mxu0
  %v122 = vadd.f32 0.0, %v121
  %v123 = vpop.f32.mrf.mxu0
  %124 = vdwg.mxu0
  %v125 = vadd.f32 %v30, %v117
  %v126 = vadd.f32 %v31, %v122
  %vm127 = vcmask 261120
  %128 = vst.msk [vmem:[#allocation2] sm:$0xff] %vm127, %v125
  %129 = vst.msk [vmem:[#allocation2 + $0x8] sm:$0xff] %vm127, %v126
  // Predicated region
  $region30: #{decoder_forward.27} parent=0 // pred_check
    %p130 = pneg %p23
  $region31: #{decoder_forward.27} parent=0 // pred_check_branch
    %132 = sbr.rel (%p130) target = $region33
  $region32: #{decoder_forward.27} parent=0 // pred_region
    %v133 = vld [vmem:[#allocation2] sm:$0xff]
    %v134 = vld [vmem:[#allocation2 + $0x8] sm:$0xff]
    %v135 = vld [vmem:[%s2] sm:$0x1]
    %v137 = vlaneseq
    %v138 = vshrl.u32 %v137, 7
    %v139 = vsub.s32 0, %v138
    %v140 = vrot.slane %v135, %v139
    %v142 = vadd.f32 %v133, %v140
    %v143 = vadd.f32 %v134, %v140
    %v144 = vld [vmem:[%s3] sm:$0xff]
    %v145 = vld [vmem:[%s3 + $0x8] sm:$0xff]
    %v146 = vadd.f32 %v142, %v144
    %v147 = vadd.f32 %v143, %v145
    %v148 = vsel %vm127, %v146, 0.0
    %149 = vadd.xlane.f32.xlu0 %v148
    %v150 = vpop.xlane.xlu0 %149
    %v151 = vsel %vm127, %v147, 0.0
    %152 = vadd.xlane.f32.xlu0 %v151
    %v153 = vpop.xlane.xlu0 %152
    %v154 = vrcp.pop 32.0
    %v155 = vmul.f32 %v150, %v154
    %v156 = vmul.f32 %v153, %v154
    %v157 = vsub.f32 %v146, %v155
    %v158 = vsub.f32 %v147, %v156
    %v159 = vmul.f32 %v157, %v157
    %v160 = vmul.f32 %v158, %v158
    %v161 = vsel %vm127, %v159, 0.0
    %162 = vadd.xlane.f32.xlu0 %v161
    %v163 = vpop.xlane.xlu0 %162
    %v164 = vsel %vm127, %v160, 0.0
    %165 = vadd.xlane.f32.xlu0 %v164
    %v166 = vpop.xlane.xlu0 %165
    %v167 = vmul.f32 %v163, %v154
    %v168 = vmul.f32 %v166, %v154
    %v169 = vadd.f32 %v167, 1e-06
    %v170 = vadd.f32 %v168, 1e-06
    %v171 = vrsqrt.pop %v169
    %v172 = vrsqrt.pop %v170
    %v173 = vmul.f32 %v157, %v171
    %v174 = vmul.f32 %v158, %v172
    %v175 = vld [vmem:[%s4] sm:$0x1]
    %v177 = vlaneseq
    %v178 = vshrl.u32 %v177, 7
    %v179 = vsub.s32 0, %v178
    %v180 = vrot.slane %v175, %v179
    %v182 = vmul.f32 %v173, %v180
    %v183 = vmul.f32 %v174, %v180
    %v184 = vld [vmem:[%s5] sm:$0x1]
    %v186 = vlaneseq
    %v187 = vshrl.u32 %v186, 7
    %v188 = vsub.s32 0, %v187
    %v189 = vrot.slane %v184, %v188
    %v191 = vadd.f32 %v182, %v189
    %v192 = vadd.f32 %v183, %v189
    %193 = vst.msk [vmem:[%s6] sm:$0xff] %vm127, %v191
    %194 = vst.msk [vmem:[%s6 + $0x8] sm:$0xff] %vm127, %v192
  $region33: #{decoder_forward.27} parent=0 // pred_fallthru
    _
  // Predicated region
  $region34: #{decoder_forward.27} parent=0 // pred_check
    _
  $region35: #{decoder_forward.27} parent=0 // pred_check_branch
    %196 = sbr.rel (0) target = $region37
  $region36: #{decoder_forward.27} parent=0 // pred_region
    _
  $region37: #{decoder_forward.27} parent=0 // pred_fallthru
    _
  // Predicated region
  $region38: #{decoder_forward.27} parent=0 // pred_check
    _
  $region39: #{decoder_forward.27} parent=0 // pred_check_branch
    %198 = sbr.rel (0) target = $region41
  $region40: #{decoder_forward.27} parent=0 // pred_region
    _
  $region41: #{decoder_forward.27} parent=0 // pred_fallthru
    _

</llo_original>
